<compile_context>
chip_gen: v7x
topology: tpu7x:2x2x1
jax: 0.10.0
libtpu: 0.0.40
codegen_flags: <defaults>
</compile_context>

<pallas_src>
import functools

import jax
import jax.numpy as jnp
import numpy as np
from jax.experimental import pallas as pl
from jax.experimental.pallas import tpu as pltpu

N_PAD = 128      # padded node count (sublane axis)
F_PAD = 128      # padded feature (channel*filter) count (lane axis)
N_FILTERS = 4    # scattering order J
N_STEPS = 17     # 1 + 2**J diffusion states per round


def feng_filters():
    results = [4]
    for i in range(2, 4):
        for j in range(0, i):
            results.append(4 * i + j)
    return results


# ---------------------------------------------------------------------------
# Fused Pallas kernel (both cascades + layout plumbing [+ moments])
# ---------------------------------------------------------------------------
def _make_scatter_kernel(c, with_aggregation):
    """Kernel factory; `c` (in_channels) is a static Python constant."""
    # (j, p) -> slot m of the feng_filters() selection (flat index 4*j + p).
    sel_by_j = {}
    for m, idx in enumerate(feng_filters()):
        sel_by_j.setdefault(idx // 4, []).append((idx % 4, m))
    emit2 = tuple(sorted(sel_by_j))                  # round-2 filters used
    used_p = tuple(sorted({p for pm in sel_by_j.values() for p, _ in pm}))

    def kernel(n_ref, w_ref, p_ref, x_ref, out_ref):
        g = pl.program_id(0)
        p1 = p_ref[...]
        # Repeated squaring: shared by both rounds (3 matmuls total).
        p2 = jnp.dot(p1, p1, preferred_element_type=jnp.float32)
        p4 = jnp.dot(p2, p2, preferred_element_type=jnp.float32)
        p8 = jnp.dot(p4, p4, preferred_element_type=jnp.float32)

        lane = jax.lax.broadcasted_iota(jnp.int32, (N_PAD, F_PAD), 1)

        def cascade(x0, emit, consume):
            # Snapshots U_k = P^k x0 at k = 1,2,4,8,16 only; filter j's output
            # is w[j, 2^(j+1)] * U_{2^(j+1)} + w[j, 2^j] * U_{2^j}.
            snap = {}
            if 0 in emit:                       # U1 only needed by filter 0
                snap[1] = jnp.dot(p1, x0, preferred_element_type=jnp.float32)
                snap[2] = jnp.dot(p1, snap[1], preferred_element_type=jnp.float32)
            else:
                snap[2] = jnp.dot(p2, x0, preferred_element_type=jnp.float32)
            snap[4] = jnp.dot(p2, snap[2], preferred_element_type=jnp.float32)
            snap[8] = jnp.dot(p4, snap[4], preferred_element_type=jnp.float32)
            snap[16] = jnp.dot(p8, snap[8], preferred_element_type=jnp.float32)
            for j in emit:
                lo, hi = 1 << j, 1 << (j + 1)
                consume(j, w_ref[j, hi] * snap[hi] + w_ref[j, lo] * snap[lo])

        # ---- round 1: diffuse x, all 4 filters, |.|, pack filter-major ------
        # x1 lanes [p*c, (p+1)*c) hold S1 filter p.  Column order of the
        # round-2 input is free (diffusion treats columns independently);
        # only the (j, p, channel) bookkeeping matters for the selection.
        x1 = None

        def consume1(p_idx, out_p):
            nonlocal x1
            s = jnp.abs(out_p)                  # nonzero only in lanes [0, c)
            if p_idx:
                s = pltpu.roll(s, p_idx * c, axis=1)
            x1 = s if x1 is None else x1 + s

        cascade(x_ref[...], tuple(range(N_FILTERS)), consume1)

        # feats layout: block m occupies lanes [m*c, (m+1)*c):
        #   m = 0     -> S0 = x
        #   m = 1..4  -> S1 filters p = 0..3
        #   m = 5..10 -> feng_filters()-selected S2 blocks
        feat = x_ref[...] + pltpu.roll(x1, c, axis=1)

        # ---- round 2: diffuse S1; only the filters feng_filters() uses ------
        # Lane-range masks hoisted out of the consume closure (built once).
        p_mask = {p: (lane >= p * c) & (lane < (p + 1) * c) for p in used_p}

        def consume2(j_idx, out_j):
            nonlocal feat
            a = jnp.abs(out_j)                  # block p in lanes [p*c,(p+1)*c)
            for p_idx, m in sel_by_j[j_idx]:
                blk = jnp.where(p_mask[p_idx], a, 0.0)
                feat = feat + pltpu.roll(blk, (5 + m - p_idx) * c, axis=1)

        cascade(x1, emit2, consume2)

        if not with_aggregation:
            out_ref[...] = feat                 # skip_aggregation path
            return

        # ---- Aggregate('statistical_moments'): per-column stats over nodes --
        n = n_ref[g]
        inv_n = 1.0 / n.astype(jnp.float32)
        mean = jnp.sum(feat, axis=0, keepdims=True) * inv_n   # pad rows are 0
        row = jax.lax.broadcasted_iota(jnp.int32, (N_PAD, F_PAD), 0)
        dev = jnp.where(row < n, feat - mean, 0.0)
        d2 = dev * dev
        var = jnp.sum(d2, axis=0, keepdims=True) * inv_n
        m3 = jnp.sum(d2 * dev, axis=0, keepdims=True) * inv_n
        m4 = jnp.sum(d2 * d2, axis=0, keepdims=True) * inv_n
        ok = var > 0.0
        safe = jnp.where(ok, var, 1.0)
        skew = jnp.where(ok, m3 / (safe * jnp.sqrt(safe)), 0.0)
        kurt = jnp.where(ok, m4 / (safe * safe), -3.0)
        out_ref[...] = jnp.concatenate([mean, var, skew, kurt], axis=0)

    return kernel


@functools.lru_cache(maxsize=None)
def _build_scatter_call(c, num_graphs, with_aggregation):
    if with_aggregation:
        out_shape = jax.ShapeDtypeStruct((num_graphs, 4, F_PAD), jnp.float32)
        out_spec = pl.BlockSpec((None, 4, F_PAD), lambda g: (g, 0, 0))
    else:
        out_shape = jax.ShapeDtypeStruct((num_graphs, N_PAD, F_PAD), jnp.float32)
        out_spec = pl.BlockSpec((None, N_PAD, F_PAD), lambda g: (g, 0, 0))
    return pl.pallas_call(
        _make_scatter_kernel(c, with_aggregation),
        grid=(num_graphs,),
        out_shape=out_shape,
        in_specs=[
            pl.BlockSpec(memory_space=pltpu.MemorySpace.SMEM),        # n      [G]
            pl.BlockSpec(memory_space=pltpu.MemorySpace.SMEM),        # wavelet[4,17]
            pl.BlockSpec((None, N_PAD, N_PAD), lambda g: (g, 0, 0)),  # P  [G,128,128]
            pl.BlockSpec((None, N_PAD, F_PAD), lambda g: (g, 0, 0)),  # x  [G,128,128]
        ],
        out_specs=out_spec,
        compiler_params=pltpu.CompilerParams(
            dimension_semantics=("parallel",)),
    )


# ---------------------------------------------------------------------------
# Host glue (padding / stacking in plain JAX; everything hot in the kernel)
# ---------------------------------------------------------------------------
def build_diffusion_matrix(edge_index, num_nodes):
    """P = 1/2 (I + W D^-1) — lazy random walk from the module docstring."""
    src, dst = edge_index[0], edge_index[1]
    adj = jnp.zeros((num_nodes, num_nodes), jnp.float32).at[dst, src].set(1.0)
    deg = jnp.sum(adj, axis=0)
    dinv = jnp.where(deg > 0.0, 1.0 / deg, 0.0)
    return 0.5 * (jnp.eye(num_nodes, dtype=jnp.float32) + adj * dinv[None, :])


def make_wavelet_constructor():
    """Deterministic parameter init matching the torch module."""
    w = jnp.zeros((N_FILTERS, N_STEPS), jnp.float32)
    for j, (a, b) in enumerate([(1, 2), (2, 4), (4, 8), (8, 16)]):
        w = w.at[j, a].set(-1.0).at[j, b].set(1.0)
    return w


def _pad_graph(x, edge_index):
    n, c = x.shape
    if n > N_PAD or 11 * c > F_PAD:
        raise ValueError(
            f"graph too large for padded tile: n={n} (<= {N_PAD}), "
            f"11*C={11 * c} (<= {F_PAD})")
    p = build_diffusion_matrix(edge_index, n)
    p_pad = jnp.zeros((N_PAD, N_PAD), jnp.float32).at[:n, :n].set(p)
    x_pad = jnp.zeros((N_PAD, F_PAD), jnp.float32).at[:n, :c].set(
        x.astype(jnp.float32))
    return p_pad, x_pad, n


def scatter_forward_batched(xs, edge_indices, wavelet, skip_aggregation=False):
    """Forward over a list of graphs; one 'parallel' grid step per graph."""
    if not xs or len(xs) != len(edge_indices):
        raise ValueError("need one edge_index per graph (and at least one graph)")
    c = xs[0].shape[1]
    if any(x.shape[1] != c for x in xs):
        raise ValueError("all graphs in a batch must share in_channels")
    padded = [_pad_graph(x, e) for x, e in zip(xs, edge_indices)]
    p_b = jnp.stack([p for p, _, _ in padded])
    x_b = jnp.stack([xp for _, xp, _ in padded])
    ns = [n for _, _, n in padded]
    n_b = jnp.array(ns, jnp.int32)

    call = _build_scatter_call(c, len(xs), not skip_aggregation)
    out = call(n_b, wavelet, p_b, x_b)

    if skip_aggregation:
        return [out[g, :n, :11 * c].reshape(n, 11, c)
                for g, n in enumerate(ns)], wavelet
    return out[:, :, :11 * c].reshape(len(xs), 4 * 11 * c), wavelet


def scatter_forward(x, edge_index, wavelet, skip_aggregation=False):
    """Single-graph forward matching the torch module's interface."""
    out, w = scatter_forward_batched([x], [edge_index], wavelet, skip_aggregation)
    if skip_aggregation:
        return out[0], w          # (n, 11, c)
    return out, w                 # (1, 4*11*c)


# ---------------------------------------------------------------------------
# Pure-JAX reference (for verification only)
# ---------------------------------------------------------------------------
def ref_cascade(p, x, wavelet):
    us = [x]
    for _ in range(N_STEPS - 1):
        us.append(p @ us[-1])
    return jnp.einsum('jk,knf->jnf', wavelet, jnp.stack(us))


def ref_feats(x, edge_index, wavelet):
    n, c = x.shape
    p = build_diffusion_matrix(edge_index, n)
    out1 = ref_cascade(p, x, wavelet)
    s1 = jnp.abs(jnp.transpose(out1, (1, 2, 0)))                    # (n, c, 4)
    out2 = ref_cascade(p, s1.reshape(n, c * 4), wavelet).reshape(4, n, c, 4)
    out2 = jnp.transpose(out2, (1, 0, 3, 2)).reshape(n, 16, c)
    s2 = jnp.abs(out2[:, jnp.array(feng_filters()), :])
    return jnp.concatenate(
        [x[:, None, :], jnp.transpose(s1, (0, 2, 1)), s2], 1)       # (n, 11, c)


def ref_forward(x, edge_index, wavelet):
    n, c = x.shape
    flat = ref_feats(x, edge_index, wavelet).reshape(n, 11 * c)
    mean = flat.mean(0, keepdims=True)
    dev = flat - mean
    var = (dev ** 2).mean(0, keepdims=True)
    skew = jnp.where(var > 0, (dev ** 3).mean(0, keepdims=True) / var ** 1.5, 0.0)
    kurt = jnp.where(var > 0, (dev ** 4).mean(0, keepdims=True) / var ** 2, -3.0)
    return jnp.concatenate([mean, var, skew, kurt], 0).reshape(1, 4 * 11 * c)


if __name__ == "__main__":
    key = jax.random.PRNGKey(0)
    in_channels = 4
    k1, k2 = jax.random.split(key)

    # Graph A: ring of 8 nodes plus one chord (edges both ways), 8 nodes.
    xa = jax.random.normal(k1, (8, in_channels), jnp.float32)
    src_a = jnp.array([0, 1, 1, 2, 2, 3, 3, 4, 4, 5, 5, 6, 6, 7, 7, 0, 0, 4], jnp.int32)
    dst_a = jnp.array([1, 0, 2, 1, 3, 2, 4, 3, 5, 4, 6, 5, 7, 6, 0, 7, 4, 0], jnp.int32)
    ea = jnp.stack([src_a, dst_a])

    # Graph B: undirected path of 6 nodes.
    xb = jax.random.normal(k2, (6, in_channels), jnp.float32)
    src_b = jnp.array([0, 1, 1, 2, 2, 3, 3, 4, 4, 5], jnp.int32)
    dst_b = jnp.array([1, 0, 2, 1, 3, 2, 4, 3, 5, 4], jnp.int32)
    eb = jnp.stack([src_b, dst_b])

    wavelet = make_wavelet_constructor()

    # --- batched aggregated forward (default path), grid over 2 graphs ------
    moms, _ = scatter_forward_batched([xa, xb], [ea, eb], wavelet)
    moms = jax.block_until_ready(moms)
    assert moms.shape == (2, 4 * 11 * in_channels), moms.shape
    np.testing.assert_allclose(np.asarray(moms[0]),
                               np.asarray(ref_forward(xa, ea, wavelet)[0]),
                               rtol=1e-4, atol=1e-4)
    np.testing.assert_allclose(np.asarray(moms[1]),
                               np.asarray(ref_forward(xb, eb, wavelet)[0]),
                               rtol=1e-4, atol=1e-4)

    # --- single-graph skip_aggregation path (per-node features) -------------
    feats, _ = scatter_forward(xa, ea, wavelet, skip_aggregation=True)
    feats = jax.block_until_ready(feats)
    assert feats.shape == (8, 11, in_channels), feats.shape
    np.testing.assert_allclose(np.asarray(feats),
                               np.asarray(ref_feats(xa, ea, wavelet)),
                               rtol=1e-4, atol=1e-4)

    print("KERNEL_OK")
</pallas_src>

<mosaic_0001>
module attributes {stable_mosaic.version = 11 : i64} {
  func.func @kernel(%arg0: i32, %arg1: memref<2xi32, #tpu.memory_space<smem>>, %arg2: memref<4x17xf32, #tpu.memory_space<smem>>, %arg3: memref<1x128x128xf32, #tpu.memory_space<vmem>>, %arg4: memref<1x128x128xf32, #tpu.memory_space<vmem>>, %arg5: memref<1x4x128xf32, #tpu.memory_space<vmem>>) attributes {dimension_semantics = [#tpu.dimension_semantics<parallel>], iteration_bounds = array<i64: 2>, scalar_prefetch = 0 : i64, scratch_operands = 0 : i64, tpu.core_type = #tpu.core_type<tc>, window_params = [{transform_indices = @transform_0, window_bounds = array<i64: 2>}, {transform_indices = @transform_1, window_bounds = array<i64: 4, 17>}, {transform_indices = @transform_2, window_bounds = array<i64: 1, 128, 128>}, {transform_indices = @transform_3, window_bounds = array<i64: 1, 128, 128>}, {transform_indices = @transform_4, window_bounds = array<i64: 1, 4, 128>}]} {
    %c0 = arith.constant 0 : index
    %c0_0 = arith.constant 0 : index
    %c0_1 = arith.constant 0 : index
    %0 = vector.load %arg3[%c0, %c0_0, %c0_1] : memref<1x128x128xf32, #tpu.memory_space<vmem>>, vector<1x128x128xf32>
    %1 = vector.shape_cast %0 : vector<1x128x128xf32> to vector<128x128xf32>
    %cst = arith.constant dense<0.000000e+00> : vector<128x128xf32>
    %2 = tpu.matmul %1, %1, %cst {dimension_numbers = #tpu.dot_dimension_numbers<[1], [0], [0], [1], [0, 0, 1, 1], [], []>} : vector<128x128xf32>, vector<128x128xf32>, vector<128x128xf32> -> vector<128x128xf32>
    %cst_2 = arith.constant dense<0.000000e+00> : vector<128x128xf32>
    %3 = tpu.matmul %2, %2, %cst_2 {dimension_numbers = #tpu.dot_dimension_numbers<[1], [0], [0], [1], [0, 0, 1, 1], [], []>} : vector<128x128xf32>, vector<128x128xf32>, vector<128x128xf32> -> vector<128x128xf32>
    %cst_3 = arith.constant dense<0.000000e+00> : vector<128x128xf32>
    %4 = tpu.matmul %3, %3, %cst_3 {dimension_numbers = #tpu.dot_dimension_numbers<[1], [0], [0], [1], [0, 0, 1, 1], [], []>} : vector<128x128xf32>, vector<128x128xf32>, vector<128x128xf32> -> vector<128x128xf32>
    %5 = tpu.iota {dimensions = array<i32: 1>} : vector<128x128xi32>
    %c0_4 = arith.constant 0 : index
    %c0_5 = arith.constant 0 : index
    %c0_6 = arith.constant 0 : index
    %6 = vector.load %arg4[%c0_4, %c0_5, %c0_6] : memref<1x128x128xf32, #tpu.memory_space<vmem>>, vector<1x128x128xf32>
    %7 = vector.shape_cast %6 : vector<1x128x128xf32> to vector<128x128xf32>
    %cst_7 = arith.constant dense<0.000000e+00> : vector<128x128xf32>
    %8 = tpu.matmul %1, %7, %cst_7 {dimension_numbers = #tpu.dot_dimension_numbers<[1], [0], [0], [1], [0, 0, 1, 1], [], []>} : vector<128x128xf32>, vector<128x128xf32>, vector<128x128xf32> -> vector<128x128xf32>
    %cst_8 = arith.constant dense<0.000000e+00> : vector<128x128xf32>
    %9 = tpu.matmul %1, %8, %cst_8 {dimension_numbers = #tpu.dot_dimension_numbers<[1], [0], [0], [1], [0, 0, 1, 1], [], []>} : vector<128x128xf32>, vector<128x128xf32>, vector<128x128xf32> -> vector<128x128xf32>
    %cst_9 = arith.constant dense<0.000000e+00> : vector<128x128xf32>
    %10 = tpu.matmul %2, %9, %cst_9 {dimension_numbers = #tpu.dot_dimension_numbers<[1], [0], [0], [1], [0, 0, 1, 1], [], []>} : vector<128x128xf32>, vector<128x128xf32>, vector<128x128xf32> -> vector<128x128xf32>
    %cst_10 = arith.constant dense<0.000000e+00> : vector<128x128xf32>
    %11 = tpu.matmul %3, %10, %cst_10 {dimension_numbers = #tpu.dot_dimension_numbers<[1], [0], [0], [1], [0, 0, 1, 1], [], []>} : vector<128x128xf32>, vector<128x128xf32>, vector<128x128xf32> -> vector<128x128xf32>
    %cst_11 = arith.constant dense<0.000000e+00> : vector<128x128xf32>
    %12 = tpu.matmul %4, %11, %cst_11 {dimension_numbers = #tpu.dot_dimension_numbers<[1], [0], [0], [1], [0, 0, 1, 1], [], []>} : vector<128x128xf32>, vector<128x128xf32>, vector<128x128xf32> -> vector<128x128xf32>
    %c0_12 = arith.constant 0 : index
    %c2 = arith.constant 2 : index
    %13 = memref.load %arg2[%c0_12, %c2] : memref<4x17xf32, #tpu.memory_space<smem>>
    %14 = vector.broadcast %13 : f32 to vector<128x128xf32>
    %15 = arith.mulf %14, %9 : vector<128x128xf32>
    %c0_13 = arith.constant 0 : index
    %c1 = arith.constant 1 : index
    %16 = memref.load %arg2[%c0_13, %c1] : memref<4x17xf32, #tpu.memory_space<smem>>
    %17 = vector.broadcast %16 : f32 to vector<128x128xf32>
    %18 = arith.mulf %17, %8 : vector<128x128xf32>
    %19 = arith.addf %15, %18 : vector<128x128xf32>
    %20 = math.absf %19 : vector<128x128xf32>
    %c1_14 = arith.constant 1 : index
    %c4 = arith.constant 4 : index
    %21 = memref.load %arg2[%c1_14, %c4] : memref<4x17xf32, #tpu.memory_space<smem>>
    %22 = vector.broadcast %21 : f32 to vector<128x128xf32>
    %23 = arith.mulf %22, %10 : vector<128x128xf32>
    %c1_15 = arith.constant 1 : index
    %c2_16 = arith.constant 2 : index
    %24 = memref.load %arg2[%c1_15, %c2_16] : memref<4x17xf32, #tpu.memory_space<smem>>
    %25 = vector.broadcast %24 : f32 to vector<128x128xf32>
    %26 = arith.mulf %25, %9 : vector<128x128xf32>
    %27 = arith.addf %23, %26 : vector<128x128xf32>
    %28 = math.absf %27 : vector<128x128xf32>
    %c4_i32 = arith.constant 4 : i32
    %29 = tpu.dynamic_rotate %28 by %c4_i32 dim 1 : vector<128x128xf32>, i32 -> vector<128x128xf32>
    %30 = arith.addf %20, %29 : vector<128x128xf32>
    %c2_17 = arith.constant 2 : index
    %c8 = arith.constant 8 : index
    %31 = memref.load %arg2[%c2_17, %c8] : memref<4x17xf32, #tpu.memory_space<smem>>
    %32 = vector.broadcast %31 : f32 to vector<128x128xf32>
    %33 = arith.mulf %32, %11 : vector<128x128xf32>
    %c2_18 = arith.constant 2 : index
    %c4_19 = arith.constant 4 : index
    %34 = memref.load %arg2[%c2_18, %c4_19] : memref<4x17xf32, #tpu.memory_space<smem>>
    %35 = vector.broadcast %34 : f32 to vector<128x128xf32>
    %36 = arith.mulf %35, %10 : vector<128x128xf32>
    %37 = arith.addf %33, %36 : vector<128x128xf32>
    %38 = math.absf %37 : vector<128x128xf32>
    %c8_i32 = arith.constant 8 : i32
    %39 = tpu.dynamic_rotate %38 by %c8_i32 dim 1 : vector<128x128xf32>, i32 -> vector<128x128xf32>
    %40 = arith.addf %30, %39 : vector<128x128xf32>
    %c3 = arith.constant 3 : index
    %c16 = arith.constant 16 : index
    %41 = memref.load %arg2[%c3, %c16] : memref<4x17xf32, #tpu.memory_space<smem>>
    %42 = vector.broadcast %41 : f32 to vector<128x128xf32>
    %43 = arith.mulf %42, %12 : vector<128x128xf32>
    %c3_20 = arith.constant 3 : index
    %c8_21 = arith.constant 8 : index
    %44 = memref.load %arg2[%c3_20, %c8_21] : memref<4x17xf32, #tpu.memory_space<smem>>
    %45 = vector.broadcast %44 : f32 to vector<128x128xf32>
    %46 = arith.mulf %45, %11 : vector<128x128xf32>
    %47 = arith.addf %43, %46 : vector<128x128xf32>
    %48 = math.absf %47 : vector<128x128xf32>
    %c12_i32 = arith.constant 12 : i32
    %49 = tpu.dynamic_rotate %48 by %c12_i32 dim 1 : vector<128x128xf32>, i32 -> vector<128x128xf32>
    %50 = arith.addf %40, %49 : vector<128x128xf32>
    %c0_22 = arith.constant 0 : index
    %c0_23 = arith.constant 0 : index
    %c0_24 = arith.constant 0 : index
    %51 = vector.load %arg4[%c0_22, %c0_23, %c0_24] : memref<1x128x128xf32, #tpu.memory_space<vmem>>, vector<1x128x128xf32>
    %52 = vector.shape_cast %51 : vector<1x128x128xf32> to vector<128x128xf32>
    %c4_i32_25 = arith.constant 4 : i32
    %53 = tpu.dynamic_rotate %50 by %c4_i32_25 dim 1 : vector<128x128xf32>, i32 -> vector<128x128xf32>
    %54 = arith.addf %52, %53 : vector<128x128xf32>
    %c0_i32 = arith.constant 0 : i32
    %55 = vector.broadcast %c0_i32 : i32 to vector<128x128xi32>
    %56 = arith.cmpi sge, %5, %55 : vector<128x128xi32>
    %c4_i32_26 = arith.constant 4 : i32
    %57 = vector.broadcast %c4_i32_26 : i32 to vector<128x128xi32>
    %58 = arith.cmpi slt, %5, %57 : vector<128x128xi32>
    %59 = arith.andi %56, %58 : vector<128x128xi1>
    %c4_i32_27 = arith.constant 4 : i32
    %60 = vector.broadcast %c4_i32_27 : i32 to vector<128x128xi32>
    %61 = arith.cmpi sge, %5, %60 : vector<128x128xi32>
    %c8_i32_28 = arith.constant 8 : i32
    %62 = vector.broadcast %c8_i32_28 : i32 to vector<128x128xi32>
    %63 = arith.cmpi slt, %5, %62 : vector<128x128xi32>
    %64 = arith.andi %61, %63 : vector<128x128xi1>
    %c8_i32_29 = arith.constant 8 : i32
    %65 = vector.broadcast %c8_i32_29 : i32 to vector<128x128xi32>
    %66 = arith.cmpi sge, %5, %65 : vector<128x128xi32>
    %c12_i32_30 = arith.constant 12 : i32
    %67 = vector.broadcast %c12_i32_30 : i32 to vector<128x128xi32>
    %68 = arith.cmpi slt, %5, %67 : vector<128x128xi32>
    %69 = arith.andi %66, %68 : vector<128x128xi1>
    %cst_31 = arith.constant dense<0.000000e+00> : vector<128x128xf32>
    %70 = tpu.matmul %2, %50, %cst_31 {dimension_numbers = #tpu.dot_dimension_numbers<[1], [0], [0], [1], [0, 0, 1, 1], [], []>} : vector<128x128xf32>, vector<128x128xf32>, vector<128x128xf32> -> vector<128x128xf32>
    %cst_32 = arith.constant dense<0.000000e+00> : vector<128x128xf32>
    %71 = tpu.matmul %2, %70, %cst_32 {dimension_numbers = #tpu.dot_dimension_numbers<[1], [0], [0], [1], [0, 0, 1, 1], [], []>} : vector<128x128xf32>, vector<128x128xf32>, vector<128x128xf32> -> vector<128x128xf32>
    %cst_33 = arith.constant dense<0.000000e+00> : vector<128x128xf32>
    %72 = tpu.matmul %3, %71, %cst_33 {dimension_numbers = #tpu.dot_dimension_numbers<[1], [0], [0], [1], [0, 0, 1, 1], [], []>} : vector<128x128xf32>, vector<128x128xf32>, vector<128x128xf32> -> vector<128x128xf32>
    %cst_34 = arith.constant dense<0.000000e+00> : vector<128x128xf32>
    %73 = tpu.matmul %4, %72, %cst_34 {dimension_numbers = #tpu.dot_dimension_numbers<[1], [0], [0], [1], [0, 0, 1, 1], [], []>} : vector<128x128xf32>, vector<128x128xf32>, vector<128x128xf32> -> vector<128x128xf32>
    %c1_35 = arith.constant 1 : index
    %c4_36 = arith.constant 4 : index
    %74 = memref.load %arg2[%c1_35, %c4_36] : memref<4x17xf32, #tpu.memory_space<smem>>
    %75 = vector.broadcast %74 : f32 to vector<128x128xf32>
    %76 = arith.mulf %75, %71 : vector<128x128xf32>
    %c1_37 = arith.constant 1 : index
    %c2_38 = arith.constant 2 : index
    %77 = memref.load %arg2[%c1_37, %c2_38] : memref<4x17xf32, #tpu.memory_space<smem>>
    %78 = vector.broadcast %77 : f32 to vector<128x128xf32>
    %79 = arith.mulf %78, %70 : vector<128x128xf32>
    %80 = arith.addf %76, %79 : vector<128x128xf32>
    %81 = math.absf %80 : vector<128x128xf32>
    %cst_39 = arith.constant 0.000000e+00 : f32
    %82 = vector.broadcast %cst_39 : f32 to vector<128x128xf32>
    %83 = arith.select %59, %81, %82 : vector<128x128xi1>, vector<128x128xf32>
    %c20_i32 = arith.constant 20 : i32
    %84 = tpu.dynamic_rotate %83 by %c20_i32 dim 1 : vector<128x128xf32>, i32 -> vector<128x128xf32>
    %85 = arith.addf %54, %84 : vector<128x128xf32>
    %c2_40 = arith.constant 2 : index
    %c8_41 = arith.constant 8 : index
    %86 = memref.load %arg2[%c2_40, %c8_41] : memref<4x17xf32, #tpu.memory_space<smem>>
    %87 = vector.broadcast %86 : f32 to vector<128x128xf32>
    %88 = arith.mulf %87, %72 : vector<128x128xf32>
    %c2_42 = arith.constant 2 : index
    %c4_43 = arith.constant 4 : index
    %89 = memref.load %arg2[%c2_42, %c4_43] : memref<4x17xf32, #tpu.memory_space<smem>>
    %90 = vector.broadcast %89 : f32 to vector<128x128xf32>
    %91 = arith.mulf %90, %71 : vector<128x128xf32>
    %92 = arith.addf %88, %91 : vector<128x128xf32>
    %93 = math.absf %92 : vector<128x128xf32>
    %cst_44 = arith.constant 0.000000e+00 : f32
    %94 = vector.broadcast %cst_44 : f32 to vector<128x128xf32>
    %95 = arith.select %59, %93, %94 : vector<128x128xi1>, vector<128x128xf32>
    %c24_i32 = arith.constant 24 : i32
    %96 = tpu.dynamic_rotate %95 by %c24_i32 dim 1 : vector<128x128xf32>, i32 -> vector<128x128xf32>
    %97 = arith.addf %85, %96 : vector<128x128xf32>
    %cst_45 = arith.constant 0.000000e+00 : f32
    %98 = vector.broadcast %cst_45 : f32 to vector<128x128xf32>
    %99 = arith.select %64, %93, %98 : vector<128x128xi1>, vector<128x128xf32>
    %c24_i32_46 = arith.constant 24 : i32
    %100 = tpu.dynamic_rotate %99 by %c24_i32_46 dim 1 : vector<128x128xf32>, i32 -> vector<128x128xf32>
    %101 = arith.addf %97, %100 : vector<128x128xf32>
    %c3_47 = arith.constant 3 : index
    %c16_48 = arith.constant 16 : index
    %102 = memref.load %arg2[%c3_47, %c16_48] : memref<4x17xf32, #tpu.memory_space<smem>>
    %103 = vector.broadcast %102 : f32 to vector<128x128xf32>
    %104 = arith.mulf %103, %73 : vector<128x128xf32>
    %c3_49 = arith.constant 3 : index
    %c8_50 = arith.constant 8 : index
    %105 = memref.load %arg2[%c3_49, %c8_50] : memref<4x17xf32, #tpu.memory_space<smem>>
    %106 = vector.broadcast %105 : f32 to vector<128x128xf32>
    %107 = arith.mulf %106, %72 : vector<128x128xf32>
    %108 = arith.addf %104, %107 : vector<128x128xf32>
    %109 = math.absf %108 : vector<128x128xf32>
    %cst_51 = arith.constant 0.000000e+00 : f32
    %110 = vector.broadcast %cst_51 : f32 to vector<128x128xf32>
    %111 = arith.select %59, %109, %110 : vector<128x128xi1>, vector<128x128xf32>
    %c32_i32 = arith.constant 32 : i32
    %112 = tpu.dynamic_rotate %111 by %c32_i32 dim 1 : vector<128x128xf32>, i32 -> vector<128x128xf32>
    %113 = arith.addf %101, %112 : vector<128x128xf32>
    %cst_52 = arith.constant 0.000000e+00 : f32
    %114 = vector.broadcast %cst_52 : f32 to vector<128x128xf32>
    %115 = arith.select %64, %109, %114 : vector<128x128xi1>, vector<128x128xf32>
    %c32_i32_53 = arith.constant 32 : i32
    %116 = tpu.dynamic_rotate %115 by %c32_i32_53 dim 1 : vector<128x128xf32>, i32 -> vector<128x128xf32>
    %117 = arith.addf %113, %116 : vector<128x128xf32>
    %cst_54 = arith.constant 0.000000e+00 : f32
    %118 = vector.broadcast %cst_54 : f32 to vector<128x128xf32>
    %119 = arith.select %69, %109, %118 : vector<128x128xi1>, vector<128x128xf32>
    %c32_i32_55 = arith.constant 32 : i32
    %120 = tpu.dynamic_rotate %119 by %c32_i32_55 dim 1 : vector<128x128xf32>, i32 -> vector<128x128xf32>
    %121 = arith.addf %117, %120 : vector<128x128xf32>
    %122 = arith.index_cast %arg0 : i32 to index
    %123 = memref.load %arg1[%122] : memref<2xi32, #tpu.memory_space<smem>>
    %124 = arith.sitofp %123 : i32 to f32
    %cst_56 = arith.constant 1.000000e+00 : f32
    %125 = arith.divf %cst_56, %124 : f32
    %cst_57 = arith.constant dense<0.000000e+00> : vector<128xf32>
    %126 = vector.multi_reduction <add>, %121, %cst_57 [0] : vector<128x128xf32> to vector<128xf32>
    %127 = vector.shape_cast %126 : vector<128xf32> to vector<1x128xf32>
    %128 = vector.broadcast %125 : f32 to vector<1x128xf32>
    %129 = arith.mulf %127, %128 : vector<1x128xf32>
    %130 = tpu.iota {dimensions = array<i32: 0>} : vector<128x128xi32>
    %131 = vector.broadcast %123 : i32 to vector<128x128xi32>
    %132 = arith.cmpi slt, %130, %131 : vector<128x128xi32>
    %133 = vector.broadcast %129 : vector<1x128xf32> to vector<128x128xf32>
    %134 = arith.subf %121, %133 : vector<128x128xf32>
    %cst_58 = arith.constant 0.000000e+00 : f32
    %135 = vector.broadcast %cst_58 : f32 to vector<128x128xf32>
    %136 = arith.select %132, %134, %135 : vector<128x128xi1>, vector<128x128xf32>
    %137 = arith.mulf %136, %136 : vector<128x128xf32>
    %cst_59 = arith.constant dense<0.000000e+00> : vector<128xf32>
    %138 = vector.multi_reduction <add>, %137, %cst_59 [0] : vector<128x128xf32> to vector<128xf32>
    %139 = vector.shape_cast %138 : vector<128xf32> to vector<1x128xf32>
    %140 = vector.broadcast %125 : f32 to vector<1x128xf32>
    %141 = arith.mulf %139, %140 : vector<1x128xf32>
    %142 = arith.mulf %137, %136 : vector<128x128xf32>
    %cst_60 = arith.constant dense<0.000000e+00> : vector<128xf32>
    %143 = vector.multi_reduction <add>, %142, %cst_60 [0] : vector<128x128xf32> to vector<128xf32>
    %144 = vector.shape_cast %143 : vector<128xf32> to vector<1x128xf32>
    %145 = vector.broadcast %125 : f32 to vector<1x128xf32>
    %146 = arith.mulf %144, %145 : vector<1x128xf32>
    %147 = arith.mulf %137, %137 : vector<128x128xf32>
    %cst_61 = arith.constant dense<0.000000e+00> : vector<128xf32>
    %148 = vector.multi_reduction <add>, %147, %cst_61 [0] : vector<128x128xf32> to vector<128xf32>
    %149 = vector.shape_cast %148 : vector<128xf32> to vector<1x128xf32>
    %150 = vector.broadcast %125 : f32 to vector<1x128xf32>
    %151 = arith.mulf %149, %150 : vector<1x128xf32>
    %cst_62 = arith.constant 0.000000e+00 : f32
    %152 = vector.broadcast %cst_62 : f32 to vector<1x128xf32>
    %153 = arith.cmpf ogt, %141, %152 : vector<1x128xf32>
    %cst_63 = arith.constant 1.000000e+00 : f32
    %154 = vector.broadcast %cst_63 : f32 to vector<1x128xf32>
    %155 = arith.select %153, %141, %154 : vector<1x128xi1>, vector<1x128xf32>
    %156 = math.sqrt %155 : vector<1x128xf32>
    %157 = arith.mulf %155, %156 : vector<1x128xf32>
    %158 = arith.divf %146, %157 : vector<1x128xf32>
    %cst_64 = arith.constant 0.000000e+00 : f32
    %159 = vector.broadcast %cst_64 : f32 to vector<1x128xf32>
    %160 = arith.select %153, %158, %159 : vector<1x128xi1>, vector<1x128xf32>
    %161 = arith.mulf %155, %155 : vector<1x128xf32>
    %162 = arith.divf %151, %161 : vector<1x128xf32>
    %cst_65 = arith.constant -3.000000e+00 : f32
    %163 = vector.broadcast %cst_65 : f32 to vector<1x128xf32>
    %164 = arith.select %153, %162, %163 : vector<1x128xi1>, vector<1x128xf32>
    %165 = tpu.concatenate %129, %141, %160, %164 in 0 : vector<1x128xf32>, vector<1x128xf32>, vector<1x128xf32>, vector<1x128xf32> -> vector<4x128xf32>
    %c0_66 = arith.constant 0 : index
    %c0_67 = arith.constant 0 : index
    %c0_68 = arith.constant 0 : index
    %166 = vector.load %arg5[%c0_66, %c0_67, %c0_68] : memref<1x4x128xf32, #tpu.memory_space<vmem>>, vector<1x4x128xf32>
    %167 = vector.shape_cast %166 : vector<1x4x128xf32> to vector<4x128xf32>
    %168 = vector.shape_cast %165 : vector<4x128xf32> to vector<1x4x128xf32>
    tpu.vector_store %arg5[%c0_66, %c0_67, %c0_68], %168 {strides = array<i32>} : memref<1x4x128xf32, #tpu.memory_space<vmem>>, vector<1x4x128xf32>,
    return
  }
  func.func @transform_0(%arg0: i32) -> i32 {
    %c0_i32 = arith.constant 0 : i32
    %c0_i32_0 = arith.constant 0 : i32
    return %c0_i32 : i32
  }
  func.func @transform_1(%arg0: i32) -> (i32, i32) {
    %c0_i32 = arith.constant 0 : i32
    %c0_i32_0 = arith.constant 0 : i32
    %c0_i32_1 = arith.constant 0 : i32
    return %c0_i32, %c0_i32_0 : i32, i32
  }
  func.func @transform_2(%arg0: i32) -> (i32, i32, i32) {
    %c0_i32 = arith.constant 0 : i32
    %c0_i32_0 = arith.constant 0 : i32
    %c0_i32_1 = arith.constant 0 : i32
    return %arg0, %c0_i32, %c0_i32_0 : i32, i32, i32
  }
  func.func @transform_3(%arg0: i32) -> (i32, i32, i32) {
    %c0_i32 = arith.constant 0 : i32
    %c0_i32_0 = arith.constant 0 : i32
    %c0_i32_1 = arith.constant 0 : i32
    return %arg0, %c0_i32, %c0_i32_0 : i32, i32, i32
  }
  func.func @transform_4(%arg0: i32) -> (i32, i32, i32) {
    %c0_i32 = arith.constant 0 : i32
    %c0_i32_0 = arith.constant 0 : i32
    %c0_i32_1 = arith.constant 0 : i32
    return %arg0, %c0_i32, %c0_i32_0 : i32, i32, i32
  }
}

</mosaic_0001>

<llo_original>
// kernel: tpu_custom_call.1
$region0: #{tpu_custom_call.1}
  #allocation0 [shape = 'u32[]', space=smem, size = 0x4, offset = 0x4, fixed_abs, tag = 'smem constant byte address 0x4 - core index']
  #allocation1 [shape = 'u32[144,128]{1,0:T(1,128)}', space=vmem, size = 0x12000, scoped, tag = 'internal scratch']
  %s0 = inlined_call_operand.hbm [shape: s32[2], index: 0, kind: input, shape index: {}]
  %s1 = inlined_call_operand.hbm [shape: f32[4,17], index: 1, kind: input, shape index: {}]
  %s2 = inlined_call_operand.hbm [shape: f32[2,128,128], index: 2, kind: input, shape index: {}]
  %s3 = inlined_call_operand.hbm [shape: f32[2,128,128], index: 3, kind: input, shape index: {}]
  %s4 = inlined_call_operand.hbm [shape: f32[2,4,128], index: 4, kind: output, shape index: {}]
  %s5 = sld [smem:[#allocation0]]
  $region65: #{tpu_custom_call.1} parent=0
    _
  %s7 = ssub.s32 1, %s5
  %s8 = scalar_select 0, %s7, %s5
  $region1: #{tpu_custom_call.1} parent=0
    #allocation2 [shape = 'u8[512]{0}', space=smem, size = 0x200, scoped, tag = 'input window, operand 0, single buffered']
    #allocation3 [shape = 's32[2]{0}', space=sflag, size = 0x8, scoped, tag = 'scoped memory for tpu_custom_call.1']
    #allocation4 [shape = 's32[2]{0}', space=sflag, size = 0x8, scoped, tag = 'scoped memory for tpu_custom_call.1']
    #allocation5 [shape = 's32[2]{0}', space=sflag, size = 0x8, scoped, tag = 'scoped memory for tpu_custom_call.1']
    #allocation6 [shape = 'u8[2048]{0}', space=smem, size = 0x800, scoped, tag = 'input window, operand 1, single buffered']
    #allocation7 [shape = 's32[1]{0}', space=sflag, size = 0x4, scoped, tag = 'scoped memory for tpu_custom_call.1']
    #allocation8 [shape = 'u8[131072]{0}', space=vmem, size = 0x20000, scoped, tag = 'input window, operand 2']
    #allocation9 [shape = 'u8[131072]{0}', space=vmem, size = 0x20000, scoped, tag = 'input window, operand 3']
    #allocation10 [shape = 's32[2]{0}', space=sflag, size = 0x8, scoped, tag = 'scoped memory for tpu_custom_call.1']
    #allocation11 [shape = 'u8[4096]{0}', space=vmem, size = 0x1000, scoped, tag = 'output window, operand 0']
    %9 = vsyncpa [#allocation5], 0
    %10 = vsyncpa [#allocation7], 0
    %11 = vsyncpa [#allocation3], 0
    %s12 = scalar_lea.sflag [#allocation3], 1
    %13 = vsyncpa %s12, 0
    %14 = vsyncpa [#allocation10], 0
    %s15 = scalar_lea.sflag [#allocation10], 1
    %16 = vsyncpa %s15, 0
    %17 = vsyncpa [#allocation4], 0
    %s18 = scalar_lea.sflag [#allocation4], 1
    %19 = vsyncpa %s18, 0
    loop: start=0, step=1, limit=4
    $region2: #{tpu_custom_call.1} parent=1 // loop_pre_header
      _
    $region3: #{tpu_custom_call.1} parent=1 // loop_header
      %s21 = sphi 0, %s25
      %p22 = scmp.ge.s32.totalorder %s21, 4
      %s29 = sphi 0, %s29
      %s31 = sphi 0, %s29
      %s32 = sphi 0, %s31
      %s46 = sphi 0, %s32
      %s50 = sphi 0, %s50
      %s52 = sphi 0, %s50
      %s53 = sphi 0, %s52
      %s67 = sphi 0, %s53
      %s73 = sphi 0, %s75
      %s76 = sphi 0, %s73
      %s77 = sphi 0, %s76
      %s93 = sphi 0, %s77
      %s99 = sphi 0, %s101
      %s102 = sphi 0, %s99
      %s103 = sphi 0, %s102
      %s119 = sphi 0, %s103
      %s125 = sphi 0, %s127
      %s128 = sphi 0, %s125
      %s129 = sphi 0, %s128
      %s145 = sphi 0, %s129
    $region4: #{tpu_custom_call.1} parent=1 // loop_header_branch
      %24 = sbr.rel (%p22) target = $region8
    $region5: #{tpu_custom_call.1} parent=1 // loop_body
      %s26 = ssub.s32 %s21, 1
      %s27 = ssub.s32 %s21, 2
      %s28 = sadd.s32 %s21, 1
      %s30 = sadd.s32 %s29, 1
      %p33 = scmp.eq.s32.totalorder %s21, 1
      %p34 = scmp.ne.s32.totalorder %s29, %s31
      %p35 = scmp.eq.s32.totalorder %s21, 0
      %p36 = por %p34, %p35
      %p37 = scmp.ne.s32.totalorder %s29, %s31
      %p38 = scmp.eq.s32.totalorder %s26, 1
      %p39 = por %p37, %p38
      %p40 = scmp.ne.s32.totalorder %s31, %s32
      %p41 = scmp.eq.s32.totalorder %s26, 0
      %p42 = por %p40, %p41
      %p43 = scmp.ne.s32.totalorder %s31, %s32
      %p44 = scmp.eq.s32.totalorder %s27, 1
      %p45 = por %p43, %p44
      %p47 = scmp.ne.s32.totalorder %s32, %s46
      %p48 = scmp.eq.s32.totalorder %s27, 0
      %p49 = por %p47, %p48
      %s51 = sadd.s32 %s50, 1
      %p54 = scmp.eq.s32.totalorder %s21, 1
      %p55 = scmp.ne.s32.totalorder %s50, %s52
      %p56 = scmp.eq.s32.totalorder %s21, 0
      %p57 = por %p55, %p56
      %p58 = scmp.ne.s32.totalorder %s50, %s52
      %p59 = scmp.eq.s32.totalorder %s26, 1
      %p60 = por %p58, %p59
      %p61 = scmp.ne.s32.totalorder %s52, %s53
      %p62 = scmp.eq.s32.totalorder %s26, 0
      %p63 = por %p61, %p62
      %p64 = scmp.ne.s32.totalorder %s52, %s53
      %p65 = scmp.eq.s32.totalorder %s27, 1
      %p66 = por %p64, %p65
      %p68 = scmp.ne.s32.totalorder %s53, %s67
      %p69 = scmp.eq.s32.totalorder %s27, 0
      %p70 = por %p68, %p69
      %s71 = ssub.s32 %s21, %s28
      %p72 = scmp.eq.s32.totalorder %s71, 0
      %s74 = sadd.s32 %s73, 1
      %s75 = scalar_select %p72, %s73, %s74
      %p78 = pneg %p72
      %p79 = scmp.eq.s32.totalorder %s21, 1
      %p80 = por %p78, %p79
      %p81 = scmp.ne.s32.totalorder %s73, %s76
      %p82 = scmp.eq.s32.totalorder %s21, 0
      %p83 = por %p81, %p82
      %p84 = scmp.ne.s32.totalorder %s73, %s76
      %p85 = scmp.eq.s32.totalorder %s26, 1
      %p86 = por %p84, %p85
      %p87 = scmp.ne.s32.totalorder %s76, %s77
      %p88 = scmp.eq.s32.totalorder %s26, 0
      %p89 = por %p87, %p88
      %p90 = scmp.ne.s32.totalorder %s76, %s77
      %p91 = scmp.eq.s32.totalorder %s27, 1
      %p92 = por %p90, %p91
      %p94 = scmp.ne.s32.totalorder %s77, %s93
      %p95 = scmp.eq.s32.totalorder %s27, 0
      %p96 = por %p94, %p95
      %s97 = ssub.s32 %s21, %s28
      %p98 = scmp.eq.s32.totalorder %s97, 0
      %s100 = sadd.s32 %s99, 1
      %s101 = scalar_select %p98, %s99, %s100
      %p104 = pneg %p98
      %p105 = scmp.eq.s32.totalorder %s21, 1
      %p106 = por %p104, %p105
      %p107 = scmp.ne.s32.totalorder %s99, %s102
      %p108 = scmp.eq.s32.totalorder %s21, 0
      %p109 = por %p107, %p108
      %p110 = scmp.ne.s32.totalorder %s99, %s102
      %p111 = scmp.eq.s32.totalorder %s26, 1
      %p112 = por %p110, %p111
      %p113 = scmp.ne.s32.totalorder %s102, %s103
      %p114 = scmp.eq.s32.totalorder %s26, 0
      %p115 = por %p113, %p114
      %p116 = scmp.ne.s32.totalorder %s102, %s103
      %p117 = scmp.eq.s32.totalorder %s27, 1
      %p118 = por %p116, %p117
      %p120 = scmp.ne.s32.totalorder %s103, %s119
      %p121 = scmp.eq.s32.totalorder %s27, 0
      %p122 = por %p120, %p121
      %s123 = ssub.s32 %s21, %s28
      %p124 = scmp.eq.s32.totalorder %s123, 0
      %s126 = sadd.s32 %s125, 1
      %s127 = scalar_select %p124, %s125, %s126
      %p130 = pneg %p124
      %p131 = scmp.eq.s32.totalorder %s21, 1
      %p132 = por %p130, %p131
      %p133 = scmp.ne.s32.totalorder %s125, %s128
      %p134 = scmp.eq.s32.totalorder %s21, 0
      %p135 = por %p133, %p134
      %p136 = scmp.ne.s32.totalorder %s125, %s128
      %p137 = scmp.eq.s32.totalorder %s26, 1
      %p138 = por %p136, %p137
      %p139 = scmp.ne.s32.totalorder %s128, %s129
      %p140 = scmp.eq.s32.totalorder %s26, 0
      %p141 = por %p139, %p140
      %p142 = scmp.ne.s32.totalorder %s128, %s129
      %p143 = scmp.eq.s32.totalorder %s27, 1
      %p144 = por %p142, %p143
      %p146 = scmp.ne.s32.totalorder %s129, %s145
      %p147 = scmp.eq.s32.totalorder %s27, 0
      %p148 = por %p146, %p147
      %p149 = scmp.le.s32.totalorder 1, %s21
      %p150 = scmp.lt.s32.totalorder %s21, 3
      %p151 = pnand %p149, %p150
      %p152 = pneg %p151
      // Predicated region
      $region9: #{tpu_custom_call.1} parent=5 // pred_check
        _
      $region10: #{tpu_custom_call.1} parent=5 // pred_check_branch
        %154 = sbr.rel (%p151) target = $region12
      $region11: #{tpu_custom_call.1} parent=5 // pred_region
        %s155 = ssub.s32 %s21, 1
        // Predicated region
        $region13: #{tpu_custom_call.1} parent=11 // pred_check
          %p156 = pneg %p42
        $region14: #{tpu_custom_call.1} parent=11 // pred_check_branch
          %158 = sbr.rel (%p156) target = $region16
        $region15: #{tpu_custom_call.1} parent=11 // pred_region
          %s160 = ssub.s32 16, 16
          %161 = vsyncadd [#allocation5], %s160
          %164 = dma.hbm_to_smem %s0, 16, [#allocation2], [#allocation5]
        $region16: #{tpu_custom_call.1} parent=11 // pred_fallthru
          _
        // Predicated region
        $region17: #{tpu_custom_call.1} parent=11 // pred_check
          %p165 = pneg %p63
        $region18: #{tpu_custom_call.1} parent=11 // pred_check_branch
          %167 = sbr.rel (%p165) target = $region20
        $region19: #{tpu_custom_call.1} parent=11 // pred_region
          %s169 = ssub.s32 64, 64
          %170 = vsyncadd [#allocation7], %s169
          %173 = dma.hbm_to_smem %s1, 64, [#allocation6], [#allocation7]
        $region20: #{tpu_custom_call.1} parent=11 // pred_fallthru
          _
      $region12: #{tpu_custom_call.1} parent=5 // pred_fallthru
        _
      %p174 = scmp.lt.s32.totalorder %s21, 2
      // Predicated region
      $region21: #{tpu_custom_call.1} parent=5 // pred_check
        %p175 = pneg %p174
      $region22: #{tpu_custom_call.1} parent=5 // pred_check_branch
        %177 = sbr.rel (%p175) target = $region24
      $region23: #{tpu_custom_call.1} parent=5 // pred_region
        // Predicated region
        $region25: #{tpu_custom_call.1} parent=23 // pred_check
          %p178 = pneg %p83
        $region26: #{tpu_custom_call.1} parent=23 // pred_check_branch
          %180 = sbr.rel (%p178) target = $region28
        $region27: #{tpu_custom_call.1} parent=23 // pred_region
          %s181 = sand.u32 %s73, 1
          %s182 = scalar_lea.sflag [#allocation3], %s181
          %s183 = sand.u32 %s73, 1
          %s184 = smul.addr %s183, 128
          %s185 = scalar_lea.vmem [#allocation8], %s184
          %s187 = ssub.s32 2048, 2048
          %188 = vsyncadd %s182, %s187
          %s189 = smul.addr %s21, 16
          %s190 = smul.addr %s189, 128
          %s191 = scalar_lea.hbm %s2, %s190
          %s192 = sshll.u32 %s185, 4
          %s193 = int_to_ptr.vmem [resolvable:$true] %s192
          %198 = dma.hbm_to_vmem [thread:$0]  %s191, 2048, %s193, %s182, 128, 128, 8
        $region28: #{tpu_custom_call.1} parent=23 // pred_fallthru
          _
        // Predicated region
        $region29: #{tpu_custom_call.1} parent=23 // pred_check
          %p199 = pneg %p109
        $region30: #{tpu_custom_call.1} parent=23 // pred_check_branch
          %201 = sbr.rel (%p199) target = $region32
        $region31: #{tpu_custom_call.1} parent=23 // pred_region
          %s202 = sand.u32 %s99, 1
          %s203 = scalar_lea.sflag [#allocation10], %s202
          %s204 = sand.u32 %s99, 1
          %s205 = smul.addr %s204, 128
          %s206 = scalar_lea.vmem [#allocation9], %s205
          %s208 = ssub.s32 2048, 2048
          %209 = vsyncadd %s203, %s208
          %s210 = smul.addr %s21, 16
          %s211 = smul.addr %s210, 128
          %s212 = scalar_lea.hbm %s3, %s211
          %s213 = sshll.u32 %s206, 4
          %s214 = int_to_ptr.vmem [resolvable:$true] %s213
          %219 = dma.hbm_to_vmem [thread:$0]  %s212, 2048, %s214, %s203, 128, 128, 8
        $region32: #{tpu_custom_call.1} parent=23 // pred_fallthru
          _
      $region24: #{tpu_custom_call.1} parent=5 // pred_fallthru
        _
      %p220 = scmp.le.s32.totalorder 1, %s21
      %p221 = scmp.lt.s32.totalorder %s21, 3
      %p222 = pnand %p220, %p221
      %p223 = pneg %p222
      // Predicated region
      $region33: #{tpu_custom_call.1} parent=5 // pred_check
        _
      $region34: #{tpu_custom_call.1} parent=5 // pred_check_branch
        %225 = sbr.rel (%p222) target = $region36
      $region35: #{tpu_custom_call.1} parent=5 // pred_region
        %s226 = ssub.s32 %s21, 1
        // Predicated region
        $region37: #{tpu_custom_call.1} parent=35 // pred_check
          %p227 = pneg %p42
        $region38: #{tpu_custom_call.1} parent=35 // pred_check_branch
          %229 = sbr.rel (%p227) target = $region40
        $region39: #{tpu_custom_call.1} parent=35 // pred_region
          %230 = dma.done [#allocation5], 16
        $region40: #{tpu_custom_call.1} parent=35 // pred_fallthru
          _
        // Predicated region
        $region41: #{tpu_custom_call.1} parent=35 // pred_check
          %p231 = pneg %p63
        $region42: #{tpu_custom_call.1} parent=35 // pred_check_branch
          %233 = sbr.rel (%p231) target = $region44
        $region43: #{tpu_custom_call.1} parent=35 // pred_region
          %234 = dma.done [#allocation7], 64
        $region44: #{tpu_custom_call.1} parent=35 // pred_fallthru
          _
        %s235 = sand.u32 %s76, 1
        %s236 = scalar_lea.sflag [#allocation3], %s235
        %s237 = sand.u32 %s76, 1
        %s238 = smul.addr %s237, 128
        %s239 = scalar_lea.vmem [#allocation8], %s238
        // Predicated region
        $region45: #{tpu_custom_call.1} parent=35 // pred_check
          %p240 = pneg %p89
        $region46: #{tpu_custom_call.1} parent=35 // pred_check_branch
          %242 = sbr.rel (%p240) target = $region48
        $region47: #{tpu_custom_call.1} parent=35 // pred_region
          %243 = dma.done %s236, 2048
        $region48: #{tpu_custom_call.1} parent=35 // pred_fallthru
          _
        %s244 = sand.u32 %s102, 1
        %s245 = scalar_lea.sflag [#allocation10], %s244
        %s246 = sand.u32 %s102, 1
        %s247 = smul.addr %s246, 128
        %s248 = scalar_lea.vmem [#allocation9], %s247
        // Predicated region
        $region49: #{tpu_custom_call.1} parent=35 // pred_check
          %p249 = pneg %p115
        $region50: #{tpu_custom_call.1} parent=35 // pred_check_branch
          %251 = sbr.rel (%p249) target = $region52
        $region51: #{tpu_custom_call.1} parent=35 // pred_region
          %252 = dma.done %s245, 2048
        $region52: #{tpu_custom_call.1} parent=35 // pred_fallthru
          _
        %253 = sfence
        %p254 = pneg %p42
        %p255 = pneg %p39
        %p256 = pneg %p63
        %p257 = pneg %p60
        %s258 = sand.u32 %s76, 1
        %s259 = scalar_lea.sflag [#allocation3], %s258
        %s260 = sand.u32 %s76, 1
        %s261 = smul.addr %s260, 128
        %s262 = scalar_lea.vmem [#allocation8], %s261
        %p263 = pneg %p89
        %p264 = pneg %p86
        %s265 = sand.u32 %s102, 1
        %s266 = scalar_lea.sflag [#allocation10], %s265
        %s267 = sand.u32 %s102, 1
        %s268 = smul.addr %s267, 128
        %s269 = scalar_lea.vmem [#allocation9], %s268
        %p270 = pneg %p115
        %p271 = pneg %p112
        %p272 = pneg %p141
        %p273 = pneg %p138
        %s274 = sand.u32 %s128, 1
        %s275 = scalar_lea.sflag [#allocation4], %s274
        %s276 = sand.u32 %s128, 1
        %s277 = smul.addr %s276, 4
        %s278 = scalar_lea.vmem [#allocation11], %s277
        %v279 = vld [vmem:[%s239] sm:$0xff]
        %v280 = vld [vmem:[%s239 + $0x8] sm:$0xff]
        %v281 = vld [vmem:[%s239 + $0x10] sm:$0xff]
        %v282 = vld [vmem:[%s239 + $0x18] sm:$0xff]
        %v283 = vld [vmem:[%s239 + $0x20] sm:$0xff]
        %v284 = vld [vmem:[%s239 + $0x28] sm:$0xff]
        %v285 = vld [vmem:[%s239 + $0x30] sm:$0xff]
        %v286 = vld [vmem:[%s239 + $0x38] sm:$0xff]
        %v287 = vld [vmem:[%s239 + $0x40] sm:$0xff]
        %v288 = vld [vmem:[%s239 + $0x48] sm:$0xff]
        %v289 = vld [vmem:[%s239 + $0x50] sm:$0xff]
        %v290 = vld [vmem:[%s239 + $0x58] sm:$0xff]
        %v291 = vld [vmem:[%s239 + $0x60] sm:$0xff]
        %v292 = vld [vmem:[%s239 + $0x68] sm:$0xff]
        %v293 = vld [vmem:[%s239 + $0x70] sm:$0xff]
        %v294 = vld [vmem:[%s239 + $0x78] sm:$0xff]
        %295 = vmatprep.subr.mxu0 0.0
        %296 = vmatpush1.msra.mxu0 %v279
        %297 = vmatprep.subr.mxu0 0.0
        %298 = vmatpush1.msra.mxu0 %v280
        %299 = vmatprep.subr.mxu0 0.0
        %300 = vmatpush1.msra.mxu0 %v281
        %301 = vmatprep.subr.mxu0 0.0
        %302 = vmatpush1.msra.mxu0 %v282
        %303 = vmatprep.subr.mxu0 0.0
        %304 = vmatpush1.msra.mxu0 %v283
        %305 = vmatprep.subr.mxu0 0.0
        %306 = vmatpush1.msra.mxu0 %v284
        %307 = vmatprep.subr.mxu0 0.0
        %308 = vmatpush1.msra.mxu0 %v285
        %309 = vmatprep.subr.mxu0 0.0
        %310 = vmatpush1.msra.mxu0 %v286
        %311 = vmatprep.subr.mxu0 0.0
        %312 = vmatpush1.msra.mxu0 %v287
        %313 = vmatprep.subr.mxu0 0.0
        %314 = vmatpush1.msra.mxu0 %v288
        %315 = vmatprep.subr.mxu0 0.0
        %316 = vmatpush1.msra.mxu0 %v289
        %317 = vmatprep.subr.mxu0 0.0
        %318 = vmatpush1.msra.mxu0 %v290
        %319 = vmatprep.subr.mxu0 0.0
        %320 = vmatpush1.msra.mxu0 %v291
        %321 = vmatprep.subr.mxu0 0.0
        %322 = vmatpush1.msra.mxu0 %v292
        %323 = vmatprep.subr.mxu0 0.0
        %324 = vmatpush1.msra.mxu0 %v293
        %325 = vmatprep.subr.mxu0 0.0
        %326 = vmatpush1.msra.mxu0 %v294
        %327 = vmatprep.subr.mxu0 0.0
        %328 = vmatpush1.msra.mxu0 0.0
        %329 = vmatprep.subr.mxu0 0.0
        %330 = vmatpush1.msra.mxu0 0.0
        %331 = vmatprep.subr.mxu0 0.0
        %332 = vmatpush1.msra.mxu0 0.0
        %333 = vmatprep.subr.mxu0 0.0
        %334 = vmatpush1.msra.mxu0 0.0
        %335 = vmatprep.subr.mxu0 0.0
        %336 = vmatpush1.msra.mxu0 0.0
        %337 = vmatprep.subr.mxu0 0.0
        %338 = vmatpush1.msra.mxu0 0.0
        %339 = vmatprep.subr.mxu0 0.0
        %340 = vmatpush1.msra.mxu0 0.0
        %341 = vmatprep.subr.mxu0 0.0
        %342 = vmatpush1.msra.mxu0 0.0
        %343 = vmatprep.subr.mxu0 0.0
        %344 = vmatpush1.msra.mxu0 0.0
        %345 = vmatprep.subr.mxu0 0.0
        %346 = vmatpush1.msra.mxu0 0.0
        %347 = vmatprep.subr.mxu0 0.0
        %348 = vmatpush1.msra.mxu0 0.0
        %349 = vmatprep.subr.mxu0 0.0
        %350 = vmatpush1.msra.mxu0 0.0
        %351 = vmatprep.subr.mxu0 0.0
        %352 = vmatpush1.msra.mxu0 0.0
        %353 = vmatprep.subr.mxu0 0.0
        %354 = vmatpush1.msra.mxu0 0.0
        %355 = vmatprep.subr.mxu0 0.0
        %356 = vmatpush1.msra.mxu0 0.0
        %357 = vmatprep.subr.mxu0 0.0
        %358 = vmatpush1.msra.mxu0 0.0
        %359 = vmatprep.mubr.f32.mxu0 0.0
        %360 = vmatmul.mubr.f32.gmra.mrb[0].mxu0 %v279
        %v361 = vpop.f32.mrb[0].mxu0
        %v362 = vadd.f32 0.0, %v361
        %v363 = vpop.f32.mrb[0].mxu0
        %364 = vmatprep.mubr.f32.mxu0 0.0
        %365 = vmatmul.mubr.f32.gmra.mrb[0].mxu0 %v280
        %v366 = vpop.f32.mrb[0].mxu0
        %v367 = vadd.f32 0.0, %v366
        %v368 = vpop.f32.mrb[0].mxu0
        %369 = vmatprep.mubr.f32.mxu0 0.0
        %370 = vmatmul.mubr.f32.gmra.mrb[0].mxu0 %v281
        %v371 = vpop.f32.mrb[0].mxu0
        %v372 = vadd.f32 0.0, %v371
        %v373 = vpop.f32.mrb[0].mxu0
        %374 = vmatprep.mubr.f32.mxu0 0.0
        %375 = vmatmul.mubr.f32.gmra.mrb[0].mxu0 %v282
        %v376 = vpop.f32.mrb[0].mxu0
        %v377 = vadd.f32 0.0, %v376
        %v378 = vpop.f32.mrb[0].mxu0
        %379 = vmatprep.mubr.f32.mxu0 0.0
        %380 = vmatmul.mubr.f32.gmra.mrb[0].mxu0 %v283
        %v381 = vpop.f32.mrb[0].mxu0
        %v382 = vadd.f32 0.0, %v381
        %v383 = vpop.f32.mrb[0].mxu0
        %384 = vmatprep.mubr.f32.mxu0 0.0
        %385 = vmatmul.mubr.f32.gmra.mrb[0].mxu0 %v284
        %v386 = vpop.f32.mrb[0].mxu0
        %v387 = vadd.f32 0.0, %v386
        %v388 = vpop.f32.mrb[0].mxu0
        %389 = vmatprep.mubr.f32.mxu0 0.0
        %390 = vmatmul.mubr.f32.gmra.mrb[0].mxu0 %v285
        %v391 = vpop.f32.mrb[0].mxu0
        %v392 = vadd.f32 0.0, %v391
        %v393 = vpop.f32.mrb[0].mxu0
        %394 = vmatprep.mubr.f32.mxu0 0.0
        %395 = vmatmul.mubr.f32.gmra.mrb[0].mxu0 %v286
        %v396 = vpop.f32.mrb[0].mxu0
        %v397 = vadd.f32 0.0, %v396
        %v398 = vpop.f32.mrb[0].mxu0
        %399 = vmatprep.mubr.f32.mxu0 0.0
        %400 = vmatmul.mubr.f32.gmra.mrb[0].mxu0 %v287
        %v401 = vpop.f32.mrb[0].mxu0
        %v402 = vadd.f32 0.0, %v401
        %v403 = vpop.f32.mrb[0].mxu0
        %404 = vmatprep.mubr.f32.mxu0 0.0
        %405 = vmatmul.mubr.f32.gmra.mrb[0].mxu0 %v288
        %v406 = vpop.f32.mrb[0].mxu0
        %v407 = vadd.f32 0.0, %v406
        %v408 = vpop.f32.mrb[0].mxu0
        %409 = vmatprep.mubr.f32.mxu0 0.0
        %410 = vmatmul.mubr.f32.gmra.mrb[0].mxu0 %v289
        %v411 = vpop.f32.mrb[0].mxu0
        %v412 = vadd.f32 0.0, %v411
        %v413 = vpop.f32.mrb[0].mxu0
        %414 = vmatprep.mubr.f32.mxu0 0.0
        %415 = vmatmul.mubr.f32.gmra.mrb[0].mxu0 %v290
        %v416 = vpop.f32.mrb[0].mxu0
        %v417 = vadd.f32 0.0, %v416
        %v418 = vpop.f32.mrb[0].mxu0
        %419 = vmatprep.mubr.f32.mxu0 0.0
        %420 = vmatmul.mubr.f32.gmra.mrb[0].mxu0 %v291
        %v421 = vpop.f32.mrb[0].mxu0
        %v422 = vadd.f32 0.0, %v421
        %v423 = vpop.f32.mrb[0].mxu0
        %424 = vmatprep.mubr.f32.mxu0 0.0
        %425 = vmatmul.mubr.f32.gmra.mrb[0].mxu0 %v292
        %v426 = vpop.f32.mrb[0].mxu0
        %v427 = vadd.f32 0.0, %v426
        %v428 = vpop.f32.mrb[0].mxu0
        %429 = vmatprep.mubr.f32.mxu0 0.0
        %430 = vmatmul.mubr.f32.gmra.mrb[0].mxu0 %v293
        %v431 = vpop.f32.mrb[0].mxu0
        %v432 = vadd.f32 0.0, %v431
        %v433 = vpop.f32.mrb[0].mxu0
        %434 = vmatprep.mubr.f32.mxu0 0.0
        %435 = vmatmul.mubr.f32.gmra.mrb[0].mxu0 %v294
        %v436 = vpop.f32.mrb[0].mxu0
        %v437 = vadd.f32 0.0, %v436
        %v438 = vpop.f32.mrb[0].mxu0
        %439 = vdwg.mxu0
        %440 = vmatprep.subr.mxu0 0.0
        %441 = vmatpush1.msra.mxu0 %v362
        %442 = vmatprep.subr.mxu0 0.0
        %443 = vmatpush1.msra.mxu0 %v367
        %444 = vmatprep.subr.mxu0 0.0
        %445 = vmatpush1.msra.mxu0 %v372
        %446 = vmatprep.subr.mxu0 0.0
        %447 = vmatpush1.msra.mxu0 %v377
        %448 = vmatprep.subr.mxu0 0.0
        %449 = vmatpush1.msra.mxu0 %v382
        %450 = vmatprep.subr.mxu0 0.0
        %451 = vmatpush1.msra.mxu0 %v387
        %452 = vmatprep.subr.mxu0 0.0
        %453 = vmatpush1.msra.mxu0 %v392
        %454 = vmatprep.subr.mxu0 0.0
        %455 = vmatpush1.msra.mxu0 %v397
        %456 = vmatprep.subr.mxu0 0.0
        %457 = vmatpush1.msra.mxu0 %v402
        %458 = vmatprep.subr.mxu0 0.0
        %459 = vmatpush1.msra.mxu0 %v407
        %460 = vmatprep.subr.mxu0 0.0
        %461 = vmatpush1.msra.mxu0 %v412
        %462 = vmatprep.subr.mxu0 0.0
        %463 = vmatpush1.msra.mxu0 %v417
        %464 = vmatprep.subr.mxu0 0.0
        %465 = vmatpush1.msra.mxu0 %v422
        %466 = vmatprep.subr.mxu0 0.0
        %467 = vmatpush1.msra.mxu0 %v427
        %468 = vmatprep.subr.mxu0 0.0
        %469 = vmatpush1.msra.mxu0 %v432
        %470 = vmatprep.subr.mxu0 0.0
        %471 = vmatpush1.msra.mxu0 %v437
        %472 = vmatprep.subr.mxu0 0.0
        %473 = vmatpush1.msra.mxu0 0.0
        %474 = vmatprep.subr.mxu0 0.0
        %475 = vmatpush1.msra.mxu0 0.0
        %476 = vmatprep.subr.mxu0 0.0
        %477 = vmatpush1.msra.mxu0 0.0
        %478 = vmatprep.subr.mxu0 0.0
        %479 = vmatpush1.msra.mxu0 0.0
        %480 = vmatprep.subr.mxu0 0.0
        %481 = vmatpush1.msra.mxu0 0.0
        %482 = vmatprep.subr.mxu0 0.0
        %483 = vmatpush1.msra.mxu0 0.0
        %484 = vmatprep.subr.mxu0 0.0
        %485 = vmatpush1.msra.mxu0 0.0
        %486 = vmatprep.subr.mxu0 0.0
        %487 = vmatpush1.msra.mxu0 0.0
        %488 = vmatprep.subr.mxu0 0.0
        %489 = vmatpush1.msra.mxu0 0.0
        %490 = vmatprep.subr.mxu0 0.0
        %491 = vmatpush1.msra.mxu0 0.0
        %492 = vmatprep.subr.mxu0 0.0
        %493 = vmatpush1.msra.mxu0 0.0
        %494 = vmatprep.subr.mxu0 0.0
        %495 = vmatpush1.msra.mxu0 0.0
        %496 = vmatprep.subr.mxu0 0.0
        %497 = vmatpush1.msra.mxu0 0.0
        %498 = vmatprep.subr.mxu0 0.0
        %499 = vmatpush1.msra.mxu0 0.0
        %500 = vmatprep.subr.mxu0 0.0
        %501 = vmatpush1.msra.mxu0 0.0
        %502 = vmatprep.subr.mxu0 0.0
        %503 = vmatpush1.msra.mxu0 0.0
        %504 = vmatprep.mubr.f32.mxu0 0.0
        %505 = vmatmul.mubr.f32.gmra.mrb[0].mxu0 %v362
        %v506 = vpop.f32.mrb[0].mxu0
        %v507 = vadd.f32 0.0, %v506
        %v508 = vpop.f32.mrb[0].mxu0
        %509 = vmatprep.mubr.f32.mxu0 0.0
        %510 = vmatmul.mubr.f32.gmra.mrb[0].mxu0 %v367
        %v511 = vpop.f32.mrb[0].mxu0
        %v512 = vadd.f32 0.0, %v511
        %v513 = vpop.f32.mrb[0].mxu0
        %514 = vmatprep.mubr.f32.mxu0 0.0
        %515 = vmatmul.mubr.f32.gmra.mrb[0].mxu0 %v372
        %v516 = vpop.f32.mrb[0].mxu0
        %v517 = vadd.f32 0.0, %v516
        %v518 = vpop.f32.mrb[0].mxu0
        %519 = vmatprep.mubr.f32.mxu0 0.0
        %520 = vmatmul.mubr.f32.gmra.mrb[0].mxu0 %v377
        %v521 = vpop.f32.mrb[0].mxu0
        %v522 = vadd.f32 0.0, %v521
        %v523 = vpop.f32.mrb[0].mxu0
        %524 = vmatprep.mubr.f32.mxu0 0.0
        %525 = vmatmul.mubr.f32.gmra.mrb[0].mxu0 %v382
        %v526 = vpop.f32.mrb[0].mxu0
        %v527 = vadd.f32 0.0, %v526
        %v528 = vpop.f32.mrb[0].mxu0
        %529 = vmatprep.mubr.f32.mxu0 0.0
        %530 = vmatmul.mubr.f32.gmra.mrb[0].mxu0 %v387
        %v531 = vpop.f32.mrb[0].mxu0
        %v532 = vadd.f32 0.0, %v531
        %v533 = vpop.f32.mrb[0].mxu0
        %534 = vmatprep.mubr.f32.mxu0 0.0
        %535 = vmatmul.mubr.f32.gmra.mrb[0].mxu0 %v392
        %v536 = vpop.f32.mrb[0].mxu0
        %v537 = vadd.f32 0.0, %v536
        %v538 = vpop.f32.mrb[0].mxu0
        %539 = vmatprep.mubr.f32.mxu0 0.0
        %540 = vmatmul.mubr.f32.gmra.mrb[0].mxu0 %v397
        %v541 = vpop.f32.mrb[0].mxu0
        %v542 = vadd.f32 0.0, %v541
        %v543 = vpop.f32.mrb[0].mxu0
        %544 = vmatprep.mubr.f32.mxu0 0.0
        %545 = vmatmul.mubr.f32.gmra.mrb[0].mxu0 %v402
        %v546 = vpop.f32.mrb[0].mxu0
        %v547 = vadd.f32 0.0, %v546
        %v548 = vpop.f32.mrb[0].mxu0
        %549 = vmatprep.mubr.f32.mxu0 0.0
        %550 = vmatmul.mubr.f32.gmra.mrb[0].mxu0 %v407
        %v551 = vpop.f32.mrb[0].mxu0
        %v552 = vadd.f32 0.0, %v551
        %v553 = vpop.f32.mrb[0].mxu0
        %554 = vmatprep.mubr.f32.mxu0 0.0
        %555 = vmatmul.mubr.f32.gmra.mrb[0].mxu0 %v412
        %v556 = vpop.f32.mrb[0].mxu0
        %v557 = vadd.f32 0.0, %v556
        %v558 = vpop.f32.mrb[0].mxu0
        %559 = vmatprep.mubr.f32.mxu0 0.0
        %560 = vmatmul.mubr.f32.gmra.mrb[0].mxu0 %v417
        %v561 = vpop.f32.mrb[0].mxu0
        %v562 = vadd.f32 0.0, %v561
        %v563 = vpop.f32.mrb[0].mxu0
        %564 = vmatprep.mubr.f32.mxu0 0.0
        %565 = vmatmul.mubr.f32.gmra.mrb[0].mxu0 %v422
        %v566 = vpop.f32.mrb[0].mxu0
        %v567 = vadd.f32 0.0, %v566
        %v568 = vpop.f32.mrb[0].mxu0
        %569 = vmatprep.mubr.f32.mxu0 0.0
        %570 = vmatmul.mubr.f32.gmra.mrb[0].mxu0 %v427
        %v571 = vpop.f32.mrb[0].mxu0
        %v572 = vadd.f32 0.0, %v571
        %v573 = vpop.f32.mrb[0].mxu0
        %574 = vmatprep.mubr.f32.mxu0 0.0
        %575 = vmatmul.mubr.f32.gmra.mrb[0].mxu0 %v432
        %v576 = vpop.f32.mrb[0].mxu0
        %v577 = vadd.f32 0.0, %v576
        %v578 = vpop.f32.mrb[0].mxu0
        %579 = vmatprep.mubr.f32.mxu0 0.0
        %580 = vmatmul.mubr.f32.gmra.mrb[0].mxu0 %v437
        %v581 = vpop.f32.mrb[0].mxu0
        %v582 = vadd.f32 0.0, %v581
        %v583 = vpop.f32.mrb[0].mxu0
        %584 = vdwg.mxu0
        %585 = vmatprep.subr.mxu0 0.0
        %586 = vmatpush1.msra.mxu0 %v507
        %587 = vmatprep.subr.mxu0 0.0
        %588 = vmatpush1.msra.mxu0 %v512
        %589 = vmatprep.subr.mxu0 0.0
        %590 = vmatpush1.msra.mxu0 %v517
        %591 = vmatprep.subr.mxu0 0.0
        %592 = vmatpush1.msra.mxu0 %v522
        %593 = vmatprep.subr.mxu0 0.0
        %594 = vmatpush1.msra.mxu0 %v527
        %595 = vmatprep.subr.mxu0 0.0
        %596 = vmatpush1.msra.mxu0 %v532
        %597 = vmatprep.subr.mxu0 0.0
        %598 = vmatpush1.msra.mxu0 %v537
        %599 = vmatprep.subr.mxu0 0.0
        %600 = vmatpush1.msra.mxu0 %v542
        %601 = vmatprep.subr.mxu0 0.0
        %602 = vmatpush1.msra.mxu0 %v547
        %603 = vmatprep.subr.mxu0 0.0
        %604 = vmatpush1.msra.mxu0 %v552
        %605 = vmatprep.subr.mxu0 0.0
        %606 = vmatpush1.msra.mxu0 %v557
        %607 = vmatprep.subr.mxu0 0.0
        %608 = vmatpush1.msra.mxu0 %v562
        %609 = vmatprep.subr.mxu0 0.0
        %610 = vmatpush1.msra.mxu0 %v567
        %611 = vmatprep.subr.mxu0 0.0
        %612 = vmatpush1.msra.mxu0 %v572
        %613 = vmatprep.subr.mxu0 0.0
        %614 = vmatpush1.msra.mxu0 %v577
        %615 = vmatprep.subr.mxu0 0.0
        %616 = vmatpush1.msra.mxu0 %v582
        %617 = vmatprep.subr.mxu0 0.0
        %618 = vmatpush1.msra.mxu0 0.0
        %619 = vmatprep.subr.mxu0 0.0
        %620 = vmatpush1.msra.mxu0 0.0
        %621 = vmatprep.subr.mxu0 0.0
        %622 = vmatpush1.msra.mxu0 0.0
        %623 = vmatprep.subr.mxu0 0.0
        %624 = vmatpush1.msra.mxu0 0.0
        %625 = vmatprep.subr.mxu0 0.0
        %626 = vmatpush1.msra.mxu0 0.0
        %627 = vmatprep.subr.mxu0 0.0
        %628 = vmatpush1.msra.mxu0 0.0
        %629 = vmatprep.subr.mxu0 0.0
        %630 = vmatpush1.msra.mxu0 0.0
        %631 = vmatprep.subr.mxu0 0.0
        %632 = vmatpush1.msra.mxu0 0.0
        %633 = vmatprep.subr.mxu0 0.0
        %634 = vmatpush1.msra.mxu0 0.0
        %635 = vmatprep.subr.mxu0 0.0
        %636 = vmatpush1.msra.mxu0 0.0
        %637 = vmatprep.subr.mxu0 0.0
        %638 = vmatpush1.msra.mxu0 0.0
        %639 = vmatprep.subr.mxu0 0.0
        %640 = vmatpush1.msra.mxu0 0.0
        %641 = vmatprep.subr.mxu0 0.0
        %642 = vmatpush1.msra.mxu0 0.0
        %643 = vmatprep.subr.mxu0 0.0
        %644 = vmatpush1.msra.mxu0 0.0
        %645 = vmatprep.subr.mxu0 0.0
        %646 = vmatpush1.msra.mxu0 0.0
        %647 = vmatprep.subr.mxu0 0.0
        %648 = vmatpush1.msra.mxu0 0.0
        %649 = vmatprep.mubr.f32.mxu0 0.0
        %650 = vmatmul.mubr.f32.gmra.mrb[0].mxu0 %v507
        %v651 = vpop.f32.mrb[0].mxu0
        %v652 = vadd.f32 0.0, %v651
        %v653 = vpop.f32.mrb[0].mxu0
        %654 = vmatprep.mubr.f32.mxu0 0.0
        %655 = vmatmul.mubr.f32.gmra.mrb[0].mxu0 %v512
        %v656 = vpop.f32.mrb[0].mxu0
        %v657 = vadd.f32 0.0, %v656
        %v658 = vpop.f32.mrb[0].mxu0
        %659 = vmatprep.mubr.f32.mxu0 0.0
        %660 = vmatmul.mubr.f32.gmra.mrb[0].mxu0 %v517
        %v661 = vpop.f32.mrb[0].mxu0
        %v662 = vadd.f32 0.0, %v661
        %v663 = vpop.f32.mrb[0].mxu0
        %664 = vmatprep.mubr.f32.mxu0 0.0
        %665 = vmatmul.mubr.f32.gmra.mrb[0].mxu0 %v522
        %v666 = vpop.f32.mrb[0].mxu0
        %v667 = vadd.f32 0.0, %v666
        %v668 = vpop.f32.mrb[0].mxu0
        %669 = vmatprep.mubr.f32.mxu0 0.0
        %670 = vmatmul.mubr.f32.gmra.mrb[0].mxu0 %v527
        %v671 = vpop.f32.mrb[0].mxu0
        %v672 = vadd.f32 0.0, %v671
        %v673 = vpop.f32.mrb[0].mxu0
        %674 = vmatprep.mubr.f32.mxu0 0.0
        %675 = vmatmul.mubr.f32.gmra.mrb[0].mxu0 %v532
        %v676 = vpop.f32.mrb[0].mxu0
        %v677 = vadd.f32 0.0, %v676
        %v678 = vpop.f32.mrb[0].mxu0
        %679 = vmatprep.mubr.f32.mxu0 0.0
        %680 = vmatmul.mubr.f32.gmra.mrb[0].mxu0 %v537
        %v681 = vpop.f32.mrb[0].mxu0
        %v682 = vadd.f32 0.0, %v681
        %v683 = vpop.f32.mrb[0].mxu0
        %684 = vmatprep.mubr.f32.mxu0 0.0
        %685 = vmatmul.mubr.f32.gmra.mrb[0].mxu0 %v542
        %v686 = vpop.f32.mrb[0].mxu0
        %v687 = vadd.f32 0.0, %v686
        %v688 = vpop.f32.mrb[0].mxu0
        %689 = vmatprep.mubr.f32.mxu0 0.0
        %690 = vmatmul.mubr.f32.gmra.mrb[0].mxu0 %v547
        %v691 = vpop.f32.mrb[0].mxu0
        %v692 = vadd.f32 0.0, %v691
        %v693 = vpop.f32.mrb[0].mxu0
        %694 = vmatprep.mubr.f32.mxu0 0.0
        %695 = vmatmul.mubr.f32.gmra.mrb[0].mxu0 %v552
        %v696 = vpop.f32.mrb[0].mxu0
        %v697 = vadd.f32 0.0, %v696
        %v698 = vpop.f32.mrb[0].mxu0
        %699 = vmatprep.mubr.f32.mxu0 0.0
        %700 = vmatmul.mubr.f32.gmra.mrb[0].mxu0 %v557
        %v701 = vpop.f32.mrb[0].mxu0
        %v702 = vadd.f32 0.0, %v701
        %v703 = vpop.f32.mrb[0].mxu0
        %704 = vmatprep.mubr.f32.mxu0 0.0
        %705 = vmatmul.mubr.f32.gmra.mrb[0].mxu0 %v562
        %v706 = vpop.f32.mrb[0].mxu0
        %v707 = vadd.f32 0.0, %v706
        %v708 = vpop.f32.mrb[0].mxu0
        %709 = vmatprep.mubr.f32.mxu0 0.0
        %710 = vmatmul.mubr.f32.gmra.mrb[0].mxu0 %v567
        %v711 = vpop.f32.mrb[0].mxu0
        %v712 = vadd.f32 0.0, %v711
        %v713 = vpop.f32.mrb[0].mxu0
        %714 = vmatprep.mubr.f32.mxu0 0.0
        %715 = vmatmul.mubr.f32.gmra.mrb[0].mxu0 %v572
        %v716 = vpop.f32.mrb[0].mxu0
        %v717 = vadd.f32 0.0, %v716
        %v718 = vpop.f32.mrb[0].mxu0
        %719 = vmatprep.mubr.f32.mxu0 0.0
        %720 = vmatmul.mubr.f32.gmra.mrb[0].mxu0 %v577
        %v721 = vpop.f32.mrb[0].mxu0
        %v722 = vadd.f32 0.0, %v721
        %v723 = vpop.f32.mrb[0].mxu0
        %724 = vmatprep.mubr.f32.mxu0 0.0
        %725 = vmatmul.mubr.f32.gmra.mrb[0].mxu0 %v582
        %v726 = vpop.f32.mrb[0].mxu0
        %v727 = vadd.f32 0.0, %v726
        %v728 = vpop.f32.mrb[0].mxu0
        %729 = vdwg.mxu0
        %v730 = vlaneseq
        %v731 = vand.u32 %v730, 127
        %v732 = vld [vmem:[%s248] sm:$0xff]
        %v733 = vld [vmem:[%s248 + $0x8] sm:$0xff]
        %v734 = vld [vmem:[%s248 + $0x10] sm:$0xff]
        %v735 = vld [vmem:[%s248 + $0x18] sm:$0xff]
        %v736 = vld [vmem:[%s248 + $0x20] sm:$0xff]
        %v737 = vld [vmem:[%s248 + $0x28] sm:$0xff]
        %v738 = vld [vmem:[%s248 + $0x30] sm:$0xff]
        %v739 = vld [vmem:[%s248 + $0x38] sm:$0xff]
        %v740 = vld [vmem:[%s248 + $0x40] sm:$0xff]
        %v741 = vld [vmem:[%s248 + $0x48] sm:$0xff]
        %v742 = vld [vmem:[%s248 + $0x50] sm:$0xff]
        %v743 = vld [vmem:[%s248 + $0x58] sm:$0xff]
        %v744 = vld [vmem:[%s248 + $0x60] sm:$0xff]
        %v745 = vld [vmem:[%s248 + $0x68] sm:$0xff]
        %v746 = vld [vmem:[%s248 + $0x70] sm:$0xff]
        %v747 = vld [vmem:[%s248 + $0x78] sm:$0xff]
        %748 = vmatprep.subr.mxu0 0.0
        %749 = vmatpush1.msra.mxu0 %v732
        %750 = vmatprep.subr.mxu0 0.0
        %751 = vmatpush1.msra.mxu0 %v733
        %752 = vmatprep.subr.mxu0 0.0
        %753 = vmatpush1.msra.mxu0 %v734
        %754 = vmatprep.subr.mxu0 0.0
        %755 = vmatpush1.msra.mxu0 %v735
        %756 = vmatprep.subr.mxu0 0.0
        %757 = vmatpush1.msra.mxu0 %v736
        %758 = vmatprep.subr.mxu0 0.0
        %759 = vmatpush1.msra.mxu0 %v737
        %760 = vmatprep.subr.mxu0 0.0
        %761 = vmatpush1.msra.mxu0 %v738
        %762 = vmatprep.subr.mxu0 0.0
        %763 = vmatpush1.msra.mxu0 %v739
        %764 = vmatprep.subr.mxu0 0.0
        %765 = vmatpush1.msra.mxu0 %v740
        %766 = vmatprep.subr.mxu0 0.0
        %767 = vmatpush1.msra.mxu0 %v741
        %768 = vmatprep.subr.mxu0 0.0
        %769 = vmatpush1.msra.mxu0 %v742
        %770 = vmatprep.subr.mxu0 0.0
        %771 = vmatpush1.msra.mxu0 %v743
        %772 = vmatprep.subr.mxu0 0.0
        %773 = vmatpush1.msra.mxu0 %v744
        %774 = vmatprep.subr.mxu0 0.0
        %775 = vmatpush1.msra.mxu0 %v745
        %776 = vmatprep.subr.mxu0 0.0
        %777 = vmatpush1.msra.mxu0 %v746
        %778 = vmatprep.subr.mxu0 0.0
        %779 = vmatpush1.msra.mxu0 %v747
        %780 = vmatprep.subr.mxu0 0.0
        %781 = vmatpush1.msra.mxu0 0.0
        %782 = vmatprep.subr.mxu0 0.0
        %783 = vmatpush1.msra.mxu0 0.0
        %784 = vmatprep.subr.mxu0 0.0
        %785 = vmatpush1.msra.mxu0 0.0
        %786 = vmatprep.subr.mxu0 0.0
        %787 = vmatpush1.msra.mxu0 0.0
        %788 = vmatprep.subr.mxu0 0.0
        %789 = vmatpush1.msra.mxu0 0.0
        %790 = vmatprep.subr.mxu0 0.0
        %791 = vmatpush1.msra.mxu0 0.0
        %792 = vmatprep.subr.mxu0 0.0
        %793 = vmatpush1.msra.mxu0 0.0
        %794 = vmatprep.subr.mxu0 0.0
        %795 = vmatpush1.msra.mxu0 0.0
        %796 = vmatprep.subr.mxu0 0.0
        %797 = vmatpush1.msra.mxu0 0.0
        %798 = vmatprep.subr.mxu0 0.0
        %799 = vmatpush1.msra.mxu0 0.0
        %800 = vmatprep.subr.mxu0 0.0
        %801 = vmatpush1.msra.mxu0 0.0
        %802 = vmatprep.subr.mxu0 0.0
        %803 = vmatpush1.msra.mxu0 0.0
        %804 = vmatprep.subr.mxu0 0.0
        %805 = vmatpush1.msra.mxu0 0.0
        %806 = vmatprep.subr.mxu0 0.0
        %807 = vmatpush1.msra.mxu0 0.0
        %808 = vmatprep.subr.mxu0 0.0
        %809 = vmatpush1.msra.mxu0 0.0
        %810 = vmatprep.subr.mxu0 0.0
        %811 = vmatpush1.msra.mxu0 0.0
        %812 = vmatprep.mubr.f32.mxu0 0.0
        %813 = vmatmul.mubr.f32.gmra.mrb[0].mxu0 %v279
        %v814 = vpop.f32.mrb[0].mxu0
        %v815 = vadd.f32 0.0, %v814
        %v816 = vpop.f32.mrb[0].mxu0
        %817 = vmatprep.mubr.f32.mxu0 0.0
        %818 = vmatmul.mubr.f32.gmra.mrb[0].mxu0 %v280
        %v819 = vpop.f32.mrb[0].mxu0
        %v820 = vadd.f32 0.0, %v819
        %v821 = vpop.f32.mrb[0].mxu0
        %822 = vmatprep.mubr.f32.mxu0 0.0
        %823 = vmatmul.mubr.f32.gmra.mrb[0].mxu0 %v281
        %v824 = vpop.f32.mrb[0].mxu0
        %v825 = vadd.f32 0.0, %v824
        %v826 = vpop.f32.mrb[0].mxu0
        %827 = vmatprep.mubr.f32.mxu0 0.0
        %828 = vmatmul.mubr.f32.gmra.mrb[0].mxu0 %v282
        %v829 = vpop.f32.mrb[0].mxu0
        %v830 = vadd.f32 0.0, %v829
        %v831 = vpop.f32.mrb[0].mxu0
        %832 = vmatprep.mubr.f32.mxu0 0.0
        %833 = vmatmul.mubr.f32.gmra.mrb[0].mxu0 %v283
        %v834 = vpop.f32.mrb[0].mxu0
        %v835 = vadd.f32 0.0, %v834
        %v836 = vpop.f32.mrb[0].mxu0
        %837 = vmatprep.mubr.f32.mxu0 0.0
        %838 = vmatmul.mubr.f32.gmra.mrb[0].mxu0 %v284
        %v839 = vpop.f32.mrb[0].mxu0
        %v840 = vadd.f32 0.0, %v839
        %v841 = vpop.f32.mrb[0].mxu0
        %842 = vmatprep.mubr.f32.mxu0 0.0
        %843 = vmatmul.mubr.f32.gmra.mrb[0].mxu0 %v285
        %v844 = vpop.f32.mrb[0].mxu0
        %v845 = vadd.f32 0.0, %v844
        %v846 = vpop.f32.mrb[0].mxu0
        %847 = vmatprep.mubr.f32.mxu0 0.0
        %848 = vmatmul.mubr.f32.gmra.mrb[0].mxu0 %v286
        %v849 = vpop.f32.mrb[0].mxu0
        %v850 = vadd.f32 0.0, %v849
        %v851 = vpop.f32.mrb[0].mxu0
        %852 = vmatprep.mubr.f32.mxu0 0.0
        %853 = vmatmul.mubr.f32.gmra.mrb[0].mxu0 %v287
        %v854 = vpop.f32.mrb[0].mxu0
        %v855 = vadd.f32 0.0, %v854
        %v856 = vpop.f32.mrb[0].mxu0
        %857 = vmatprep.mubr.f32.mxu0 0.0
        %858 = vmatmul.mubr.f32.gmra.mrb[0].mxu0 %v288
        %v859 = vpop.f32.mrb[0].mxu0
        %v860 = vadd.f32 0.0, %v859
        %v861 = vpop.f32.mrb[0].mxu0
        %862 = vmatprep.mubr.f32.mxu0 0.0
        %863 = vmatmul.mubr.f32.gmra.mrb[0].mxu0 %v289
        %v864 = vpop.f32.mrb[0].mxu0
        %v865 = vadd.f32 0.0, %v864
        %v866 = vpop.f32.mrb[0].mxu0
        %867 = vmatprep.mubr.f32.mxu0 0.0
        %868 = vmatmul.mubr.f32.gmra.mrb[0].mxu0 %v290
        %v869 = vpop.f32.mrb[0].mxu0
        %v870 = vadd.f32 0.0, %v869
        %v871 = vpop.f32.mrb[0].mxu0
        %872 = vmatprep.mubr.f32.mxu0 0.0
        %873 = vmatmul.mubr.f32.gmra.mrb[0].mxu0 %v291
        %v874 = vpop.f32.mrb[0].mxu0
        %v875 = vadd.f32 0.0, %v874
        %v876 = vpop.f32.mrb[0].mxu0
        %877 = vmatprep.mubr.f32.mxu0 0.0
        %878 = vmatmul.mubr.f32.gmra.mrb[0].mxu0 %v292
        %v879 = vpop.f32.mrb[0].mxu0
        %v880 = vadd.f32 0.0, %v879
        %v881 = vpop.f32.mrb[0].mxu0
        %882 = vmatprep.mubr.f32.mxu0 0.0
        %883 = vmatmul.mubr.f32.gmra.mrb[0].mxu0 %v293
        %v884 = vpop.f32.mrb[0].mxu0
        %v885 = vadd.f32 0.0, %v884
        %v886 = vpop.f32.mrb[0].mxu0
        %887 = vmatprep.mubr.f32.mxu0 0.0
        %888 = vmatmul.mubr.f32.gmra.mrb[0].mxu0 %v294
        %v889 = vpop.f32.mrb[0].mxu0
        %v890 = vadd.f32 0.0, %v889
        %v891 = vpop.f32.mrb[0].mxu0
        %892 = vdwg.mxu0
        %893 = vmatprep.subr.mxu0 0.0
        %894 = vmatpush1.msra.mxu0 %v815
        %895 = vmatprep.subr.mxu0 0.0
        %896 = vmatpush1.msra.mxu0 %v820
        %897 = vmatprep.subr.mxu0 0.0
        %898 = vmatpush1.msra.mxu0 %v825
        %899 = vmatprep.subr.mxu0 0.0
        %900 = vmatpush1.msra.mxu0 %v830
        %901 = vmatprep.subr.mxu0 0.0
        %902 = vmatpush1.msra.mxu0 %v835
        %903 = vmatprep.subr.mxu0 0.0
        %904 = vmatpush1.msra.mxu0 %v840
        %905 = vmatprep.subr.mxu0 0.0
        %906 = vmatpush1.msra.mxu0 %v845
        %907 = vmatprep.subr.mxu0 0.0
        %908 = vmatpush1.msra.mxu0 %v850
        %909 = vmatprep.subr.mxu0 0.0
        %910 = vmatpush1.msra.mxu0 %v855
        %911 = vmatprep.subr.mxu0 0.0
        %912 = vmatpush1.msra.mxu0 %v860
        %913 = vmatprep.subr.mxu0 0.0
        %914 = vmatpush1.msra.mxu0 %v865
        %915 = vmatprep.subr.mxu0 0.0
        %916 = vmatpush1.msra.mxu0 %v870
        %917 = vmatprep.subr.mxu0 0.0
        %918 = vmatpush1.msra.mxu0 %v875
        %919 = vmatprep.subr.mxu0 0.0
        %920 = vmatpush1.msra.mxu0 %v880
        %921 = vmatprep.subr.mxu0 0.0
        %922 = vmatpush1.msra.mxu0 %v885
        %923 = vmatprep.subr.mxu0 0.0
        %924 = vmatpush1.msra.mxu0 %v890
        %925 = vmatprep.subr.mxu0 0.0
        %926 = vmatpush1.msra.mxu0 0.0
        %927 = vmatprep.subr.mxu0 0.0
        %928 = vmatpush1.msra.mxu0 0.0
        %929 = vmatprep.subr.mxu0 0.0
        %930 = vmatpush1.msra.mxu0 0.0
        %931 = vmatprep.subr.mxu0 0.0
        %932 = vmatpush1.msra.mxu0 0.0
        %933 = vmatprep.subr.mxu0 0.0
        %934 = vmatpush1.msra.mxu0 0.0
        %935 = vmatprep.subr.mxu0 0.0
        %936 = vmatpush1.msra.mxu0 0.0
        %937 = vmatprep.subr.mxu0 0.0
        %938 = vmatpush1.msra.mxu0 0.0
        %939 = vmatprep.subr.mxu0 0.0
        %940 = vmatpush1.msra.mxu0 0.0
        %941 = vmatprep.subr.mxu0 0.0
        %942 = vmatpush1.msra.mxu0 0.0
        %943 = vmatprep.subr.mxu0 0.0
        %944 = vmatpush1.msra.mxu0 0.0
        %945 = vmatprep.subr.mxu0 0.0
        %946 = vmatpush1.msra.mxu0 0.0
        %947 = vmatprep.subr.mxu0 0.0
        %948 = vmatpush1.msra.mxu0 0.0
        %949 = vmatprep.subr.mxu0 0.0
        %950 = vmatpush1.msra.mxu0 0.0
        %951 = vmatprep.subr.mxu0 0.0
        %952 = vmatpush1.msra.mxu0 0.0
        %953 = vmatprep.subr.mxu0 0.0
        %954 = vmatpush1.msra.mxu0 0.0
        %955 = vmatprep.subr.mxu0 0.0
        %956 = vmatpush1.msra.mxu0 0.0
        %957 = vmatprep.mubr.f32.mxu0 0.0
        %958 = vmatmul.mubr.f32.gmra.mrb[0].mxu0 %v279
        %v959 = vpop.f32.mrb[0].mxu0
        %v960 = vadd.f32 0.0, %v959
        %v961 = vpop.f32.mrb[0].mxu0
        %962 = vmatprep.mubr.f32.mxu0 0.0
        %963 = vmatmul.mubr.f32.gmra.mrb[0].mxu0 %v280
        %v964 = vpop.f32.mrb[0].mxu0
        %v965 = vadd.f32 0.0, %v964
        %v966 = vpop.f32.mrb[0].mxu0
        %967 = vmatprep.mubr.f32.mxu0 0.0
        %968 = vmatmul.mubr.f32.gmra.mrb[0].mxu0 %v281
        %v969 = vpop.f32.mrb[0].mxu0
        %v970 = vadd.f32 0.0, %v969
        %v971 = vpop.f32.mrb[0].mxu0
        %972 = vmatprep.mubr.f32.mxu0 0.0
        %973 = vmatmul.mubr.f32.gmra.mrb[0].mxu0 %v282
        %v974 = vpop.f32.mrb[0].mxu0
        %v975 = vadd.f32 0.0, %v974
        %v976 = vpop.f32.mrb[0].mxu0
        %977 = vmatprep.mubr.f32.mxu0 0.0
        %978 = vmatmul.mubr.f32.gmra.mrb[0].mxu0 %v283
        %v979 = vpop.f32.mrb[0].mxu0
        %v980 = vadd.f32 0.0, %v979
        %v981 = vpop.f32.mrb[0].mxu0
        %982 = vmatprep.mubr.f32.mxu0 0.0
        %983 = vmatmul.mubr.f32.gmra.mrb[0].mxu0 %v284
        %v984 = vpop.f32.mrb[0].mxu0
        %v985 = vadd.f32 0.0, %v984
        %v986 = vpop.f32.mrb[0].mxu0
        %987 = vmatprep.mubr.f32.mxu0 0.0
        %988 = vmatmul.mubr.f32.gmra.mrb[0].mxu0 %v285
        %v989 = vpop.f32.mrb[0].mxu0
        %v990 = vadd.f32 0.0, %v989
        %v991 = vpop.f32.mrb[0].mxu0
        %992 = vmatprep.mubr.f32.mxu0 0.0
        %993 = vmatmul.mubr.f32.gmra.mrb[0].mxu0 %v286
        %v994 = vpop.f32.mrb[0].mxu0
        %v995 = vadd.f32 0.0, %v994
        %v996 = vpop.f32.mrb[0].mxu0
        %997 = vmatprep.mubr.f32.mxu0 0.0
        %998 = vmatmul.mubr.f32.gmra.mrb[0].mxu0 %v287
        %v999 = vpop.f32.mrb[0].mxu0
        %v1000 = vadd.f32 0.0, %v999
        %v1001 = vpop.f32.mrb[0].mxu0
        %1002 = vmatprep.mubr.f32.mxu0 0.0
        %1003 = vmatmul.mubr.f32.gmra.mrb[0].mxu0 %v288
        %v1004 = vpop.f32.mrb[0].mxu0
        %v1005 = vadd.f32 0.0, %v1004
        %v1006 = vpop.f32.mrb[0].mxu0
        %1007 = vmatprep.mubr.f32.mxu0 0.0
        %1008 = vmatmul.mubr.f32.gmra.mrb[0].mxu0 %v289
        %v1009 = vpop.f32.mrb[0].mxu0
        %v1010 = vadd.f32 0.0, %v1009
        %v1011 = vpop.f32.mrb[0].mxu0
        %1012 = vmatprep.mubr.f32.mxu0 0.0
        %1013 = vmatmul.mubr.f32.gmra.mrb[0].mxu0 %v290
        %v1014 = vpop.f32.mrb[0].mxu0
        %v1015 = vadd.f32 0.0, %v1014
        %v1016 = vpop.f32.mrb[0].mxu0
        %1017 = vmatprep.mubr.f32.mxu0 0.0
        %1018 = vmatmul.mubr.f32.gmra.mrb[0].mxu0 %v291
        %v1019 = vpop.f32.mrb[0].mxu0
        %v1020 = vadd.f32 0.0, %v1019
        %v1021 = vpop.f32.mrb[0].mxu0
        %1022 = vmatprep.mubr.f32.mxu0 0.0
        %1023 = vmatmul.mubr.f32.gmra.mrb[0].mxu0 %v292
        %v1024 = vpop.f32.mrb[0].mxu0
        %v1025 = vadd.f32 0.0, %v1024
        %v1026 = vpop.f32.mrb[0].mxu0
        %1027 = vmatprep.mubr.f32.mxu0 0.0
        %1028 = vmatmul.mubr.f32.gmra.mrb[0].mxu0 %v293
        %v1029 = vpop.f32.mrb[0].mxu0
        %v1030 = vadd.f32 0.0, %v1029
        %v1031 = vpop.f32.mrb[0].mxu0
        %1032 = vmatprep.mubr.f32.mxu0 0.0
        %1033 = vmatmul.mubr.f32.gmra.mrb[0].mxu0 %v294
        %v1034 = vpop.f32.mrb[0].mxu0
        %v1035 = vadd.f32 0.0, %v1034
        %v1036 = vpop.f32.mrb[0].mxu0
        %1037 = vdwg.mxu0
        %1038 = vmatprep.subr.mxu0 0.0
        %1039 = vmatpush1.msra.mxu0 %v960
        %1040 = vmatprep.subr.mxu0 0.0
        %1041 = vmatpush1.msra.mxu0 %v965
        %1042 = vmatprep.subr.mxu0 0.0
        %1043 = vmatpush1.msra.mxu0 %v970
        %1044 = vmatprep.subr.mxu0 0.0
        %1045 = vmatpush1.msra.mxu0 %v975
        %1046 = vmatprep.subr.mxu0 0.0
        %1047 = vmatpush1.msra.mxu0 %v980
        %1048 = vmatprep.subr.mxu0 0.0
        %1049 = vmatpush1.msra.mxu0 %v985
        %1050 = vmatprep.subr.mxu0 0.0
        %1051 = vmatpush1.msra.mxu0 %v990
        %1052 = vmatprep.subr.mxu0 0.0
        %1053 = vmatpush1.msra.mxu0 %v995
        %1054 = vmatprep.subr.mxu0 0.0
        %1055 = vmatpush1.msra.mxu0 %v1000
        %1056 = vmatprep.subr.mxu0 0.0
        %1057 = vmatpush1.msra.mxu0 %v1005
        %1058 = vmatprep.subr.mxu0 0.0
        %1059 = vmatpush1.msra.mxu0 %v1010
        %1060 = vmatprep.subr.mxu0 0.0
        %1061 = vmatpush1.msra.mxu0 %v1015
        %1062 = vmatprep.subr.mxu0 0.0
        %1063 = vmatpush1.msra.mxu0 %v1020
        %1064 = vmatprep.subr.mxu0 0.0
        %1065 = vmatpush1.msra.mxu0 %v1025
        %1066 = vmatprep.subr.mxu0 0.0
        %1067 = vmatpush1.msra.mxu0 %v1030
        %1068 = vmatprep.subr.mxu0 0.0
        %1069 = vmatpush1.msra.mxu0 %v1035
        %1070 = vmatprep.subr.mxu0 0.0
        %1071 = vmatpush1.msra.mxu0 0.0
        %1072 = vmatprep.subr.mxu0 0.0
        %1073 = vmatpush1.msra.mxu0 0.0
        %1074 = vmatprep.subr.mxu0 0.0
        %1075 = vmatpush1.msra.mxu0 0.0
        %1076 = vmatprep.subr.mxu0 0.0
        %1077 = vmatpush1.msra.mxu0 0.0
        %1078 = vmatprep.subr.mxu0 0.0
        %1079 = vmatpush1.msra.mxu0 0.0
        %1080 = vmatprep.subr.mxu0 0.0
        %1081 = vmatpush1.msra.mxu0 0.0
        %1082 = vmatprep.subr.mxu0 0.0
        %1083 = vmatpush1.msra.mxu0 0.0
        %1084 = vmatprep.subr.mxu0 0.0
        %1085 = vmatpush1.msra.mxu0 0.0
        %1086 = vmatprep.subr.mxu0 0.0
        %1087 = vmatpush1.msra.mxu0 0.0
        %1088 = vmatprep.subr.mxu0 0.0
        %1089 = vmatpush1.msra.mxu0 0.0
        %1090 = vmatprep.subr.mxu0 0.0
        %1091 = vmatpush1.msra.mxu0 0.0
        %1092 = vmatprep.subr.mxu0 0.0
        %1093 = vmatpush1.msra.mxu0 0.0
        %1094 = vmatprep.subr.mxu0 0.0
        %1095 = vmatpush1.msra.mxu0 0.0
        %1096 = vmatprep.subr.mxu0 0.0
        %1097 = vmatpush1.msra.mxu0 0.0
        %1098 = vmatprep.subr.mxu0 0.0
        %1099 = vmatpush1.msra.mxu0 0.0
        %1100 = vmatprep.subr.mxu0 0.0
        %1101 = vmatpush1.msra.mxu0 0.0
        %1102 = vmatprep.mubr.f32.mxu0 0.0
        %1103 = vmatmul.mubr.f32.gmra.mrb[0].mxu0 %v362
        %v1104 = vpop.f32.mrb[0].mxu0
        %v1105 = vadd.f32 0.0, %v1104
        %v1106 = vpop.f32.mrb[0].mxu0
        %1107 = vmatprep.mubr.f32.mxu0 0.0
        %1108 = vmatmul.mubr.f32.gmra.mrb[0].mxu0 %v367
        %v1109 = vpop.f32.mrb[0].mxu0
        %v1110 = vadd.f32 0.0, %v1109
        %v1111 = vpop.f32.mrb[0].mxu0
        %1112 = vmatprep.mubr.f32.mxu0 0.0
        %1113 = vmatmul.mubr.f32.gmra.mrb[0].mxu0 %v372
        %v1114 = vpop.f32.mrb[0].mxu0
        %v1115 = vadd.f32 0.0, %v1114
        %v1116 = vpop.f32.mrb[0].mxu0
        %1117 = vmatprep.mubr.f32.mxu0 0.0
        %1118 = vmatmul.mubr.f32.gmra.mrb[0].mxu0 %v377
        %v1119 = vpop.f32.mrb[0].mxu0
        %v1120 = vadd.f32 0.0, %v1119
        %v1121 = vpop.f32.mrb[0].mxu0
        %1122 = vmatprep.mubr.f32.mxu0 0.0
        %1123 = vmatmul.mubr.f32.gmra.mrb[0].mxu0 %v382
        %v1124 = vpop.f32.mrb[0].mxu0
        %v1125 = vadd.f32 0.0, %v1124
        %v1126 = vpop.f32.mrb[0].mxu0
        %1127 = vmatprep.mubr.f32.mxu0 0.0
        %1128 = vmatmul.mubr.f32.gmra.mrb[0].mxu0 %v387
        %v1129 = vpop.f32.mrb[0].mxu0
        %v1130 = vadd.f32 0.0, %v1129
        %v1131 = vpop.f32.mrb[0].mxu0
        %1132 = vmatprep.mubr.f32.mxu0 0.0
        %1133 = vmatmul.mubr.f32.gmra.mrb[0].mxu0 %v392
        %v1134 = vpop.f32.mrb[0].mxu0
        %v1135 = vadd.f32 0.0, %v1134
        %v1136 = vpop.f32.mrb[0].mxu0
        %1137 = vmatprep.mubr.f32.mxu0 0.0
        %1138 = vmatmul.mubr.f32.gmra.mrb[0].mxu0 %v397
        %v1139 = vpop.f32.mrb[0].mxu0
        %v1140 = vadd.f32 0.0, %v1139
        %v1141 = vpop.f32.mrb[0].mxu0
        %1142 = vmatprep.mubr.f32.mxu0 0.0
        %1143 = vmatmul.mubr.f32.gmra.mrb[0].mxu0 %v402
        %v1144 = vpop.f32.mrb[0].mxu0
        %v1145 = vadd.f32 0.0, %v1144
        %v1146 = vpop.f32.mrb[0].mxu0
        %1147 = vmatprep.mubr.f32.mxu0 0.0
        %1148 = vmatmul.mubr.f32.gmra.mrb[0].mxu0 %v407
        %v1149 = vpop.f32.mrb[0].mxu0
        %v1150 = vadd.f32 0.0, %v1149
        %v1151 = vpop.f32.mrb[0].mxu0
        %1152 = vmatprep.mubr.f32.mxu0 0.0
        %1153 = vmatmul.mubr.f32.gmra.mrb[0].mxu0 %v412
        %v1154 = vpop.f32.mrb[0].mxu0
        %v1155 = vadd.f32 0.0, %v1154
        %v1156 = vpop.f32.mrb[0].mxu0
        %1157 = vmatprep.mubr.f32.mxu0 0.0
        %1158 = vmatmul.mubr.f32.gmra.mrb[0].mxu0 %v417
        %v1159 = vpop.f32.mrb[0].mxu0
        %v1160 = vadd.f32 0.0, %v1159
        %v1161 = vpop.f32.mrb[0].mxu0
        %1162 = vmatprep.mubr.f32.mxu0 0.0
        %1163 = vmatmul.mubr.f32.gmra.mrb[0].mxu0 %v422
        %v1164 = vpop.f32.mrb[0].mxu0
        %v1165 = vadd.f32 0.0, %v1164
        %v1166 = vpop.f32.mrb[0].mxu0
        %1167 = vmatprep.mubr.f32.mxu0 0.0
        %1168 = vmatmul.mubr.f32.gmra.mrb[0].mxu0 %v427
        %v1169 = vpop.f32.mrb[0].mxu0
        %v1170 = vadd.f32 0.0, %v1169
        %v1171 = vpop.f32.mrb[0].mxu0
        %1172 = vmatprep.mubr.f32.mxu0 0.0
        %1173 = vmatmul.mubr.f32.gmra.mrb[0].mxu0 %v432
        %v1174 = vpop.f32.mrb[0].mxu0
        %v1175 = vadd.f32 0.0, %v1174
        %v1176 = vpop.f32.mrb[0].mxu0
        %1177 = vmatprep.mubr.f32.mxu0 0.0
        %1178 = vmatmul.mubr.f32.gmra.mrb[0].mxu0 %v437
        %v1179 = vpop.f32.mrb[0].mxu0
        %v1180 = vadd.f32 0.0, %v1179
        %v1181 = vpop.f32.mrb[0].mxu0
        %1182 = vdwg.mxu0
        %1183 = vmatprep.subr.mxu0 0.0
        %1184 = vmatpush1.msra.mxu0 %v1105
        %1185 = vmatprep.subr.mxu0 0.0
        %1186 = vmatpush1.msra.mxu0 %v1110
        %1187 = vmatprep.subr.mxu0 0.0
        %1188 = vmatpush1.msra.mxu0 %v1115
        %1189 = vmatprep.subr.mxu0 0.0
        %1190 = vmatpush1.msra.mxu0 %v1120
        %1191 = vmatprep.subr.mxu0 0.0
        %1192 = vmatpush1.msra.mxu0 %v1125
        %1193 = vmatprep.subr.mxu0 0.0
        %1194 = vmatpush1.msra.mxu0 %v1130
        %1195 = vmatprep.subr.mxu0 0.0
        %1196 = vmatpush1.msra.mxu0 %v1135
        %1197 = vmatprep.subr.mxu0 0.0
        %1198 = vmatpush1.msra.mxu0 %v1140
        %1199 = vmatprep.subr.mxu0 0.0
        %1200 = vmatpush1.msra.mxu0 %v1145
        %1201 = vmatprep.subr.mxu0 0.0
        %1202 = vmatpush1.msra.mxu0 %v1150
        %1203 = vmatprep.subr.mxu0 0.0
        %1204 = vmatpush1.msra.mxu0 %v1155
        %1205 = vmatprep.subr.mxu0 0.0
        %1206 = vmatpush1.msra.mxu0 %v1160
        %1207 = vmatprep.subr.mxu0 0.0
        %1208 = vmatpush1.msra.mxu0 %v1165
        %1209 = vmatprep.subr.mxu0 0.0
        %1210 = vmatpush1.msra.mxu0 %v1170
        %1211 = vmatprep.subr.mxu0 0.0
        %1212 = vmatpush1.msra.mxu0 %v1175
        %1213 = vmatprep.subr.mxu0 0.0
        %1214 = vmatpush1.msra.mxu0 %v1180
        %1215 = vmatprep.subr.mxu0 0.0
        %1216 = vmatpush1.msra.mxu0 0.0
        %1217 = vmatprep.subr.mxu0 0.0
        %1218 = vmatpush1.msra.mxu0 0.0
        %1219 = vmatprep.subr.mxu0 0.0
        %1220 = vmatpush1.msra.mxu0 0.0
        %1221 = vmatprep.subr.mxu0 0.0
        %1222 = vmatpush1.msra.mxu0 0.0
        %1223 = vmatprep.subr.mxu0 0.0
        %1224 = vmatpush1.msra.mxu0 0.0
        %1225 = vmatprep.subr.mxu0 0.0
        %1226 = vmatpush1.msra.mxu0 0.0
        %1227 = vmatprep.subr.mxu0 0.0
        %1228 = vmatpush1.msra.mxu0 0.0
        %1229 = vmatprep.subr.mxu0 0.0
        %1230 = vmatpush1.msra.mxu0 0.0
        %1231 = vmatprep.subr.mxu0 0.0
        %1232 = vmatpush1.msra.mxu0 0.0
        %1233 = vmatprep.subr.mxu0 0.0
        %1234 = vmatpush1.msra.mxu0 0.0
        %1235 = vmatprep.subr.mxu0 0.0
        %1236 = vmatpush1.msra.mxu0 0.0
        %1237 = vmatprep.subr.mxu0 0.0
        %1238 = vmatpush1.msra.mxu0 0.0
        %1239 = vmatprep.subr.mxu0 0.0
        %1240 = vmatpush1.msra.mxu0 0.0
        %1241 = vmatprep.subr.mxu0 0.0
        %1242 = vmatpush1.msra.mxu0 0.0
        %1243 = vmatprep.subr.mxu0 0.0
        %1244 = vmatpush1.msra.mxu0 0.0
        %1245 = vmatprep.subr.mxu0 0.0
        %1246 = vmatpush1.msra.mxu0 0.0
        %1247 = vmatprep.mubr.f32.mxu0 0.0
        %1248 = vmatmul.mubr.f32.gmra.mrb[0].mxu0 %v507
        %v1249 = vpop.f32.mrb[0].mxu0
        %v1250 = vadd.f32 0.0, %v1249
        %v1251 = vpop.f32.mrb[0].mxu0
        %1252 = vmatprep.mubr.f32.mxu0 0.0
        %1253 = vmatmul.mubr.f32.gmra.mrb[0].mxu0 %v512
        %v1254 = vpop.f32.mrb[0].mxu0
        %v1255 = vadd.f32 0.0, %v1254
        %v1256 = vpop.f32.mrb[0].mxu0
        %1257 = vmatprep.mubr.f32.mxu0 0.0
        %1258 = vmatmul.mubr.f32.gmra.mrb[0].mxu0 %v517
        %v1259 = vpop.f32.mrb[0].mxu0
        %v1260 = vadd.f32 0.0, %v1259
        %v1261 = vpop.f32.mrb[0].mxu0
        %1262 = vmatprep.mubr.f32.mxu0 0.0
        %1263 = vmatmul.mubr.f32.gmra.mrb[0].mxu0 %v522
        %v1264 = vpop.f32.mrb[0].mxu0
        %v1265 = vadd.f32 0.0, %v1264
        %v1266 = vpop.f32.mrb[0].mxu0
        %1267 = vmatprep.mubr.f32.mxu0 0.0
        %1268 = vmatmul.mubr.f32.gmra.mrb[0].mxu0 %v527
        %v1269 = vpop.f32.mrb[0].mxu0
        %v1270 = vadd.f32 0.0, %v1269
        %v1271 = vpop.f32.mrb[0].mxu0
        %1272 = vmatprep.mubr.f32.mxu0 0.0
        %1273 = vmatmul.mubr.f32.gmra.mrb[0].mxu0 %v532
        %v1274 = vpop.f32.mrb[0].mxu0
        %v1275 = vadd.f32 0.0, %v1274
        %v1276 = vpop.f32.mrb[0].mxu0
        %1277 = vmatprep.mubr.f32.mxu0 0.0
        %1278 = vmatmul.mubr.f32.gmra.mrb[0].mxu0 %v537
        %v1279 = vpop.f32.mrb[0].mxu0
        %v1280 = vadd.f32 0.0, %v1279
        %v1281 = vpop.f32.mrb[0].mxu0
        %1282 = vmatprep.mubr.f32.mxu0 0.0
        %1283 = vmatmul.mubr.f32.gmra.mrb[0].mxu0 %v542
        %v1284 = vpop.f32.mrb[0].mxu0
        %v1285 = vadd.f32 0.0, %v1284
        %v1286 = vpop.f32.mrb[0].mxu0
        %1287 = vmatprep.mubr.f32.mxu0 0.0
        %1288 = vmatmul.mubr.f32.gmra.mrb[0].mxu0 %v547
        %v1289 = vpop.f32.mrb[0].mxu0
        %v1290 = vadd.f32 0.0, %v1289
        %v1291 = vpop.f32.mrb[0].mxu0
        %1292 = vmatprep.mubr.f32.mxu0 0.0
        %1293 = vmatmul.mubr.f32.gmra.mrb[0].mxu0 %v552
        %v1294 = vpop.f32.mrb[0].mxu0
        %v1295 = vadd.f32 0.0, %v1294
        %v1296 = vpop.f32.mrb[0].mxu0
        %1297 = vmatprep.mubr.f32.mxu0 0.0
        %1298 = vmatmul.mubr.f32.gmra.mrb[0].mxu0 %v557
        %v1299 = vpop.f32.mrb[0].mxu0
        %v1300 = vadd.f32 0.0, %v1299
        %v1301 = vpop.f32.mrb[0].mxu0
        %1302 = vmatprep.mubr.f32.mxu0 0.0
        %1303 = vmatmul.mubr.f32.gmra.mrb[0].mxu0 %v562
        %v1304 = vpop.f32.mrb[0].mxu0
        %v1305 = vadd.f32 0.0, %v1304
        %v1306 = vpop.f32.mrb[0].mxu0
        %1307 = vmatprep.mubr.f32.mxu0 0.0
        %1308 = vmatmul.mubr.f32.gmra.mrb[0].mxu0 %v567
        %v1309 = vpop.f32.mrb[0].mxu0
        %v1310 = vadd.f32 0.0, %v1309
        %v1311 = vpop.f32.mrb[0].mxu0
        %1312 = vmatprep.mubr.f32.mxu0 0.0
        %1313 = vmatmul.mubr.f32.gmra.mrb[0].mxu0 %v572
        %v1314 = vpop.f32.mrb[0].mxu0
        %v1315 = vadd.f32 0.0, %v1314
        %v1316 = vpop.f32.mrb[0].mxu0
        %1317 = vmatprep.mubr.f32.mxu0 0.0
        %1318 = vmatmul.mubr.f32.gmra.mrb[0].mxu0 %v577
        %v1319 = vpop.f32.mrb[0].mxu0
        %v1320 = vadd.f32 0.0, %v1319
        %v1321 = vpop.f32.mrb[0].mxu0
        %1322 = vmatprep.mubr.f32.mxu0 0.0
        %1323 = vmatmul.mubr.f32.gmra.mrb[0].mxu0 %v582
        %v1324 = vpop.f32.mrb[0].mxu0
        %v1325 = vadd.f32 0.0, %v1324
        %v1326 = vpop.f32.mrb[0].mxu0
        %1327 = vdwg.mxu0
        %1328 = vmatprep.subr.mxu0 0.0
        %1329 = vmatpush1.msra.mxu0 %v1250
        %1330 = vmatprep.subr.mxu0 0.0
        %1331 = vmatpush1.msra.mxu0 %v1255
        %1332 = vmatprep.subr.mxu0 0.0
        %1333 = vmatpush1.msra.mxu0 %v1260
        %1334 = vmatprep.subr.mxu0 0.0
        %1335 = vmatpush1.msra.mxu0 %v1265
        %1336 = vmatprep.subr.mxu0 0.0
        %1337 = vmatpush1.msra.mxu0 %v1270
        %1338 = vmatprep.subr.mxu0 0.0
        %1339 = vmatpush1.msra.mxu0 %v1275
        %1340 = vmatprep.subr.mxu0 0.0
        %1341 = vmatpush1.msra.mxu0 %v1280
        %1342 = vmatprep.subr.mxu0 0.0
        %1343 = vmatpush1.msra.mxu0 %v1285
        %1344 = vmatprep.subr.mxu0 0.0
        %1345 = vmatpush1.msra.mxu0 %v1290
        %1346 = vmatprep.subr.mxu0 0.0
        %1347 = vmatpush1.msra.mxu0 %v1295
        %1348 = vmatprep.subr.mxu0 0.0
        %1349 = vmatpush1.msra.mxu0 %v1300
        %1350 = vmatprep.subr.mxu0 0.0
        %1351 = vmatpush1.msra.mxu0 %v1305
        %1352 = vmatprep.subr.mxu0 0.0
        %1353 = vmatpush1.msra.mxu0 %v1310
        %1354 = vmatprep.subr.mxu0 0.0
        %1355 = vmatpush1.msra.mxu0 %v1315
        %1356 = vmatprep.subr.mxu0 0.0
        %1357 = vmatpush1.msra.mxu0 %v1320
        %1358 = vmatprep.subr.mxu0 0.0
        %1359 = vmatpush1.msra.mxu0 %v1325
        %1360 = vmatprep.subr.mxu0 0.0
        %1361 = vmatpush1.msra.mxu0 0.0
        %1362 = vmatprep.subr.mxu0 0.0
        %1363 = vmatpush1.msra.mxu0 0.0
        %1364 = vmatprep.subr.mxu0 0.0
        %1365 = vmatpush1.msra.mxu0 0.0
        %1366 = vmatprep.subr.mxu0 0.0
        %1367 = vmatpush1.msra.mxu0 0.0
        %1368 = vmatprep.subr.mxu0 0.0
        %1369 = vmatpush1.msra.mxu0 0.0
        %1370 = vmatprep.subr.mxu0 0.0
        %1371 = vmatpush1.msra.mxu0 0.0
        %1372 = vmatprep.subr.mxu0 0.0
        %1373 = vmatpush1.msra.mxu0 0.0
        %1374 = vmatprep.subr.mxu0 0.0
        %1375 = vmatpush1.msra.mxu0 0.0
        %1376 = vmatprep.subr.mxu0 0.0
        %1377 = vmatpush1.msra.mxu0 0.0
        %1378 = vmatprep.subr.mxu0 0.0
        %1379 = vmatpush1.msra.mxu0 0.0
        %1380 = vmatprep.subr.mxu0 0.0
        %1381 = vmatpush1.msra.mxu0 0.0
        %1382 = vmatprep.subr.mxu0 0.0
        %1383 = vmatpush1.msra.mxu0 0.0
        %1384 = vmatprep.subr.mxu0 0.0
        %1385 = vmatpush1.msra.mxu0 0.0
        %1386 = vmatprep.subr.mxu0 0.0
        %1387 = vmatpush1.msra.mxu0 0.0
        %1388 = vmatprep.subr.mxu0 0.0
        %1389 = vmatpush1.msra.mxu0 0.0
        %1390 = vmatprep.subr.mxu0 0.0
        %1391 = vmatpush1.msra.mxu0 0.0
        %1392 = vmatprep.mubr.f32.mxu0 0.0
        %1393 = vmatmul.mubr.f32.gmra.mrb[0].mxu0 %v652
        %v1394 = vpop.f32.mrb[0].mxu0
        %v1395 = vadd.f32 0.0, %v1394
        %v1396 = vpop.f32.mrb[0].mxu0
        %1397 = vmatprep.mubr.f32.mxu0 0.0
        %1398 = vmatmul.mubr.f32.gmra.mrb[0].mxu0 %v657
        %v1399 = vpop.f32.mrb[0].mxu0
        %v1400 = vadd.f32 0.0, %v1399
        %v1401 = vpop.f32.mrb[0].mxu0
        %1402 = vmatprep.mubr.f32.mxu0 0.0
        %1403 = vmatmul.mubr.f32.gmra.mrb[0].mxu0 %v662
        %v1404 = vpop.f32.mrb[0].mxu0
        %v1405 = vadd.f32 0.0, %v1404
        %v1406 = vpop.f32.mrb[0].mxu0
        %1407 = vmatprep.mubr.f32.mxu0 0.0
        %1408 = vmatmul.mubr.f32.gmra.mrb[0].mxu0 %v667
        %v1409 = vpop.f32.mrb[0].mxu0
        %v1410 = vadd.f32 0.0, %v1409
        %v1411 = vpop.f32.mrb[0].mxu0
        %1412 = vmatprep.mubr.f32.mxu0 0.0
        %1413 = vmatmul.mubr.f32.gmra.mrb[0].mxu0 %v672
        %v1414 = vpop.f32.mrb[0].mxu0
        %v1415 = vadd.f32 0.0, %v1414
        %v1416 = vpop.f32.mrb[0].mxu0
        %1417 = vmatprep.mubr.f32.mxu0 0.0
        %1418 = vmatmul.mubr.f32.gmra.mrb[0].mxu0 %v677
        %v1419 = vpop.f32.mrb[0].mxu0
        %v1420 = vadd.f32 0.0, %v1419
        %v1421 = vpop.f32.mrb[0].mxu0
        %1422 = vmatprep.mubr.f32.mxu0 0.0
        %1423 = vmatmul.mubr.f32.gmra.mrb[0].mxu0 %v682
        %v1424 = vpop.f32.mrb[0].mxu0
        %v1425 = vadd.f32 0.0, %v1424
        %v1426 = vpop.f32.mrb[0].mxu0
        %1427 = vmatprep.mubr.f32.mxu0 0.0
        %1428 = vmatmul.mubr.f32.gmra.mrb[0].mxu0 %v687
        %v1429 = vpop.f32.mrb[0].mxu0
        %v1430 = vadd.f32 0.0, %v1429
        %v1431 = vpop.f32.mrb[0].mxu0
        %1432 = vmatprep.mubr.f32.mxu0 0.0
        %1433 = vmatmul.mubr.f32.gmra.mrb[0].mxu0 %v692
        %v1434 = vpop.f32.mrb[0].mxu0
        %v1435 = vadd.f32 0.0, %v1434
        %v1436 = vpop.f32.mrb[0].mxu0
        %1437 = vmatprep.mubr.f32.mxu0 0.0
        %1438 = vmatmul.mubr.f32.gmra.mrb[0].mxu0 %v697
        %v1439 = vpop.f32.mrb[0].mxu0
        %v1440 = vadd.f32 0.0, %v1439
        %v1441 = vpop.f32.mrb[0].mxu0
        %1442 = vmatprep.mubr.f32.mxu0 0.0
        %1443 = vmatmul.mubr.f32.gmra.mrb[0].mxu0 %v702
        %v1444 = vpop.f32.mrb[0].mxu0
        %v1445 = vadd.f32 0.0, %v1444
        %v1446 = vpop.f32.mrb[0].mxu0
        %1447 = vmatprep.mubr.f32.mxu0 0.0
        %1448 = vmatmul.mubr.f32.gmra.mrb[0].mxu0 %v707
        %v1449 = vpop.f32.mrb[0].mxu0
        %v1450 = vadd.f32 0.0, %v1449
        %v1451 = vpop.f32.mrb[0].mxu0
        %1452 = vmatprep.mubr.f32.mxu0 0.0
        %1453 = vmatmul.mubr.f32.gmra.mrb[0].mxu0 %v712
        %v1454 = vpop.f32.mrb[0].mxu0
        %v1455 = vadd.f32 0.0, %v1454
        %v1456 = vpop.f32.mrb[0].mxu0
        %1457 = vmatprep.mubr.f32.mxu0 0.0
        %1458 = vmatmul.mubr.f32.gmra.mrb[0].mxu0 %v717
        %v1459 = vpop.f32.mrb[0].mxu0
        %v1460 = vadd.f32 0.0, %v1459
        %v1461 = vpop.f32.mrb[0].mxu0
        %1462 = vmatprep.mubr.f32.mxu0 0.0
        %1463 = vmatmul.mubr.f32.gmra.mrb[0].mxu0 %v722
        %v1464 = vpop.f32.mrb[0].mxu0
        %v1465 = vadd.f32 0.0, %v1464
        %v1466 = vpop.f32.mrb[0].mxu0
        %1467 = vmatprep.mubr.f32.mxu0 0.0
        %1468 = vmatmul.mubr.f32.gmra.mrb[0].mxu0 %v727
        %v1469 = vpop.f32.mrb[0].mxu0
        %v1470 = vadd.f32 0.0, %v1469
        %v1471 = vpop.f32.mrb[0].mxu0
        %1472 = vdwg.mxu0
        %s1473 = sld [smem:[#allocation6 + $0x2]]
        %v1474 = vstv %s1473
        %v1475 = vmul.f32 %v1474, %v960
        %v1476 = vmul.f32 %v1474, %v965
        %v1477 = vmul.f32 %v1474, %v970
        %v1478 = vmul.f32 %v1474, %v975
        %v1479 = vmul.f32 %v1474, %v980
        %v1480 = vmul.f32 %v1474, %v985
        %v1481 = vmul.f32 %v1474, %v990
        %v1482 = vmul.f32 %v1474, %v995
        %v1483 = vmul.f32 %v1474, %v1000
        %v1484 = vmul.f32 %v1474, %v1005
        %v1485 = vmul.f32 %v1474, %v1010
        %v1486 = vmul.f32 %v1474, %v1015
        %v1487 = vmul.f32 %v1474, %v1020
        %v1488 = vmul.f32 %v1474, %v1025
        %v1489 = vmul.f32 %v1474, %v1030
        %v1490 = vmul.f32 %v1474, %v1035
        %s1491 = sld [smem:[#allocation6 + $0x1]]
        %v1492 = vstv %s1491
        %v1493 = vmul.f32 %v1492, %v815
        %v1494 = vmul.f32 %v1492, %v820
        %v1495 = vmul.f32 %v1492, %v825
        %v1496 = vmul.f32 %v1492, %v830
        %v1497 = vmul.f32 %v1492, %v835
        %v1498 = vmul.f32 %v1492, %v840
        %v1499 = vmul.f32 %v1492, %v845
        %v1500 = vmul.f32 %v1492, %v850
        %v1501 = vmul.f32 %v1492, %v855
        %v1502 = vmul.f32 %v1492, %v860
        %v1503 = vmul.f32 %v1492, %v865
        %v1504 = vmul.f32 %v1492, %v870
        %v1505 = vmul.f32 %v1492, %v875
        %v1506 = vmul.f32 %v1492, %v880
        %v1507 = vmul.f32 %v1492, %v885
        %v1508 = vmul.f32 %v1492, %v890
        %v1509 = vadd.f32 %v1475, %v1493
        %v1510 = vadd.f32 %v1476, %v1494
        %v1511 = vadd.f32 %v1477, %v1495
        %v1512 = vadd.f32 %v1478, %v1496
        %v1513 = vadd.f32 %v1479, %v1497
        %v1514 = vadd.f32 %v1480, %v1498
        %v1515 = vadd.f32 %v1481, %v1499
        %v1516 = vadd.f32 %v1482, %v1500
        %v1517 = vadd.f32 %v1483, %v1501
        %v1518 = vadd.f32 %v1484, %v1502
        %v1519 = vadd.f32 %v1485, %v1503
        %v1520 = vadd.f32 %v1486, %v1504
        %v1521 = vadd.f32 %v1487, %v1505
        %v1522 = vadd.f32 %v1488, %v1506
        %v1523 = vadd.f32 %v1489, %v1507
        %v1524 = vadd.f32 %v1490, %v1508
        %v1525 = vand.u32 2147483647, %v1509
        %v1526 = vand.u32 2147483647, %v1510
        %v1527 = vand.u32 2147483647, %v1511
        %v1528 = vand.u32 2147483647, %v1512
        %v1529 = vand.u32 2147483647, %v1513
        %v1530 = vand.u32 2147483647, %v1514
        %v1531 = vand.u32 2147483647, %v1515
        %v1532 = vand.u32 2147483647, %v1516
        %v1533 = vand.u32 2147483647, %v1517
        %v1534 = vand.u32 2147483647, %v1518
        %v1535 = vand.u32 2147483647, %v1519
        %v1536 = vand.u32 2147483647, %v1520
        %v1537 = vand.u32 2147483647, %v1521
        %v1538 = vand.u32 2147483647, %v1522
        %v1539 = vand.u32 2147483647, %v1523
        %v1540 = vand.u32 2147483647, %v1524
        %s1541 = sld [smem:[#allocation6 + $0x84]]
        %v1542 = vstv %s1541
        %v1543 = vmul.f32 %v1542, %v1105
        %v1544 = vmul.f32 %v1542, %v1110
        %v1545 = vmul.f32 %v1542, %v1115
        %v1546 = vmul.f32 %v1542, %v1120
        %v1547 = vmul.f32 %v1542, %v1125
        %v1548 = vmul.f32 %v1542, %v1130
        %v1549 = vmul.f32 %v1542, %v1135
        %v1550 = vmul.f32 %v1542, %v1140
        %v1551 = vmul.f32 %v1542, %v1145
        %v1552 = vmul.f32 %v1542, %v1150
        %v1553 = vmul.f32 %v1542, %v1155
        %v1554 = vmul.f32 %v1542, %v1160
        %v1555 = vmul.f32 %v1542, %v1165
        %v1556 = vmul.f32 %v1542, %v1170
        %v1557 = vmul.f32 %v1542, %v1175
        %v1558 = vmul.f32 %v1542, %v1180
        %s1559 = sld [smem:[#allocation6 + $0x82]]
        %v1560 = vstv %s1559
        %v1561 = vmul.f32 %v1560, %v960
        %v1562 = vmul.f32 %v1560, %v965
        %v1563 = vmul.f32 %v1560, %v970
        %v1564 = vmul.f32 %v1560, %v975
        %v1565 = vmul.f32 %v1560, %v980
        %v1566 = vmul.f32 %v1560, %v985
        %v1567 = vmul.f32 %v1560, %v990
        %v1568 = vmul.f32 %v1560, %v995
        %v1569 = vmul.f32 %v1560, %v1000
        %v1570 = vmul.f32 %v1560, %v1005
        %v1571 = vmul.f32 %v1560, %v1010
        %v1572 = vmul.f32 %v1560, %v1015
        %v1573 = vmul.f32 %v1560, %v1020
        %v1574 = vmul.f32 %v1560, %v1025
        %v1575 = vmul.f32 %v1560, %v1030
        %v1576 = vmul.f32 %v1560, %v1035
        %v1577 = vadd.f32 %v1543, %v1561
        %v1578 = vadd.f32 %v1544, %v1562
        %v1579 = vadd.f32 %v1545, %v1563
        %v1580 = vadd.f32 %v1546, %v1564
        %v1581 = vadd.f32 %v1547, %v1565
        %v1582 = vadd.f32 %v1548, %v1566
        %v1583 = vadd.f32 %v1549, %v1567
        %v1584 = vadd.f32 %v1550, %v1568
        %v1585 = vadd.f32 %v1551, %v1569
        %v1586 = vadd.f32 %v1552, %v1570
        %v1587 = vadd.f32 %v1553, %v1571
        %v1588 = vadd.f32 %v1554, %v1572
        %v1589 = vadd.f32 %v1555, %v1573
        %v1590 = vadd.f32 %v1556, %v1574
        %v1591 = vadd.f32 %v1557, %v1575
        %v1592 = vadd.f32 %v1558, %v1576
        %v1593 = vand.u32 2147483647, %v1577
        %v1594 = vand.u32 2147483647, %v1578
        %v1595 = vand.u32 2147483647, %v1579
        %v1596 = vand.u32 2147483647, %v1580
        %v1597 = vand.u32 2147483647, %v1581
        %v1598 = vand.u32 2147483647, %v1582
        %v1599 = vand.u32 2147483647, %v1583
        %v1600 = vand.u32 2147483647, %v1584
        %v1601 = vand.u32 2147483647, %v1585
        %v1602 = vand.u32 2147483647, %v1586
        %v1603 = vand.u32 2147483647, %v1587
        %v1604 = vand.u32 2147483647, %v1588
        %v1605 = vand.u32 2147483647, %v1589
        %v1606 = vand.u32 2147483647, %v1590
        %v1607 = vand.u32 2147483647, %v1591
        %v1608 = vand.u32 2147483647, %v1592
        %1609 = vrot.lane.b32.xlu0 %v1593, 4
        %v1610 = vpop.permute.xlu0 %1609
        %1611 = vrot.lane.b32.xlu0 %v1594, 4
        %v1612 = vpop.permute.xlu0 %1611
        %1613 = vrot.lane.b32.xlu0 %v1595, 4
        %v1614 = vpop.permute.xlu0 %1613
        %1615 = vrot.lane.b32.xlu0 %v1596, 4
        %v1616 = vpop.permute.xlu0 %1615
        %1617 = vrot.lane.b32.xlu0 %v1597, 4
        %v1618 = vpop.permute.xlu0 %1617
        %1619 = vrot.lane.b32.xlu0 %v1598, 4
        %v1620 = vpop.permute.xlu0 %1619
        %1621 = vrot.lane.b32.xlu0 %v1599, 4
        %v1622 = vpop.permute.xlu0 %1621
        %1623 = vrot.lane.b32.xlu0 %v1600, 4
        %v1624 = vpop.permute.xlu0 %1623
        %1625 = vrot.lane.b32.xlu0 %v1601, 4
        %v1626 = vpop.permute.xlu0 %1625
        %1627 = vrot.lane.b32.xlu0 %v1602, 4
        %v1628 = vpop.permute.xlu0 %1627
        %1629 = vrot.lane.b32.xlu0 %v1603, 4
        %v1630 = vpop.permute.xlu0 %1629
        %1631 = vrot.lane.b32.xlu0 %v1604, 4
        %v1632 = vpop.permute.xlu0 %1631
        %1633 = vrot.lane.b32.xlu0 %v1605, 4
        %v1634 = vpop.permute.xlu0 %1633
        %1635 = vrot.lane.b32.xlu0 %v1606, 4
        %v1636 = vpop.permute.xlu0 %1635
        %1637 = vrot.lane.b32.xlu0 %v1607, 4
        %v1638 = vpop.permute.xlu0 %1637
        %1639 = vrot.lane.b32.xlu0 %v1608, 4
        %v1640 = vpop.permute.xlu0 %1639
        %v1641 = vadd.f32 %v1525, %v1610
        %v1642 = vadd.f32 %v1526, %v1612
        %v1643 = vadd.f32 %v1527, %v1614
        %v1644 = vadd.f32 %v1528, %v1616
        %v1645 = vadd.f32 %v1529, %v1618
        %v1646 = vadd.f32 %v1530, %v1620
        %v1647 = vadd.f32 %v1531, %v1622
        %v1648 = vadd.f32 %v1532, %v1624
        %v1649 = vadd.f32 %v1533, %v1626
        %v1650 = vadd.f32 %v1534, %v1628
        %v1651 = vadd.f32 %v1535, %v1630
        %v1652 = vadd.f32 %v1536, %v1632
        %v1653 = vadd.f32 %v1537, %v1634
        %v1654 = vadd.f32 %v1538, %v1636
        %v1655 = vadd.f32 %v1539, %v1638
        %v1656 = vadd.f32 %v1540, %v1640
        %s1657 = sld [smem:[#allocation6 + $0x108]]
        %v1658 = vstv %s1657
        %v1659 = vmul.f32 %v1658, %v1250
        %v1660 = vmul.f32 %v1658, %v1255
        %v1661 = vmul.f32 %v1658, %v1260
        %v1662 = vmul.f32 %v1658, %v1265
        %v1663 = vmul.f32 %v1658, %v1270
        %v1664 = vmul.f32 %v1658, %v1275
        %v1665 = vmul.f32 %v1658, %v1280
        %v1666 = vmul.f32 %v1658, %v1285
        %v1667 = vmul.f32 %v1658, %v1290
        %v1668 = vmul.f32 %v1658, %v1295
        %v1669 = vmul.f32 %v1658, %v1300
        %v1670 = vmul.f32 %v1658, %v1305
        %v1671 = vmul.f32 %v1658, %v1310
        %v1672 = vmul.f32 %v1658, %v1315
        %v1673 = vmul.f32 %v1658, %v1320
        %v1674 = vmul.f32 %v1658, %v1325
        %s1675 = sld [smem:[#allocation6 + $0x104]]
        %v1676 = vstv %s1675
        %v1677 = vmul.f32 %v1676, %v1105
        %v1678 = vmul.f32 %v1676, %v1110
        %v1679 = vmul.f32 %v1676, %v1115
        %v1680 = vmul.f32 %v1676, %v1120
        %v1681 = vmul.f32 %v1676, %v1125
        %v1682 = vmul.f32 %v1676, %v1130
        %v1683 = vmul.f32 %v1676, %v1135
        %v1684 = vmul.f32 %v1676, %v1140
        %v1685 = vmul.f32 %v1676, %v1145
        %v1686 = vmul.f32 %v1676, %v1150
        %v1687 = vmul.f32 %v1676, %v1155
        %v1688 = vmul.f32 %v1676, %v1160
        %v1689 = vmul.f32 %v1676, %v1165
        %v1690 = vmul.f32 %v1676, %v1170
        %v1691 = vmul.f32 %v1676, %v1175
        %v1692 = vmul.f32 %v1676, %v1180
        %v1693 = vadd.f32 %v1659, %v1677
        %v1694 = vadd.f32 %v1660, %v1678
        %v1695 = vadd.f32 %v1661, %v1679
        %v1696 = vadd.f32 %v1662, %v1680
        %v1697 = vadd.f32 %v1663, %v1681
        %v1698 = vadd.f32 %v1664, %v1682
        %v1699 = vadd.f32 %v1665, %v1683
        %v1700 = vadd.f32 %v1666, %v1684
        %v1701 = vadd.f32 %v1667, %v1685
        %v1702 = vadd.f32 %v1668, %v1686
        %v1703 = vadd.f32 %v1669, %v1687
        %v1704 = vadd.f32 %v1670, %v1688
        %v1705 = vadd.f32 %v1671, %v1689
        %v1706 = vadd.f32 %v1672, %v1690
        %v1707 = vadd.f32 %v1673, %v1691
        %v1708 = vadd.f32 %v1674, %v1692
        %v1709 = vand.u32 2147483647, %v1693
        %v1710 = vand.u32 2147483647, %v1694
        %v1711 = vand.u32 2147483647, %v1695
        %v1712 = vand.u32 2147483647, %v1696
        %v1713 = vand.u32 2147483647, %v1697
        %v1714 = vand.u32 2147483647, %v1698
        %v1715 = vand.u32 2147483647, %v1699
        %v1716 = vand.u32 2147483647, %v1700
        %v1717 = vand.u32 2147483647, %v1701
        %v1718 = vand.u32 2147483647, %v1702
        %v1719 = vand.u32 2147483647, %v1703
        %v1720 = vand.u32 2147483647, %v1704
        %v1721 = vand.u32 2147483647, %v1705
        %v1722 = vand.u32 2147483647, %v1706
        %v1723 = vand.u32 2147483647, %v1707
        %v1724 = vand.u32 2147483647, %v1708
        %1725 = vrot.lane.b32.xlu0 %v1709, 8
        %v1726 = vpop.permute.xlu0 %1725
        %1727 = vrot.lane.b32.xlu0 %v1710, 8
        %v1728 = vpop.permute.xlu0 %1727
        %1729 = vrot.lane.b32.xlu0 %v1711, 8
        %v1730 = vpop.permute.xlu0 %1729
        %1731 = vrot.lane.b32.xlu0 %v1712, 8
        %v1732 = vpop.permute.xlu0 %1731
        %1733 = vrot.lane.b32.xlu0 %v1713, 8
        %v1734 = vpop.permute.xlu0 %1733
        %1735 = vrot.lane.b32.xlu0 %v1714, 8
        %v1736 = vpop.permute.xlu0 %1735
        %1737 = vrot.lane.b32.xlu0 %v1715, 8
        %v1738 = vpop.permute.xlu0 %1737
        %1739 = vrot.lane.b32.xlu0 %v1716, 8
        %v1740 = vpop.permute.xlu0 %1739
        %1741 = vrot.lane.b32.xlu0 %v1717, 8
        %v1742 = vpop.permute.xlu0 %1741
        %1743 = vrot.lane.b32.xlu0 %v1718, 8
        %v1744 = vpop.permute.xlu0 %1743
        %1745 = vrot.lane.b32.xlu0 %v1719, 8
        %v1746 = vpop.permute.xlu0 %1745
        %1747 = vrot.lane.b32.xlu0 %v1720, 8
        %v1748 = vpop.permute.xlu0 %1747
        %1749 = vrot.lane.b32.xlu0 %v1721, 8
        %v1750 = vpop.permute.xlu0 %1749
        %1751 = vrot.lane.b32.xlu0 %v1722, 8
        %v1752 = vpop.permute.xlu0 %1751
        %1753 = vrot.lane.b32.xlu0 %v1723, 8
        %v1754 = vpop.permute.xlu0 %1753
        %1755 = vrot.lane.b32.xlu0 %v1724, 8
        %v1756 = vpop.permute.xlu0 %1755
        %v1757 = vadd.f32 %v1641, %v1726
        %v1758 = vadd.f32 %v1642, %v1728
        %v1759 = vadd.f32 %v1643, %v1730
        %v1760 = vadd.f32 %v1644, %v1732
        %v1761 = vadd.f32 %v1645, %v1734
        %v1762 = vadd.f32 %v1646, %v1736
        %v1763 = vadd.f32 %v1647, %v1738
        %v1764 = vadd.f32 %v1648, %v1740
        %v1765 = vadd.f32 %v1649, %v1742
        %v1766 = vadd.f32 %v1650, %v1744
        %v1767 = vadd.f32 %v1651, %v1746
        %v1768 = vadd.f32 %v1652, %v1748
        %v1769 = vadd.f32 %v1653, %v1750
        %v1770 = vadd.f32 %v1654, %v1752
        %v1771 = vadd.f32 %v1655, %v1754
        %v1772 = vadd.f32 %v1656, %v1756
        %s1773 = sld [smem:[#allocation6 + $0x190]]
        %v1774 = vstv %s1773
        %v1775 = vmul.f32 %v1774, %v1395
        %v1776 = vmul.f32 %v1774, %v1400
        %v1777 = vmul.f32 %v1774, %v1405
        %v1778 = vmul.f32 %v1774, %v1410
        %v1779 = vmul.f32 %v1774, %v1415
        %v1780 = vmul.f32 %v1774, %v1420
        %v1781 = vmul.f32 %v1774, %v1425
        %v1782 = vmul.f32 %v1774, %v1430
        %v1783 = vmul.f32 %v1774, %v1435
        %v1784 = vmul.f32 %v1774, %v1440
        %v1785 = vmul.f32 %v1774, %v1445
        %v1786 = vmul.f32 %v1774, %v1450
        %v1787 = vmul.f32 %v1774, %v1455
        %v1788 = vmul.f32 %v1774, %v1460
        %v1789 = vmul.f32 %v1774, %v1465
        %v1790 = vmul.f32 %v1774, %v1470
        %s1791 = sld [smem:[#allocation6 + $0x188]]
        %v1792 = vstv %s1791
        %v1793 = vmul.f32 %v1792, %v1250
        %v1794 = vmul.f32 %v1792, %v1255
        %v1795 = vmul.f32 %v1792, %v1260
        %v1796 = vmul.f32 %v1792, %v1265
        %v1797 = vmul.f32 %v1792, %v1270
        %v1798 = vmul.f32 %v1792, %v1275
        %v1799 = vmul.f32 %v1792, %v1280
        %v1800 = vmul.f32 %v1792, %v1285
        %v1801 = vmul.f32 %v1792, %v1290
        %v1802 = vmul.f32 %v1792, %v1295
        %v1803 = vmul.f32 %v1792, %v1300
        %v1804 = vmul.f32 %v1792, %v1305
        %v1805 = vmul.f32 %v1792, %v1310
        %v1806 = vmul.f32 %v1792, %v1315
        %v1807 = vmul.f32 %v1792, %v1320
        %v1808 = vmul.f32 %v1792, %v1325
        %v1809 = vadd.f32 %v1775, %v1793
        %v1810 = vadd.f32 %v1776, %v1794
        %v1811 = vadd.f32 %v1777, %v1795
        %v1812 = vadd.f32 %v1778, %v1796
        %v1813 = vadd.f32 %v1779, %v1797
        %v1814 = vadd.f32 %v1780, %v1798
        %v1815 = vadd.f32 %v1781, %v1799
        %v1816 = vadd.f32 %v1782, %v1800
        %v1817 = vadd.f32 %v1783, %v1801
        %v1818 = vadd.f32 %v1784, %v1802
        %v1819 = vadd.f32 %v1785, %v1803
        %v1820 = vadd.f32 %v1786, %v1804
        %v1821 = vadd.f32 %v1787, %v1805
        %v1822 = vadd.f32 %v1788, %v1806
        %v1823 = vadd.f32 %v1789, %v1807
        %v1824 = vadd.f32 %v1790, %v1808
        %v1825 = vand.u32 2147483647, %v1809
        %v1826 = vand.u32 2147483647, %v1810
        %v1827 = vand.u32 2147483647, %v1811
        %v1828 = vand.u32 2147483647, %v1812
        %v1829 = vand.u32 2147483647, %v1813
        %v1830 = vand.u32 2147483647, %v1814
        %v1831 = vand.u32 2147483647, %v1815
        %v1832 = vand.u32 2147483647, %v1816
        %v1833 = vand.u32 2147483647, %v1817
        %v1834 = vand.u32 2147483647, %v1818
        %v1835 = vand.u32 2147483647, %v1819
        %v1836 = vand.u32 2147483647, %v1820
        %v1837 = vand.u32 2147483647, %v1821
        %v1838 = vand.u32 2147483647, %v1822
        %v1839 = vand.u32 2147483647, %v1823
        %v1840 = vand.u32 2147483647, %v1824
        %1841 = vrot.lane.b32.xlu0 %v1825, 12
        %v1842 = vpop.permute.xlu0 %1841
        %1843 = vrot.lane.b32.xlu0 %v1826, 12
        %v1844 = vpop.permute.xlu0 %1843
        %1845 = vrot.lane.b32.xlu0 %v1827, 12
        %v1846 = vpop.permute.xlu0 %1845
        %1847 = vrot.lane.b32.xlu0 %v1828, 12
        %v1848 = vpop.permute.xlu0 %1847
        %1849 = vrot.lane.b32.xlu0 %v1829, 12
        %v1850 = vpop.permute.xlu0 %1849
        %1851 = vrot.lane.b32.xlu0 %v1830, 12
        %v1852 = vpop.permute.xlu0 %1851
        %1853 = vrot.lane.b32.xlu0 %v1831, 12
        %v1854 = vpop.permute.xlu0 %1853
        %1855 = vrot.lane.b32.xlu0 %v1832, 12
        %v1856 = vpop.permute.xlu0 %1855
        %1857 = vrot.lane.b32.xlu0 %v1833, 12
        %v1858 = vpop.permute.xlu0 %1857
        %1859 = vrot.lane.b32.xlu0 %v1834, 12
        %v1860 = vpop.permute.xlu0 %1859
        %1861 = vrot.lane.b32.xlu0 %v1835, 12
        %v1862 = vpop.permute.xlu0 %1861
        %1863 = vrot.lane.b32.xlu0 %v1836, 12
        %v1864 = vpop.permute.xlu0 %1863
        %1865 = vrot.lane.b32.xlu0 %v1837, 12
        %v1866 = vpop.permute.xlu0 %1865
        %1867 = vrot.lane.b32.xlu0 %v1838, 12
        %v1868 = vpop.permute.xlu0 %1867
        %1869 = vrot.lane.b32.xlu0 %v1839, 12
        %v1870 = vpop.permute.xlu0 %1869
        %1871 = vrot.lane.b32.xlu0 %v1840, 12
        %v1872 = vpop.permute.xlu0 %1871
        %v1873 = vadd.f32 %v1757, %v1842
        %v1874 = vadd.f32 %v1758, %v1844
        %v1875 = vadd.f32 %v1759, %v1846
        %v1876 = vadd.f32 %v1760, %v1848
        %v1877 = vadd.f32 %v1761, %v1850
        %v1878 = vadd.f32 %v1762, %v1852
        %v1879 = vadd.f32 %v1763, %v1854
        %v1880 = vadd.f32 %v1764, %v1856
        %v1881 = vadd.f32 %v1765, %v1858
        %v1882 = vadd.f32 %v1766, %v1860
        %v1883 = vadd.f32 %v1767, %v1862
        %v1884 = vadd.f32 %v1768, %v1864
        %v1885 = vadd.f32 %v1769, %v1866
        %v1886 = vadd.f32 %v1770, %v1868
        %v1887 = vadd.f32 %v1771, %v1870
        %v1888 = vadd.f32 %v1772, %v1872
        %1889 = vrot.lane.b32.xlu0 %v1873, 4
        %v1890 = vpop.permute.xlu0 %1889
        %1891 = vrot.lane.b32.xlu0 %v1874, 4
        %v1892 = vpop.permute.xlu0 %1891
        %1893 = vrot.lane.b32.xlu0 %v1875, 4
        %v1894 = vpop.permute.xlu0 %1893
        %1895 = vrot.lane.b32.xlu0 %v1876, 4
        %v1896 = vpop.permute.xlu0 %1895
        %1897 = vrot.lane.b32.xlu0 %v1877, 4
        %v1898 = vpop.permute.xlu0 %1897
        %1899 = vrot.lane.b32.xlu0 %v1878, 4
        %v1900 = vpop.permute.xlu0 %1899
        %1901 = vrot.lane.b32.xlu0 %v1879, 4
        %v1902 = vpop.permute.xlu0 %1901
        %1903 = vrot.lane.b32.xlu0 %v1880, 4
        %v1904 = vpop.permute.xlu0 %1903
        %1905 = vrot.lane.b32.xlu0 %v1881, 4
        %v1906 = vpop.permute.xlu0 %1905
        %1907 = vrot.lane.b32.xlu0 %v1882, 4
        %v1908 = vpop.permute.xlu0 %1907
        %1909 = vrot.lane.b32.xlu0 %v1883, 4
        %v1910 = vpop.permute.xlu0 %1909
        %1911 = vrot.lane.b32.xlu0 %v1884, 4
        %v1912 = vpop.permute.xlu0 %1911
        %1913 = vrot.lane.b32.xlu0 %v1885, 4
        %v1914 = vpop.permute.xlu0 %1913
        %1915 = vrot.lane.b32.xlu0 %v1886, 4
        %v1916 = vpop.permute.xlu0 %1915
        %1917 = vrot.lane.b32.xlu0 %v1887, 4
        %v1918 = vpop.permute.xlu0 %1917
        %1919 = vrot.lane.b32.xlu0 %v1888, 4
        %v1920 = vpop.permute.xlu0 %1919
        %v1921 = vadd.f32 %v732, %v1890
        %v1922 = vadd.f32 %v733, %v1892
        %v1923 = vadd.f32 %v734, %v1894
        %v1924 = vadd.f32 %v735, %v1896
        %v1925 = vadd.f32 %v736, %v1898
        %v1926 = vadd.f32 %v737, %v1900
        %v1927 = vadd.f32 %v738, %v1902
        %v1928 = vadd.f32 %v739, %v1904
        %v1929 = vadd.f32 %v740, %v1906
        %v1930 = vadd.f32 %v741, %v1908
        %v1931 = vadd.f32 %v742, %v1910
        %v1932 = vadd.f32 %v743, %v1912
        %v1933 = vadd.f32 %v744, %v1914
        %v1934 = vadd.f32 %v745, %v1916
        %v1935 = vadd.f32 %v746, %v1918
        %v1936 = vadd.f32 %v747, %v1920
        %vm1937 = vcmp.ge.s32.totalorder %v731, 0
        %vm1938 = vcmp.lt.s32.totalorder %v731, 4
        %vm1939 = vmand %vm1937, %vm1938
        %vm1940 = vcmp.ge.s32.totalorder %v731, 4
        %vm1941 = vcmp.lt.s32.totalorder %v731, 8
        %vm1942 = vmand %vm1940, %vm1941
        %vm1943 = vcmp.ge.s32.totalorder %v731, 8
        %vm1944 = vcmp.lt.s32.totalorder %v731, 12
        %vm1945 = vmand %vm1943, %vm1944
        %1946 = vmatprep.subr.mxu0 0.0
        %1947 = vmatpush1.msra.mxu0 %v1873
        %1948 = vmatprep.subr.mxu0 0.0
        %1949 = vmatpush1.msra.mxu0 %v1874
        %1950 = vmatprep.subr.mxu0 0.0
        %1951 = vmatpush1.msra.mxu0 %v1875
        %1952 = vmatprep.subr.mxu0 0.0
        %1953 = vmatpush1.msra.mxu0 %v1876
        %1954 = vmatprep.subr.mxu0 0.0
        %1955 = vmatpush1.msra.mxu0 %v1877
        %1956 = vmatprep.subr.mxu0 0.0
        %1957 = vmatpush1.msra.mxu0 %v1878
        %1958 = vmatprep.subr.mxu0 0.0
        %1959 = vmatpush1.msra.mxu0 %v1879
        %1960 = vmatprep.subr.mxu0 0.0
        %1961 = vmatpush1.msra.mxu0 %v1880
        %1962 = vmatprep.subr.mxu0 0.0
        %1963 = vmatpush1.msra.mxu0 %v1881
        %1964 = vmatprep.subr.mxu0 0.0
        %1965 = vmatpush1.msra.mxu0 %v1882
        %1966 = vmatprep.subr.mxu0 0.0
        %1967 = vmatpush1.msra.mxu0 %v1883
        %1968 = vmatprep.subr.mxu0 0.0
        %1969 = vmatpush1.msra.mxu0 %v1884
        %1970 = vmatprep.subr.mxu0 0.0
        %1971 = vmatpush1.msra.mxu0 %v1885
        %1972 = vmatprep.subr.mxu0 0.0
        %1973 = vmatpush1.msra.mxu0 %v1886
        %1974 = vmatprep.subr.mxu0 0.0
        %1975 = vmatpush1.msra.mxu0 %v1887
        %1976 = vmatprep.subr.mxu0 0.0
        %1977 = vmatpush1.msra.mxu0 %v1888
        %1978 = vmatprep.subr.mxu0 0.0
        %1979 = vmatpush1.msra.mxu0 0.0
        %1980 = vmatprep.subr.mxu0 0.0
        %1981 = vmatpush1.msra.mxu0 0.0
        %1982 = vmatprep.subr.mxu0 0.0
        %1983 = vmatpush1.msra.mxu0 0.0
        %1984 = vmatprep.subr.mxu0 0.0
        %1985 = vmatpush1.msra.mxu0 0.0
        %1986 = vmatprep.subr.mxu0 0.0
        %1987 = vmatpush1.msra.mxu0 0.0
        %1988 = vmatprep.subr.mxu0 0.0
        %1989 = vmatpush1.msra.mxu0 0.0
        %1990 = vmatprep.subr.mxu0 0.0
        %1991 = vmatpush1.msra.mxu0 0.0
        %1992 = vmatprep.subr.mxu0 0.0
        %1993 = vmatpush1.msra.mxu0 0.0
        %1994 = vmatprep.subr.mxu0 0.0
        %1995 = vmatpush1.msra.mxu0 0.0
        %1996 = vmatprep.subr.mxu0 0.0
        %1997 = vmatpush1.msra.mxu0 0.0
        %1998 = vmatprep.subr.mxu0 0.0
        %1999 = vmatpush1.msra.mxu0 0.0
        %2000 = vmatprep.subr.mxu0 0.0
        %2001 = vmatpush1.msra.mxu0 0.0
        %2002 = vmatprep.subr.mxu0 0.0
        %2003 = vmatpush1.msra.mxu0 0.0
        %2004 = vmatprep.subr.mxu0 0.0
        %2005 = vmatpush1.msra.mxu0 0.0
        %2006 = vmatprep.subr.mxu0 0.0
        %2007 = vmatpush1.msra.mxu0 0.0
        %2008 = vmatprep.subr.mxu0 0.0
        %2009 = vmatpush1.msra.mxu0 0.0
        %2010 = vmatprep.mubr.f32.mxu0 0.0
        %2011 = vmatmul.mubr.f32.gmra.mrb[0].mxu0 %v362
        %v2012 = vpop.f32.mrb[0].mxu0
        %v2013 = vadd.f32 0.0, %v2012
        %v2014 = vpop.f32.mrb[0].mxu0
        %2015 = vmatprep.mubr.f32.mxu0 0.0
        %2016 = vmatmul.mubr.f32.gmra.mrb[0].mxu0 %v367
        %v2017 = vpop.f32.mrb[0].mxu0
        %v2018 = vadd.f32 0.0, %v2017
        %v2019 = vpop.f32.mrb[0].mxu0
        %2020 = vmatprep.mubr.f32.mxu0 0.0
        %2021 = vmatmul.mubr.f32.gmra.mrb[0].mxu0 %v372
        %v2022 = vpop.f32.mrb[0].mxu0
        %v2023 = vadd.f32 0.0, %v2022
        %v2024 = vpop.f32.mrb[0].mxu0
        %2025 = vmatprep.mubr.f32.mxu0 0.0
        %2026 = vmatmul.mubr.f32.gmra.mrb[0].mxu0 %v377
        %v2027 = vpop.f32.mrb[0].mxu0
        %v2028 = vadd.f32 0.0, %v2027
        %v2029 = vpop.f32.mrb[0].mxu0
        %2030 = vmatprep.mubr.f32.mxu0 0.0
        %2031 = vmatmul.mubr.f32.gmra.mrb[0].mxu0 %v382
        %v2032 = vpop.f32.mrb[0].mxu0
        %v2033 = vadd.f32 0.0, %v2032
        %v2034 = vpop.f32.mrb[0].mxu0
        %2035 = vmatprep.mubr.f32.mxu0 0.0
        %2036 = vmatmul.mubr.f32.gmra.mrb[0].mxu0 %v387
        %v2037 = vpop.f32.mrb[0].mxu0
        %v2038 = vadd.f32 0.0, %v2037
        %v2039 = vpop.f32.mrb[0].mxu0
        %2040 = vmatprep.mubr.f32.mxu0 0.0
        %2041 = vmatmul.mubr.f32.gmra.mrb[0].mxu0 %v392
        %v2042 = vpop.f32.mrb[0].mxu0
        %v2043 = vadd.f32 0.0, %v2042
        %v2044 = vpop.f32.mrb[0].mxu0
        %2045 = vmatprep.mubr.f32.mxu0 0.0
        %2046 = vmatmul.mubr.f32.gmra.mrb[0].mxu0 %v397
        %v2047 = vpop.f32.mrb[0].mxu0
        %v2048 = vadd.f32 0.0, %v2047
        %v2049 = vpop.f32.mrb[0].mxu0
        %2050 = vmatprep.mubr.f32.mxu0 0.0
        %2051 = vmatmul.mubr.f32.gmra.mrb[0].mxu0 %v402
        %v2052 = vpop.f32.mrb[0].mxu0
        %v2053 = vadd.f32 0.0, %v2052
        %v2054 = vpop.f32.mrb[0].mxu0
        %2055 = vmatprep.mubr.f32.mxu0 0.0
        %2056 = vmatmul.mubr.f32.gmra.mrb[0].mxu0 %v407
        %v2057 = vpop.f32.mrb[0].mxu0
        %v2058 = vadd.f32 0.0, %v2057
        %v2059 = vpop.f32.mrb[0].mxu0
        %2060 = vmatprep.mubr.f32.mxu0 0.0
        %2061 = vmatmul.mubr.f32.gmra.mrb[0].mxu0 %v412
        %v2062 = vpop.f32.mrb[0].mxu0
        %v2063 = vadd.f32 0.0, %v2062
        %v2064 = vpop.f32.mrb[0].mxu0
        %2065 = vmatprep.mubr.f32.mxu0 0.0
        %2066 = vmatmul.mubr.f32.gmra.mrb[0].mxu0 %v417
        %v2067 = vpop.f32.mrb[0].mxu0
        %v2068 = vadd.f32 0.0, %v2067
        %v2069 = vpop.f32.mrb[0].mxu0
        %2070 = vmatprep.mubr.f32.mxu0 0.0
        %2071 = vmatmul.mubr.f32.gmra.mrb[0].mxu0 %v422
        %v2072 = vpop.f32.mrb[0].mxu0
        %v2073 = vadd.f32 0.0, %v2072
        %v2074 = vpop.f32.mrb[0].mxu0
        %2075 = vmatprep.mubr.f32.mxu0 0.0
        %2076 = vmatmul.mubr.f32.gmra.mrb[0].mxu0 %v427
        %v2077 = vpop.f32.mrb[0].mxu0
        %v2078 = vadd.f32 0.0, %v2077
        %v2079 = vpop.f32.mrb[0].mxu0
        %2080 = vmatprep.mubr.f32.mxu0 0.0
        %2081 = vmatmul.mubr.f32.gmra.mrb[0].mxu0 %v432
        %v2082 = vpop.f32.mrb[0].mxu0
        %v2083 = vadd.f32 0.0, %v2082
        %v2084 = vpop.f32.mrb[0].mxu0
        %2085 = vmatprep.mubr.f32.mxu0 0.0
        %2086 = vmatmul.mubr.f32.gmra.mrb[0].mxu0 %v437
        %v2087 = vpop.f32.mrb[0].mxu0
        %v2088 = vadd.f32 0.0, %v2087
        %v2089 = vpop.f32.mrb[0].mxu0
        %2090 = vdwg.mxu0
        %2091 = vmatprep.subr.mxu0 0.0
        %2092 = vmatpush1.msra.mxu0 %v2013
        %2093 = vmatprep.subr.mxu0 0.0
        %2094 = vmatpush1.msra.mxu0 %v2018
        %2095 = vmatprep.subr.mxu0 0.0
        %2096 = vmatpush1.msra.mxu0 %v2023
        %2097 = vmatprep.subr.mxu0 0.0
        %2098 = vmatpush1.msra.mxu0 %v2028
        %2099 = vmatprep.subr.mxu0 0.0
        %2100 = vmatpush1.msra.mxu0 %v2033
        %2101 = vmatprep.subr.mxu0 0.0
        %2102 = vmatpush1.msra.mxu0 %v2038
        %2103 = vmatprep.subr.mxu0 0.0
        %2104 = vmatpush1.msra.mxu0 %v2043
        %2105 = vmatprep.subr.mxu0 0.0
        %2106 = vmatpush1.msra.mxu0 %v2048
        %2107 = vmatprep.subr.mxu0 0.0
        %2108 = vmatpush1.msra.mxu0 %v2053
        %2109 = vmatprep.subr.mxu0 0.0
        %2110 = vmatpush1.msra.mxu0 %v2058
        %2111 = vmatprep.subr.mxu0 0.0
        %2112 = vmatpush1.msra.mxu0 %v2063
        %2113 = vmatprep.subr.mxu0 0.0
        %2114 = vmatpush1.msra.mxu0 %v2068
        %2115 = vmatprep.subr.mxu0 0.0
        %2116 = vmatpush1.msra.mxu0 %v2073
        %2117 = vmatprep.subr.mxu0 0.0
        %2118 = vmatpush1.msra.mxu0 %v2078
        %2119 = vmatprep.subr.mxu0 0.0
        %2120 = vmatpush1.msra.mxu0 %v2083
        %2121 = vmatprep.subr.mxu0 0.0
        %2122 = vmatpush1.msra.mxu0 %v2088
        %2123 = vmatprep.subr.mxu0 0.0
        %2124 = vmatpush1.msra.mxu0 0.0
        %2125 = vmatprep.subr.mxu0 0.0
        %2126 = vmatpush1.msra.mxu0 0.0
        %2127 = vmatprep.subr.mxu0 0.0
        %2128 = vmatpush1.msra.mxu0 0.0
        %2129 = vmatprep.subr.mxu0 0.0
        %2130 = vmatpush1.msra.mxu0 0.0
        %2131 = vmatprep.subr.mxu0 0.0
        %2132 = vmatpush1.msra.mxu0 0.0
        %2133 = vmatprep.subr.mxu0 0.0
        %2134 = vmatpush1.msra.mxu0 0.0
        %2135 = vmatprep.subr.mxu0 0.0
        %2136 = vmatpush1.msra.mxu0 0.0
        %2137 = vmatprep.subr.mxu0 0.0
        %2138 = vmatpush1.msra.mxu0 0.0
        %2139 = vmatprep.subr.mxu0 0.0
        %2140 = vmatpush1.msra.mxu0 0.0
        %2141 = vmatprep.subr.mxu0 0.0
        %2142 = vmatpush1.msra.mxu0 0.0
        %2143 = vmatprep.subr.mxu0 0.0
        %2144 = vmatpush1.msra.mxu0 0.0
        %2145 = vmatprep.subr.mxu0 0.0
        %2146 = vmatpush1.msra.mxu0 0.0
        %2147 = vmatprep.subr.mxu0 0.0
        %2148 = vmatpush1.msra.mxu0 0.0
        %2149 = vmatprep.subr.mxu0 0.0
        %2150 = vmatpush1.msra.mxu0 0.0
        %2151 = vmatprep.subr.mxu0 0.0
        %2152 = vmatpush1.msra.mxu0 0.0
        %2153 = vmatprep.subr.mxu0 0.0
        %2154 = vmatpush1.msra.mxu0 0.0
        %2155 = vmatprep.mubr.f32.mxu0 0.0
        %2156 = vmatmul.mubr.f32.gmra.mrb[0].mxu0 %v362
        %v2157 = vpop.f32.mrb[0].mxu0
        %v2158 = vadd.f32 0.0, %v2157
        %v2159 = vpop.f32.mrb[0].mxu0
        %2160 = vmatprep.mubr.f32.mxu0 0.0
        %2161 = vmatmul.mubr.f32.gmra.mrb[0].mxu0 %v367
        %v2162 = vpop.f32.mrb[0].mxu0
        %v2163 = vadd.f32 0.0, %v2162
        %v2164 = vpop.f32.mrb[0].mxu0
        %2165 = vmatprep.mubr.f32.mxu0 0.0
        %2166 = vmatmul.mubr.f32.gmra.mrb[0].mxu0 %v372
        %v2167 = vpop.f32.mrb[0].mxu0
        %v2168 = vadd.f32 0.0, %v2167
        %v2169 = vpop.f32.mrb[0].mxu0
        %2170 = vmatprep.mubr.f32.mxu0 0.0
        %2171 = vmatmul.mubr.f32.gmra.mrb[0].mxu0 %v377
        %v2172 = vpop.f32.mrb[0].mxu0
        %v2173 = vadd.f32 0.0, %v2172
        %v2174 = vpop.f32.mrb[0].mxu0
        %2175 = vmatprep.mubr.f32.mxu0 0.0
        %2176 = vmatmul.mubr.f32.gmra.mrb[0].mxu0 %v382
        %v2177 = vpop.f32.mrb[0].mxu0
        %v2178 = vadd.f32 0.0, %v2177
        %v2179 = vpop.f32.mrb[0].mxu0
        %2180 = vmatprep.mubr.f32.mxu0 0.0
        %2181 = vmatmul.mubr.f32.gmra.mrb[0].mxu0 %v387
        %v2182 = vpop.f32.mrb[0].mxu0
        %v2183 = vadd.f32 0.0, %v2182
        %v2184 = vpop.f32.mrb[0].mxu0
        %2185 = vmatprep.mubr.f32.mxu0 0.0
        %2186 = vmatmul.mubr.f32.gmra.mrb[0].mxu0 %v392
        %v2187 = vpop.f32.mrb[0].mxu0
        %v2188 = vadd.f32 0.0, %v2187
        %v2189 = vpop.f32.mrb[0].mxu0
        %2190 = vmatprep.mubr.f32.mxu0 0.0
        %2191 = vmatmul.mubr.f32.gmra.mrb[0].mxu0 %v397
        %v2192 = vpop.f32.mrb[0].mxu0
        %v2193 = vadd.f32 0.0, %v2192
        %v2194 = vpop.f32.mrb[0].mxu0
        %2195 = vmatprep.mubr.f32.mxu0 0.0
        %2196 = vmatmul.mubr.f32.gmra.mrb[0].mxu0 %v402
        %v2197 = vpop.f32.mrb[0].mxu0
        %v2198 = vadd.f32 0.0, %v2197
        %v2199 = vpop.f32.mrb[0].mxu0
        %2200 = vmatprep.mubr.f32.mxu0 0.0
        %2201 = vmatmul.mubr.f32.gmra.mrb[0].mxu0 %v407
        %v2202 = vpop.f32.mrb[0].mxu0
        %v2203 = vadd.f32 0.0, %v2202
        %v2204 = vpop.f32.mrb[0].mxu0
        %2205 = vmatprep.mubr.f32.mxu0 0.0
        %2206 = vmatmul.mubr.f32.gmra.mrb[0].mxu0 %v412
        %v2207 = vpop.f32.mrb[0].mxu0
        %v2208 = vadd.f32 0.0, %v2207
        %v2209 = vpop.f32.mrb[0].mxu0
        %2210 = vmatprep.mubr.f32.mxu0 0.0
        %2211 = vmatmul.mubr.f32.gmra.mrb[0].mxu0 %v417
        %v2212 = vpop.f32.mrb[0].mxu0
        %v2213 = vadd.f32 0.0, %v2212
        %v2214 = vpop.f32.mrb[0].mxu0
        %2215 = vmatprep.mubr.f32.mxu0 0.0
        %2216 = vmatmul.mubr.f32.gmra.mrb[0].mxu0 %v422
        %v2217 = vpop.f32.mrb[0].mxu0
        %v2218 = vadd.f32 0.0, %v2217
        %v2219 = vpop.f32.mrb[0].mxu0
        %2220 = vmatprep.mubr.f32.mxu0 0.0
        %2221 = vmatmul.mubr.f32.gmra.mrb[0].mxu0 %v427
        %v2222 = vpop.f32.mrb[0].mxu0
        %v2223 = vadd.f32 0.0, %v2222
        %v2224 = vpop.f32.mrb[0].mxu0
        %2225 = vmatprep.mubr.f32.mxu0 0.0
        %2226 = vmatmul.mubr.f32.gmra.mrb[0].mxu0 %v432
        %v2227 = vpop.f32.mrb[0].mxu0
        %v2228 = vadd.f32 0.0, %v2227
        %v2229 = vpop.f32.mrb[0].mxu0
        %2230 = vmatprep.mubr.f32.mxu0 0.0
        %2231 = vmatmul.mubr.f32.gmra.mrb[0].mxu0 %v437
        %v2232 = vpop.f32.mrb[0].mxu0
        %v2233 = vadd.f32 0.0, %v2232
        %v2234 = vpop.f32.mrb[0].mxu0
        %2235 = vdwg.mxu0
        %2236 = vmatprep.subr.mxu0 0.0
        %2237 = vmatpush1.msra.mxu0 %v2158
        %2238 = vmatprep.subr.mxu0 0.0
        %2239 = vmatpush1.msra.mxu0 %v2163
        %2240 = vmatprep.subr.mxu0 0.0
        %2241 = vmatpush1.msra.mxu0 %v2168
        %2242 = vmatprep.subr.mxu0 0.0
        %2243 = vmatpush1.msra.mxu0 %v2173
        %2244 = vmatprep.subr.mxu0 0.0
        %2245 = vmatpush1.msra.mxu0 %v2178
        %2246 = vmatprep.subr.mxu0 0.0
        %2247 = vmatpush1.msra.mxu0 %v2183
        %2248 = vmatprep.subr.mxu0 0.0
        %2249 = vmatpush1.msra.mxu0 %v2188
        %2250 = vmatprep.subr.mxu0 0.0
        %2251 = vmatpush1.msra.mxu0 %v2193
        %2252 = vmatprep.subr.mxu0 0.0
        %2253 = vmatpush1.msra.mxu0 %v2198
        %2254 = vmatprep.subr.mxu0 0.0
        %2255 = vmatpush1.msra.mxu0 %v2203
        %2256 = vmatprep.subr.mxu0 0.0
        %2257 = vmatpush1.msra.mxu0 %v2208
        %2258 = vmatprep.subr.mxu0 0.0
        %2259 = vmatpush1.msra.mxu0 %v2213
        %2260 = vmatprep.subr.mxu0 0.0
        %2261 = vmatpush1.msra.mxu0 %v2218
        %2262 = vmatprep.subr.mxu0 0.0
        %2263 = vmatpush1.msra.mxu0 %v2223
        %2264 = vmatprep.subr.mxu0 0.0
        %2265 = vmatpush1.msra.mxu0 %v2228
        %2266 = vmatprep.subr.mxu0 0.0
        %2267 = vmatpush1.msra.mxu0 %v2233
        %2268 = vmatprep.subr.mxu0 0.0
        %2269 = vmatpush1.msra.mxu0 0.0
        %2270 = vmatprep.subr.mxu0 0.0
        %2271 = vmatpush1.msra.mxu0 0.0
        %2272 = vmatprep.subr.mxu0 0.0
        %2273 = vmatpush1.msra.mxu0 0.0
        %2274 = vmatprep.subr.mxu0 0.0
        %2275 = vmatpush1.msra.mxu0 0.0
        %2276 = vmatprep.subr.mxu0 0.0
        %2277 = vmatpush1.msra.mxu0 0.0
        %2278 = vmatprep.subr.mxu0 0.0
        %2279 = vmatpush1.msra.mxu0 0.0
        %2280 = vmatprep.subr.mxu0 0.0
        %2281 = vmatpush1.msra.mxu0 0.0
        %2282 = vmatprep.subr.mxu0 0.0
        %2283 = vmatpush1.msra.mxu0 0.0
        %2284 = vmatprep.subr.mxu0 0.0
        %2285 = vmatpush1.msra.mxu0 0.0
        %2286 = vmatprep.subr.mxu0 0.0
        %2287 = vmatpush1.msra.mxu0 0.0
        %2288 = vmatprep.subr.mxu0 0.0
        %2289 = vmatpush1.msra.mxu0 0.0
        %2290 = vmatprep.subr.mxu0 0.0
        %2291 = vmatpush1.msra.mxu0 0.0
        %2292 = vmatprep.subr.mxu0 0.0
        %2293 = vmatpush1.msra.mxu0 0.0
        %2294 = vmatprep.subr.mxu0 0.0
        %2295 = vmatpush1.msra.mxu0 0.0
        %2296 = vmatprep.subr.mxu0 0.0
        %2297 = vmatpush1.msra.mxu0 0.0
        %2298 = vmatprep.subr.mxu0 0.0
        %2299 = vmatpush1.msra.mxu0 0.0
        %2300 = vmatprep.mubr.f32.mxu0 0.0
        %2301 = vmatmul.mubr.f32.gmra.mrb[0].mxu0 %v507
        %v2302 = vpop.f32.mrb[0].mxu0
        %v2303 = vadd.f32 0.0, %v2302
        %v2304 = vpop.f32.mrb[0].mxu0
        %2305 = vmatprep.mubr.f32.mxu0 0.0
        %2306 = vmatmul.mubr.f32.gmra.mrb[0].mxu0 %v512
        %v2307 = vpop.f32.mrb[0].mxu0
        %v2308 = vadd.f32 0.0, %v2307
        %v2309 = vpop.f32.mrb[0].mxu0
        %2310 = vmatprep.mubr.f32.mxu0 0.0
        %2311 = vmatmul.mubr.f32.gmra.mrb[0].mxu0 %v517
        %v2312 = vpop.f32.mrb[0].mxu0
        %v2313 = vadd.f32 0.0, %v2312
        %v2314 = vpop.f32.mrb[0].mxu0
        %2315 = vmatprep.mubr.f32.mxu0 0.0
        %2316 = vmatmul.mubr.f32.gmra.mrb[0].mxu0 %v522
        %v2317 = vpop.f32.mrb[0].mxu0
        %v2318 = vadd.f32 0.0, %v2317
        %v2319 = vpop.f32.mrb[0].mxu0
        %2320 = vmatprep.mubr.f32.mxu0 0.0
        %2321 = vmatmul.mubr.f32.gmra.mrb[0].mxu0 %v527
        %v2322 = vpop.f32.mrb[0].mxu0
        %v2323 = vadd.f32 0.0, %v2322
        %v2324 = vpop.f32.mrb[0].mxu0
        %2325 = vmatprep.mubr.f32.mxu0 0.0
        %2326 = vmatmul.mubr.f32.gmra.mrb[0].mxu0 %v532
        %v2327 = vpop.f32.mrb[0].mxu0
        %v2328 = vadd.f32 0.0, %v2327
        %v2329 = vpop.f32.mrb[0].mxu0
        %2330 = vmatprep.mubr.f32.mxu0 0.0
        %2331 = vmatmul.mubr.f32.gmra.mrb[0].mxu0 %v537
        %v2332 = vpop.f32.mrb[0].mxu0
        %v2333 = vadd.f32 0.0, %v2332
        %v2334 = vpop.f32.mrb[0].mxu0
        %2335 = vmatprep.mubr.f32.mxu0 0.0
        %2336 = vmatmul.mubr.f32.gmra.mrb[0].mxu0 %v542
        %v2337 = vpop.f32.mrb[0].mxu0
        %v2338 = vadd.f32 0.0, %v2337
        %v2339 = vpop.f32.mrb[0].mxu0
        %2340 = vmatprep.mubr.f32.mxu0 0.0
        %2341 = vmatmul.mubr.f32.gmra.mrb[0].mxu0 %v547
        %v2342 = vpop.f32.mrb[0].mxu0
        %v2343 = vadd.f32 0.0, %v2342
        %v2344 = vpop.f32.mrb[0].mxu0
        %2345 = vmatprep.mubr.f32.mxu0 0.0
        %2346 = vmatmul.mubr.f32.gmra.mrb[0].mxu0 %v552
        %v2347 = vpop.f32.mrb[0].mxu0
        %v2348 = vadd.f32 0.0, %v2347
        %v2349 = vpop.f32.mrb[0].mxu0
        %2350 = vmatprep.mubr.f32.mxu0 0.0
        %2351 = vmatmul.mubr.f32.gmra.mrb[0].mxu0 %v557
        %v2352 = vpop.f32.mrb[0].mxu0
        %v2353 = vadd.f32 0.0, %v2352
        %v2354 = vpop.f32.mrb[0].mxu0
        %2355 = vmatprep.mubr.f32.mxu0 0.0
        %2356 = vmatmul.mubr.f32.gmra.mrb[0].mxu0 %v562
        %v2357 = vpop.f32.mrb[0].mxu0
        %v2358 = vadd.f32 0.0, %v2357
        %v2359 = vpop.f32.mrb[0].mxu0
        %2360 = vmatprep.mubr.f32.mxu0 0.0
        %2361 = vmatmul.mubr.f32.gmra.mrb[0].mxu0 %v567
        %v2362 = vpop.f32.mrb[0].mxu0
        %v2363 = vadd.f32 0.0, %v2362
        %v2364 = vpop.f32.mrb[0].mxu0
        %2365 = vmatprep.mubr.f32.mxu0 0.0
        %2366 = vmatmul.mubr.f32.gmra.mrb[0].mxu0 %v572
        %v2367 = vpop.f32.mrb[0].mxu0
        %v2368 = vadd.f32 0.0, %v2367
        %v2369 = vpop.f32.mrb[0].mxu0
        %2370 = vmatprep.mubr.f32.mxu0 0.0
        %2371 = vmatmul.mubr.f32.gmra.mrb[0].mxu0 %v577
        %v2372 = vpop.f32.mrb[0].mxu0
        %v2373 = vadd.f32 0.0, %v2372
        %v2374 = vpop.f32.mrb[0].mxu0
        %2375 = vmatprep.mubr.f32.mxu0 0.0
        %2376 = vmatmul.mubr.f32.gmra.mrb[0].mxu0 %v582
        %v2377 = vpop.f32.mrb[0].mxu0
        %v2378 = vadd.f32 0.0, %v2377
        %v2379 = vpop.f32.mrb[0].mxu0
        %2380 = vdwg.mxu0
        %2381 = vmatprep.subr.mxu0 0.0
        %2382 = vmatpush1.msra.mxu0 %v2303
        %2383 = vmatprep.subr.mxu0 0.0
        %2384 = vmatpush1.msra.mxu0 %v2308
        %2385 = vmatprep.subr.mxu0 0.0
        %2386 = vmatpush1.msra.mxu0 %v2313
        %2387 = vmatprep.subr.mxu0 0.0
        %2388 = vmatpush1.msra.mxu0 %v2318
        %2389 = vmatprep.subr.mxu0 0.0
        %2390 = vmatpush1.msra.mxu0 %v2323
        %2391 = vmatprep.subr.mxu0 0.0
        %2392 = vmatpush1.msra.mxu0 %v2328
        %2393 = vmatprep.subr.mxu0 0.0
        %2394 = vmatpush1.msra.mxu0 %v2333
        %2395 = vmatprep.subr.mxu0 0.0
        %2396 = vmatpush1.msra.mxu0 %v2338
        %2397 = vmatprep.subr.mxu0 0.0
        %2398 = vmatpush1.msra.mxu0 %v2343
        %2399 = vmatprep.subr.mxu0 0.0
        %2400 = vmatpush1.msra.mxu0 %v2348
        %2401 = vmatprep.subr.mxu0 0.0
        %2402 = vmatpush1.msra.mxu0 %v2353
        %2403 = vmatprep.subr.mxu0 0.0
        %2404 = vmatpush1.msra.mxu0 %v2358
        %2405 = vmatprep.subr.mxu0 0.0
        %2406 = vmatpush1.msra.mxu0 %v2363
        %2407 = vmatprep.subr.mxu0 0.0
        %2408 = vmatpush1.msra.mxu0 %v2368
        %2409 = vmatprep.subr.mxu0 0.0
        %2410 = vmatpush1.msra.mxu0 %v2373
        %2411 = vmatprep.subr.mxu0 0.0
        %2412 = vmatpush1.msra.mxu0 %v2378
        %2413 = vmatprep.subr.mxu0 0.0
        %2414 = vmatpush1.msra.mxu0 0.0
        %2415 = vmatprep.subr.mxu0 0.0
        %2416 = vmatpush1.msra.mxu0 0.0
        %2417 = vmatprep.subr.mxu0 0.0
        %2418 = vmatpush1.msra.mxu0 0.0
        %2419 = vmatprep.subr.mxu0 0.0
        %2420 = vmatpush1.msra.mxu0 0.0
        %2421 = vmatprep.subr.mxu0 0.0
        %2422 = vmatpush1.msra.mxu0 0.0
        %2423 = vmatprep.subr.mxu0 0.0
        %2424 = vmatpush1.msra.mxu0 0.0
        %2425 = vmatprep.subr.mxu0 0.0
        %2426 = vmatpush1.msra.mxu0 0.0
        %2427 = vmatprep.subr.mxu0 0.0
        %2428 = vmatpush1.msra.mxu0 0.0
        %2429 = vmatprep.subr.mxu0 0.0
        %2430 = vmatpush1.msra.mxu0 0.0
        %2431 = vmatprep.subr.mxu0 0.0
        %2432 = vmatpush1.msra.mxu0 0.0
        %2433 = vmatprep.subr.mxu0 0.0
        %2434 = vmatpush1.msra.mxu0 0.0
        %2435 = vmatprep.subr.mxu0 0.0
        %2436 = vmatpush1.msra.mxu0 0.0
        %2437 = vmatprep.subr.mxu0 0.0
        %2438 = vmatpush1.msra.mxu0 0.0
        %2439 = vmatprep.subr.mxu0 0.0
        %2440 = vmatpush1.msra.mxu0 0.0
        %2441 = vmatprep.subr.mxu0 0.0
        %2442 = vmatpush1.msra.mxu0 0.0
        %2443 = vmatprep.subr.mxu0 0.0
        %2444 = vmatpush1.msra.mxu0 0.0
        %2445 = vmatprep.mubr.f32.mxu0 0.0
        %2446 = vmatmul.mubr.f32.gmra.mrb[0].mxu0 %v652
        %v2447 = vpop.f32.mrb[0].mxu0
        %v2448 = vadd.f32 0.0, %v2447
        %v2449 = vpop.f32.mrb[0].mxu0
        %2450 = vmatprep.mubr.f32.mxu0 0.0
        %2451 = vmatmul.mubr.f32.gmra.mrb[0].mxu0 %v657
        %v2452 = vpop.f32.mrb[0].mxu0
        %v2453 = vadd.f32 0.0, %v2452
        %v2454 = vpop.f32.mrb[0].mxu0
        %2455 = vmatprep.mubr.f32.mxu0 0.0
        %2456 = vmatmul.mubr.f32.gmra.mrb[0].mxu0 %v662
        %v2457 = vpop.f32.mrb[0].mxu0
        %v2458 = vadd.f32 0.0, %v2457
        %v2459 = vpop.f32.mrb[0].mxu0
        %2460 = vmatprep.mubr.f32.mxu0 0.0
        %2461 = vmatmul.mubr.f32.gmra.mrb[0].mxu0 %v667
        %v2462 = vpop.f32.mrb[0].mxu0
        %v2463 = vadd.f32 0.0, %v2462
        %v2464 = vpop.f32.mrb[0].mxu0
        %2465 = vmatprep.mubr.f32.mxu0 0.0
        %2466 = vmatmul.mubr.f32.gmra.mrb[0].mxu0 %v672
        %v2467 = vpop.f32.mrb[0].mxu0
        %v2468 = vadd.f32 0.0, %v2467
        %v2469 = vpop.f32.mrb[0].mxu0
        %2470 = vmatprep.mubr.f32.mxu0 0.0
        %2471 = vmatmul.mubr.f32.gmra.mrb[0].mxu0 %v677
        %v2472 = vpop.f32.mrb[0].mxu0
        %v2473 = vadd.f32 0.0, %v2472
        %v2474 = vpop.f32.mrb[0].mxu0
        %2475 = vmatprep.mubr.f32.mxu0 0.0
        %2476 = vmatmul.mubr.f32.gmra.mrb[0].mxu0 %v682
        %v2477 = vpop.f32.mrb[0].mxu0
        %v2478 = vadd.f32 0.0, %v2477
        %v2479 = vpop.f32.mrb[0].mxu0
        %2480 = vmatprep.mubr.f32.mxu0 0.0
        %2481 = vmatmul.mubr.f32.gmra.mrb[0].mxu0 %v687
        %v2482 = vpop.f32.mrb[0].mxu0
        %v2483 = vadd.f32 0.0, %v2482
        %v2484 = vpop.f32.mrb[0].mxu0
        %2485 = vmatprep.mubr.f32.mxu0 0.0
        %2486 = vmatmul.mubr.f32.gmra.mrb[0].mxu0 %v692
        %v2487 = vpop.f32.mrb[0].mxu0
        %v2488 = vadd.f32 0.0, %v2487
        %v2489 = vpop.f32.mrb[0].mxu0
        %2490 = vmatprep.mubr.f32.mxu0 0.0
        %2491 = vmatmul.mubr.f32.gmra.mrb[0].mxu0 %v697
        %v2492 = vpop.f32.mrb[0].mxu0
        %v2493 = vadd.f32 0.0, %v2492
        %v2494 = vpop.f32.mrb[0].mxu0
        %2495 = vmatprep.mubr.f32.mxu0 0.0
        %2496 = vmatmul.mubr.f32.gmra.mrb[0].mxu0 %v702
        %v2497 = vpop.f32.mrb[0].mxu0
        %v2498 = vadd.f32 0.0, %v2497
        %v2499 = vpop.f32.mrb[0].mxu0
        %2500 = vmatprep.mubr.f32.mxu0 0.0
        %2501 = vmatmul.mubr.f32.gmra.mrb[0].mxu0 %v707
        %v2502 = vpop.f32.mrb[0].mxu0
        %v2503 = vadd.f32 0.0, %v2502
        %v2504 = vpop.f32.mrb[0].mxu0
        %2505 = vmatprep.mubr.f32.mxu0 0.0
        %2506 = vmatmul.mubr.f32.gmra.mrb[0].mxu0 %v712
        %v2507 = vpop.f32.mrb[0].mxu0
        %v2508 = vadd.f32 0.0, %v2507
        %v2509 = vpop.f32.mrb[0].mxu0
        %2510 = vmatprep.mubr.f32.mxu0 0.0
        %2511 = vmatmul.mubr.f32.gmra.mrb[0].mxu0 %v717
        %v2512 = vpop.f32.mrb[0].mxu0
        %v2513 = vadd.f32 0.0, %v2512
        %v2514 = vpop.f32.mrb[0].mxu0
        %2515 = vmatprep.mubr.f32.mxu0 0.0
        %2516 = vmatmul.mubr.f32.gmra.mrb[0].mxu0 %v722
        %v2517 = vpop.f32.mrb[0].mxu0
        %v2518 = vadd.f32 0.0, %v2517
        %v2519 = vpop.f32.mrb[0].mxu0
        %2520 = vmatprep.mubr.f32.mxu0 0.0
        %2521 = vmatmul.mubr.f32.gmra.mrb[0].mxu0 %v727
        %v2522 = vpop.f32.mrb[0].mxu0
        %v2523 = vadd.f32 0.0, %v2522
        %v2524 = vpop.f32.mrb[0].mxu0
        %2525 = vdwg.mxu0
        %v2526 = vmul.f32 %v1542, %v2158
        %v2527 = vmul.f32 %v1542, %v2163
        %v2528 = vmul.f32 %v1542, %v2168
        %v2529 = vmul.f32 %v1542, %v2173
        %v2530 = vmul.f32 %v1542, %v2178
        %v2531 = vmul.f32 %v1542, %v2183
        %v2532 = vmul.f32 %v1542, %v2188
        %v2533 = vmul.f32 %v1542, %v2193
        %v2534 = vmul.f32 %v1542, %v2198
        %v2535 = vmul.f32 %v1542, %v2203
        %v2536 = vmul.f32 %v1542, %v2208
        %v2537 = vmul.f32 %v1542, %v2213
        %v2538 = vmul.f32 %v1542, %v2218
        %v2539 = vmul.f32 %v1542, %v2223
        %v2540 = vmul.f32 %v1542, %v2228
        %v2541 = vmul.f32 %v1542, %v2233
        %v2542 = vmul.f32 %v1560, %v2013
        %v2543 = vmul.f32 %v1560, %v2018
        %v2544 = vmul.f32 %v1560, %v2023
        %v2545 = vmul.f32 %v1560, %v2028
        %v2546 = vmul.f32 %v1560, %v2033
        %v2547 = vmul.f32 %v1560, %v2038
        %v2548 = vmul.f32 %v1560, %v2043
        %v2549 = vmul.f32 %v1560, %v2048
        %v2550 = vmul.f32 %v1560, %v2053
        %v2551 = vmul.f32 %v1560, %v2058
        %v2552 = vmul.f32 %v1560, %v2063
        %v2553 = vmul.f32 %v1560, %v2068
        %v2554 = vmul.f32 %v1560, %v2073
        %v2555 = vmul.f32 %v1560, %v2078
        %v2556 = vmul.f32 %v1560, %v2083
        %v2557 = vmul.f32 %v1560, %v2088
        %v2558 = vadd.f32 %v2526, %v2542
        %v2559 = vadd.f32 %v2527, %v2543
        %v2560 = vadd.f32 %v2528, %v2544
        %v2561 = vadd.f32 %v2529, %v2545
        %v2562 = vadd.f32 %v2530, %v2546
        %v2563 = vadd.f32 %v2531, %v2547
        %v2564 = vadd.f32 %v2532, %v2548
        %v2565 = vadd.f32 %v2533, %v2549
        %v2566 = vadd.f32 %v2534, %v2550
        %v2567 = vadd.f32 %v2535, %v2551
        %v2568 = vadd.f32 %v2536, %v2552
        %v2569 = vadd.f32 %v2537, %v2553
        %v2570 = vadd.f32 %v2538, %v2554
        %v2571 = vadd.f32 %v2539, %v2555
        %v2572 = vadd.f32 %v2540, %v2556
        %v2573 = vadd.f32 %v2541, %v2557
        %v2574 = vand.u32 2147483647, %v2558
        %v2575 = vand.u32 2147483647, %v2559
        %v2576 = vand.u32 2147483647, %v2560
        %v2577 = vand.u32 2147483647, %v2561
        %v2578 = vand.u32 2147483647, %v2562
        %v2579 = vand.u32 2147483647, %v2563
        %v2580 = vand.u32 2147483647, %v2564
        %v2581 = vand.u32 2147483647, %v2565
        %v2582 = vand.u32 2147483647, %v2566
        %v2583 = vand.u32 2147483647, %v2567
        %v2584 = vand.u32 2147483647, %v2568
        %v2585 = vand.u32 2147483647, %v2569
        %v2586 = vand.u32 2147483647, %v2570
        %v2587 = vand.u32 2147483647, %v2571
        %v2588 = vand.u32 2147483647, %v2572
        %v2589 = vand.u32 2147483647, %v2573
        %v2590 = vsel %vm1939, %v2574, 0.0
        %v2591 = vsel %vm1939, %v2575, 0.0
        %v2592 = vsel %vm1939, %v2576, 0.0
        %v2593 = vsel %vm1939, %v2577, 0.0
        %v2594 = vsel %vm1939, %v2578, 0.0
        %v2595 = vsel %vm1939, %v2579, 0.0
        %v2596 = vsel %vm1939, %v2580, 0.0
        %v2597 = vsel %vm1939, %v2581, 0.0
        %v2598 = vsel %vm1939, %v2582, 0.0
        %v2599 = vsel %vm1939, %v2583, 0.0
        %v2600 = vsel %vm1939, %v2584, 0.0
        %v2601 = vsel %vm1939, %v2585, 0.0
        %v2602 = vsel %vm1939, %v2586, 0.0
        %v2603 = vsel %vm1939, %v2587, 0.0
        %v2604 = vsel %vm1939, %v2588, 0.0
        %v2605 = vsel %vm1939, %v2589, 0.0
        %2606 = vrot.lane.b32.xlu0 %v2590, 20
        %v2607 = vpop.permute.xlu0 %2606
        %2608 = vrot.lane.b32.xlu0 %v2591, 20
        %v2609 = vpop.permute.xlu0 %2608
        %2610 = vrot.lane.b32.xlu0 %v2592, 20
        %v2611 = vpop.permute.xlu0 %2610
        %2612 = vrot.lane.b32.xlu0 %v2593, 20
        %v2613 = vpop.permute.xlu0 %2612
        %2614 = vrot.lane.b32.xlu0 %v2594, 20
        %v2615 = vpop.permute.xlu0 %2614
        %2616 = vrot.lane.b32.xlu0 %v2595, 20
        %v2617 = vpop.permute.xlu0 %2616
        %2618 = vrot.lane.b32.xlu0 %v2596, 20
        %v2619 = vpop.permute.xlu0 %2618
        %2620 = vrot.lane.b32.xlu0 %v2597, 20
        %v2621 = vpop.permute.xlu0 %2620
        %2622 = vrot.lane.b32.xlu0 %v2598, 20
        %v2623 = vpop.permute.xlu0 %2622
        %2624 = vrot.lane.b32.xlu0 %v2599, 20
        %v2625 = vpop.permute.xlu0 %2624
        %2626 = vrot.lane.b32.xlu0 %v2600, 20
        %v2627 = vpop.permute.xlu0 %2626
        %2628 = vrot.lane.b32.xlu0 %v2601, 20
        %v2629 = vpop.permute.xlu0 %2628
        %2630 = vrot.lane.b32.xlu0 %v2602, 20
        %v2631 = vpop.permute.xlu0 %2630
        %2632 = vrot.lane.b32.xlu0 %v2603, 20
        %v2633 = vpop.permute.xlu0 %2632
        %2634 = vrot.lane.b32.xlu0 %v2604, 20
        %v2635 = vpop.permute.xlu0 %2634
        %2636 = vrot.lane.b32.xlu0 %v2605, 20
        %v2637 = vpop.permute.xlu0 %2636
        %v2638 = vadd.f32 %v1921, %v2607
        %v2639 = vadd.f32 %v1922, %v2609
        %v2640 = vadd.f32 %v1923, %v2611
        %v2641 = vadd.f32 %v1924, %v2613
        %v2642 = vadd.f32 %v1925, %v2615
        %v2643 = vadd.f32 %v1926, %v2617
        %v2644 = vadd.f32 %v1927, %v2619
        %v2645 = vadd.f32 %v1928, %v2621
        %v2646 = vadd.f32 %v1929, %v2623
        %v2647 = vadd.f32 %v1930, %v2625
        %v2648 = vadd.f32 %v1931, %v2627
        %v2649 = vadd.f32 %v1932, %v2629
        %v2650 = vadd.f32 %v1933, %v2631
        %v2651 = vadd.f32 %v1934, %v2633
        %v2652 = vadd.f32 %v1935, %v2635
        %v2653 = vadd.f32 %v1936, %v2637
        %v2654 = vmul.f32 %v1658, %v2303
        %v2655 = vmul.f32 %v1658, %v2308
        %v2656 = vmul.f32 %v1658, %v2313
        %v2657 = vmul.f32 %v1658, %v2318
        %v2658 = vmul.f32 %v1658, %v2323
        %v2659 = vmul.f32 %v1658, %v2328
        %v2660 = vmul.f32 %v1658, %v2333
        %v2661 = vmul.f32 %v1658, %v2338
        %v2662 = vmul.f32 %v1658, %v2343
        %v2663 = vmul.f32 %v1658, %v2348
        %v2664 = vmul.f32 %v1658, %v2353
        %v2665 = vmul.f32 %v1658, %v2358
        %v2666 = vmul.f32 %v1658, %v2363
        %v2667 = vmul.f32 %v1658, %v2368
        %v2668 = vmul.f32 %v1658, %v2373
        %v2669 = vmul.f32 %v1658, %v2378
        %v2670 = vmul.f32 %v1676, %v2158
        %v2671 = vmul.f32 %v1676, %v2163
        %v2672 = vmul.f32 %v1676, %v2168
        %v2673 = vmul.f32 %v1676, %v2173
        %v2674 = vmul.f32 %v1676, %v2178
        %v2675 = vmul.f32 %v1676, %v2183
        %v2676 = vmul.f32 %v1676, %v2188
        %v2677 = vmul.f32 %v1676, %v2193
        %v2678 = vmul.f32 %v1676, %v2198
        %v2679 = vmul.f32 %v1676, %v2203
        %v2680 = vmul.f32 %v1676, %v2208
        %v2681 = vmul.f32 %v1676, %v2213
        %v2682 = vmul.f32 %v1676, %v2218
        %v2683 = vmul.f32 %v1676, %v2223
        %v2684 = vmul.f32 %v1676, %v2228
        %v2685 = vmul.f32 %v1676, %v2233
        %v2686 = vadd.f32 %v2654, %v2670
        %v2687 = vadd.f32 %v2655, %v2671
        %v2688 = vadd.f32 %v2656, %v2672
        %v2689 = vadd.f32 %v2657, %v2673
        %v2690 = vadd.f32 %v2658, %v2674
        %v2691 = vadd.f32 %v2659, %v2675
        %v2692 = vadd.f32 %v2660, %v2676
        %v2693 = vadd.f32 %v2661, %v2677
        %v2694 = vadd.f32 %v2662, %v2678
        %v2695 = vadd.f32 %v2663, %v2679
        %v2696 = vadd.f32 %v2664, %v2680
        %v2697 = vadd.f32 %v2665, %v2681
        %v2698 = vadd.f32 %v2666, %v2682
        %v2699 = vadd.f32 %v2667, %v2683
        %v2700 = vadd.f32 %v2668, %v2684
        %v2701 = vadd.f32 %v2669, %v2685
        %v2702 = vand.u32 2147483647, %v2686
        %v2703 = vand.u32 2147483647, %v2687
        %v2704 = vand.u32 2147483647, %v2688
        %v2705 = vand.u32 2147483647, %v2689
        %v2706 = vand.u32 2147483647, %v2690
        %v2707 = vand.u32 2147483647, %v2691
        %v2708 = vand.u32 2147483647, %v2692
        %v2709 = vand.u32 2147483647, %v2693
        %v2710 = vand.u32 2147483647, %v2694
        %v2711 = vand.u32 2147483647, %v2695
        %v2712 = vand.u32 2147483647, %v2696
        %v2713 = vand.u32 2147483647, %v2697
        %v2714 = vand.u32 2147483647, %v2698
        %v2715 = vand.u32 2147483647, %v2699
        %v2716 = vand.u32 2147483647, %v2700
        %v2717 = vand.u32 2147483647, %v2701
        %v2718 = vsel %vm1939, %v2702, 0.0
        %v2719 = vsel %vm1939, %v2703, 0.0
        %v2720 = vsel %vm1939, %v2704, 0.0
        %v2721 = vsel %vm1939, %v2705, 0.0
        %v2722 = vsel %vm1939, %v2706, 0.0
        %v2723 = vsel %vm1939, %v2707, 0.0
        %v2724 = vsel %vm1939, %v2708, 0.0
        %v2725 = vsel %vm1939, %v2709, 0.0
        %v2726 = vsel %vm1939, %v2710, 0.0
        %v2727 = vsel %vm1939, %v2711, 0.0
        %v2728 = vsel %vm1939, %v2712, 0.0
        %v2729 = vsel %vm1939, %v2713, 0.0
        %v2730 = vsel %vm1939, %v2714, 0.0
        %v2731 = vsel %vm1939, %v2715, 0.0
        %v2732 = vsel %vm1939, %v2716, 0.0
        %v2733 = vsel %vm1939, %v2717, 0.0
        %2734 = vrot.lane.b32.xlu0 %v2718, 24
        %v2735 = vpop.permute.xlu0 %2734
        %2736 = vrot.lane.b32.xlu0 %v2719, 24
        %v2737 = vpop.permute.xlu0 %2736
        %2738 = vrot.lane.b32.xlu0 %v2720, 24
        %v2739 = vpop.permute.xlu0 %2738
        %2740 = vrot.lane.b32.xlu0 %v2721, 24
        %v2741 = vpop.permute.xlu0 %2740
        %2742 = vrot.lane.b32.xlu0 %v2722, 24
        %v2743 = vpop.permute.xlu0 %2742
        %2744 = vrot.lane.b32.xlu0 %v2723, 24
        %v2745 = vpop.permute.xlu0 %2744
        %2746 = vrot.lane.b32.xlu0 %v2724, 24
        %v2747 = vpop.permute.xlu0 %2746
        %2748 = vrot.lane.b32.xlu0 %v2725, 24
        %v2749 = vpop.permute.xlu0 %2748
        %2750 = vrot.lane.b32.xlu0 %v2726, 24
        %v2751 = vpop.permute.xlu0 %2750
        %2752 = vrot.lane.b32.xlu0 %v2727, 24
        %v2753 = vpop.permute.xlu0 %2752
        %2754 = vrot.lane.b32.xlu0 %v2728, 24
        %v2755 = vpop.permute.xlu0 %2754
        %2756 = vrot.lane.b32.xlu0 %v2729, 24
        %v2757 = vpop.permute.xlu0 %2756
        %2758 = vrot.lane.b32.xlu0 %v2730, 24
        %v2759 = vpop.permute.xlu0 %2758
        %2760 = vrot.lane.b32.xlu0 %v2731, 24
        %v2761 = vpop.permute.xlu0 %2760
        %2762 = vrot.lane.b32.xlu0 %v2732, 24
        %v2763 = vpop.permute.xlu0 %2762
        %2764 = vrot.lane.b32.xlu0 %v2733, 24
        %v2765 = vpop.permute.xlu0 %2764
        %v2766 = vadd.f32 %v2638, %v2735
        %v2767 = vadd.f32 %v2639, %v2737
        %v2768 = vadd.f32 %v2640, %v2739
        %v2769 = vadd.f32 %v2641, %v2741
        %v2770 = vadd.f32 %v2642, %v2743
        %v2771 = vadd.f32 %v2643, %v2745
        %v2772 = vadd.f32 %v2644, %v2747
        %v2773 = vadd.f32 %v2645, %v2749
        %v2774 = vadd.f32 %v2646, %v2751
        %v2775 = vadd.f32 %v2647, %v2753
        %v2776 = vadd.f32 %v2648, %v2755
        %v2777 = vadd.f32 %v2649, %v2757
        %v2778 = vadd.f32 %v2650, %v2759
        %v2779 = vadd.f32 %v2651, %v2761
        %v2780 = vadd.f32 %v2652, %v2763
        %v2781 = vadd.f32 %v2653, %v2765
        %v2782 = vsel %vm1942, %v2702, 0.0
        %v2783 = vsel %vm1942, %v2703, 0.0
        %v2784 = vsel %vm1942, %v2704, 0.0
        %v2785 = vsel %vm1942, %v2705, 0.0
        %v2786 = vsel %vm1942, %v2706, 0.0
        %v2787 = vsel %vm1942, %v2707, 0.0
        %v2788 = vsel %vm1942, %v2708, 0.0
        %v2789 = vsel %vm1942, %v2709, 0.0
        %v2790 = vsel %vm1942, %v2710, 0.0
        %v2791 = vsel %vm1942, %v2711, 0.0
        %v2792 = vsel %vm1942, %v2712, 0.0
        %v2793 = vsel %vm1942, %v2713, 0.0
        %v2794 = vsel %vm1942, %v2714, 0.0
        %v2795 = vsel %vm1942, %v2715, 0.0
        %v2796 = vsel %vm1942, %v2716, 0.0
        %v2797 = vsel %vm1942, %v2717, 0.0
        %2798 = vrot.lane.b32.xlu0 %v2782, 24
        %v2799 = vpop.permute.xlu0 %2798
        %2800 = vrot.lane.b32.xlu0 %v2783, 24
        %v2801 = vpop.permute.xlu0 %2800
        %2802 = vrot.lane.b32.xlu0 %v2784, 24
        %v2803 = vpop.permute.xlu0 %2802
        %2804 = vrot.lane.b32.xlu0 %v2785, 24
        %v2805 = vpop.permute.xlu0 %2804
        %2806 = vrot.lane.b32.xlu0 %v2786, 24
        %v2807 = vpop.permute.xlu0 %2806
        %2808 = vrot.lane.b32.xlu0 %v2787, 24
        %v2809 = vpop.permute.xlu0 %2808
        %2810 = vrot.lane.b32.xlu0 %v2788, 24
        %v2811 = vpop.permute.xlu0 %2810
        %2812 = vrot.lane.b32.xlu0 %v2789, 24
        %v2813 = vpop.permute.xlu0 %2812
        %2814 = vrot.lane.b32.xlu0 %v2790, 24
        %v2815 = vpop.permute.xlu0 %2814
        %2816 = vrot.lane.b32.xlu0 %v2791, 24
        %v2817 = vpop.permute.xlu0 %2816
        %2818 = vrot.lane.b32.xlu0 %v2792, 24
        %v2819 = vpop.permute.xlu0 %2818
        %2820 = vrot.lane.b32.xlu0 %v2793, 24
        %v2821 = vpop.permute.xlu0 %2820
        %2822 = vrot.lane.b32.xlu0 %v2794, 24
        %v2823 = vpop.permute.xlu0 %2822
        %2824 = vrot.lane.b32.xlu0 %v2795, 24
        %v2825 = vpop.permute.xlu0 %2824
        %2826 = vrot.lane.b32.xlu0 %v2796, 24
        %v2827 = vpop.permute.xlu0 %2826
        %2828 = vrot.lane.b32.xlu0 %v2797, 24
        %v2829 = vpop.permute.xlu0 %2828
        %v2830 = vadd.f32 %v2766, %v2799
        %v2831 = vadd.f32 %v2767, %v2801
        %v2832 = vadd.f32 %v2768, %v2803
        %v2833 = vadd.f32 %v2769, %v2805
        %v2834 = vadd.f32 %v2770, %v2807
        %v2835 = vadd.f32 %v2771, %v2809
        %v2836 = vadd.f32 %v2772, %v2811
        %v2837 = vadd.f32 %v2773, %v2813
        %v2838 = vadd.f32 %v2774, %v2815
        %v2839 = vadd.f32 %v2775, %v2817
        %v2840 = vadd.f32 %v2776, %v2819
        %v2841 = vadd.f32 %v2777, %v2821
        %v2842 = vadd.f32 %v2778, %v2823
        %v2843 = vadd.f32 %v2779, %v2825
        %v2844 = vadd.f32 %v2780, %v2827
        %v2845 = vadd.f32 %v2781, %v2829
        %v2846 = vmul.f32 %v1774, %v2448
        %v2847 = vmul.f32 %v1774, %v2453
        %v2848 = vmul.f32 %v1774, %v2458
        %v2849 = vmul.f32 %v1774, %v2463
        %v2850 = vmul.f32 %v1774, %v2468
        %v2851 = vmul.f32 %v1774, %v2473
        %v2852 = vmul.f32 %v1774, %v2478
        %v2853 = vmul.f32 %v1774, %v2483
        %v2854 = vmul.f32 %v1774, %v2488
        %v2855 = vmul.f32 %v1774, %v2493
        %v2856 = vmul.f32 %v1774, %v2498
        %v2857 = vmul.f32 %v1774, %v2503
        %v2858 = vmul.f32 %v1774, %v2508
        %v2859 = vmul.f32 %v1774, %v2513
        %v2860 = vmul.f32 %v1774, %v2518
        %v2861 = vmul.f32 %v1774, %v2523
        %v2862 = vmul.f32 %v1792, %v2303
        %v2863 = vmul.f32 %v1792, %v2308
        %v2864 = vmul.f32 %v1792, %v2313
        %v2865 = vmul.f32 %v1792, %v2318
        %v2866 = vmul.f32 %v1792, %v2323
        %v2867 = vmul.f32 %v1792, %v2328
        %v2868 = vmul.f32 %v1792, %v2333
        %v2869 = vmul.f32 %v1792, %v2338
        %v2870 = vmul.f32 %v1792, %v2343
        %v2871 = vmul.f32 %v1792, %v2348
        %v2872 = vmul.f32 %v1792, %v2353
        %v2873 = vmul.f32 %v1792, %v2358
        %v2874 = vmul.f32 %v1792, %v2363
        %v2875 = vmul.f32 %v1792, %v2368
        %v2876 = vmul.f32 %v1792, %v2373
        %v2877 = vmul.f32 %v1792, %v2378
        %v2878 = vadd.f32 %v2846, %v2862
        %v2879 = vadd.f32 %v2847, %v2863
        %v2880 = vadd.f32 %v2848, %v2864
        %v2881 = vadd.f32 %v2849, %v2865
        %v2882 = vadd.f32 %v2850, %v2866
        %v2883 = vadd.f32 %v2851, %v2867
        %v2884 = vadd.f32 %v2852, %v2868
        %v2885 = vadd.f32 %v2853, %v2869
        %v2886 = vadd.f32 %v2854, %v2870
        %v2887 = vadd.f32 %v2855, %v2871
        %v2888 = vadd.f32 %v2856, %v2872
        %v2889 = vadd.f32 %v2857, %v2873
        %v2890 = vadd.f32 %v2858, %v2874
        %v2891 = vadd.f32 %v2859, %v2875
        %v2892 = vadd.f32 %v2860, %v2876
        %v2893 = vadd.f32 %v2861, %v2877
        %v2894 = vand.u32 2147483647, %v2878
        %v2895 = vand.u32 2147483647, %v2879
        %v2896 = vand.u32 2147483647, %v2880
        %v2897 = vand.u32 2147483647, %v2881
        %v2898 = vand.u32 2147483647, %v2882
        %v2899 = vand.u32 2147483647, %v2883
        %v2900 = vand.u32 2147483647, %v2884
        %v2901 = vand.u32 2147483647, %v2885
        %v2902 = vand.u32 2147483647, %v2886
        %v2903 = vand.u32 2147483647, %v2887
        %v2904 = vand.u32 2147483647, %v2888
        %v2905 = vand.u32 2147483647, %v2889
        %v2906 = vand.u32 2147483647, %v2890
        %v2907 = vand.u32 2147483647, %v2891
        %v2908 = vand.u32 2147483647, %v2892
        %v2909 = vand.u32 2147483647, %v2893
        %v2910 = vsel %vm1939, %v2894, 0.0
        %v2911 = vsel %vm1939, %v2895, 0.0
        %v2912 = vsel %vm1939, %v2896, 0.0
        %v2913 = vsel %vm1939, %v2897, 0.0
        %v2914 = vsel %vm1939, %v2898, 0.0
        %v2915 = vsel %vm1939, %v2899, 0.0
        %v2916 = vsel %vm1939, %v2900, 0.0
        %v2917 = vsel %vm1939, %v2901, 0.0
        %v2918 = vsel %vm1939, %v2902, 0.0
        %v2919 = vsel %vm1939, %v2903, 0.0
        %v2920 = vsel %vm1939, %v2904, 0.0
        %v2921 = vsel %vm1939, %v2905, 0.0
        %v2922 = vsel %vm1939, %v2906, 0.0
        %v2923 = vsel %vm1939, %v2907, 0.0
        %v2924 = vsel %vm1939, %v2908, 0.0
        %v2925 = vsel %vm1939, %v2909, 0.0
        %2926 = vrot.lane.b32.xlu0 %v2910, 32
        %v2927 = vpop.permute.xlu0 %2926
        %2928 = vrot.lane.b32.xlu0 %v2911, 32
        %v2929 = vpop.permute.xlu0 %2928
        %2930 = vrot.lane.b32.xlu0 %v2912, 32
        %v2931 = vpop.permute.xlu0 %2930
        %2932 = vrot.lane.b32.xlu0 %v2913, 32
        %v2933 = vpop.permute.xlu0 %2932
        %2934 = vrot.lane.b32.xlu0 %v2914, 32
        %v2935 = vpop.permute.xlu0 %2934
        %2936 = vrot.lane.b32.xlu0 %v2915, 32
        %v2937 = vpop.permute.xlu0 %2936
        %2938 = vrot.lane.b32.xlu0 %v2916, 32
        %v2939 = vpop.permute.xlu0 %2938
        %2940 = vrot.lane.b32.xlu0 %v2917, 32
        %v2941 = vpop.permute.xlu0 %2940
        %2942 = vrot.lane.b32.xlu0 %v2918, 32
        %v2943 = vpop.permute.xlu0 %2942
        %2944 = vrot.lane.b32.xlu0 %v2919, 32
        %v2945 = vpop.permute.xlu0 %2944
        %2946 = vrot.lane.b32.xlu0 %v2920, 32
        %v2947 = vpop.permute.xlu0 %2946
        %2948 = vrot.lane.b32.xlu0 %v2921, 32
        %v2949 = vpop.permute.xlu0 %2948
        %2950 = vrot.lane.b32.xlu0 %v2922, 32
        %v2951 = vpop.permute.xlu0 %2950
        %2952 = vrot.lane.b32.xlu0 %v2923, 32
        %v2953 = vpop.permute.xlu0 %2952
        %2954 = vrot.lane.b32.xlu0 %v2924, 32
        %v2955 = vpop.permute.xlu0 %2954
        %2956 = vrot.lane.b32.xlu0 %v2925, 32
        %v2957 = vpop.permute.xlu0 %2956
        %v2958 = vadd.f32 %v2830, %v2927
        %v2959 = vadd.f32 %v2831, %v2929
        %v2960 = vadd.f32 %v2832, %v2931
        %v2961 = vadd.f32 %v2833, %v2933
        %v2962 = vadd.f32 %v2834, %v2935
        %v2963 = vadd.f32 %v2835, %v2937
        %v2964 = vadd.f32 %v2836, %v2939
        %v2965 = vadd.f32 %v2837, %v2941
        %v2966 = vadd.f32 %v2838, %v2943
        %v2967 = vadd.f32 %v2839, %v2945
        %v2968 = vadd.f32 %v2840, %v2947
        %v2969 = vadd.f32 %v2841, %v2949
        %v2970 = vadd.f32 %v2842, %v2951
        %v2971 = vadd.f32 %v2843, %v2953
        %v2972 = vadd.f32 %v2844, %v2955
        %v2973 = vadd.f32 %v2845, %v2957
        %v2974 = vsel %vm1942, %v2894, 0.0
        %v2975 = vsel %vm1942, %v2895, 0.0
        %v2976 = vsel %vm1942, %v2896, 0.0
        %v2977 = vsel %vm1942, %v2897, 0.0
        %v2978 = vsel %vm1942, %v2898, 0.0
        %v2979 = vsel %vm1942, %v2899, 0.0
        %v2980 = vsel %vm1942, %v2900, 0.0
        %v2981 = vsel %vm1942, %v2901, 0.0
        %v2982 = vsel %vm1942, %v2902, 0.0
        %v2983 = vsel %vm1942, %v2903, 0.0
        %v2984 = vsel %vm1942, %v2904, 0.0
        %v2985 = vsel %vm1942, %v2905, 0.0
        %v2986 = vsel %vm1942, %v2906, 0.0
        %v2987 = vsel %vm1942, %v2907, 0.0
        %v2988 = vsel %vm1942, %v2908, 0.0
        %v2989 = vsel %vm1942, %v2909, 0.0
        %2990 = vrot.lane.b32.xlu0 %v2974, 32
        %v2991 = vpop.permute.xlu0 %2990
        %2992 = vrot.lane.b32.xlu0 %v2975, 32
        %v2993 = vpop.permute.xlu0 %2992
        %2994 = vrot.lane.b32.xlu0 %v2976, 32
        %v2995 = vpop.permute.xlu0 %2994
        %2996 = vrot.lane.b32.xlu0 %v2977, 32
        %v2997 = vpop.permute.xlu0 %2996
        %2998 = vrot.lane.b32.xlu0 %v2978, 32
        %v2999 = vpop.permute.xlu0 %2998
        %3000 = vrot.lane.b32.xlu0 %v2979, 32
        %v3001 = vpop.permute.xlu0 %3000
        %3002 = vrot.lane.b32.xlu0 %v2980, 32
        %v3003 = vpop.permute.xlu0 %3002
        %3004 = vrot.lane.b32.xlu0 %v2981, 32
        %v3005 = vpop.permute.xlu0 %3004
        %3006 = vrot.lane.b32.xlu0 %v2982, 32
        %v3007 = vpop.permute.xlu0 %3006
        %3008 = vrot.lane.b32.xlu0 %v2983, 32
        %v3009 = vpop.permute.xlu0 %3008
        %3010 = vrot.lane.b32.xlu0 %v2984, 32
        %v3011 = vpop.permute.xlu0 %3010
        %3012 = vrot.lane.b32.xlu0 %v2985, 32
        %v3013 = vpop.permute.xlu0 %3012
        %3014 = vrot.lane.b32.xlu0 %v2986, 32
        %v3015 = vpop.permute.xlu0 %3014
        %3016 = vrot.lane.b32.xlu0 %v2987, 32
        %v3017 = vpop.permute.xlu0 %3016
        %3018 = vrot.lane.b32.xlu0 %v2988, 32
        %v3019 = vpop.permute.xlu0 %3018
        %3020 = vrot.lane.b32.xlu0 %v2989, 32
        %v3021 = vpop.permute.xlu0 %3020
        %v3022 = vadd.f32 %v2958, %v2991
        %v3023 = vadd.f32 %v2959, %v2993
        %v3024 = vadd.f32 %v2960, %v2995
        %v3025 = vadd.f32 %v2961, %v2997
        %v3026 = vadd.f32 %v2962, %v2999
        %v3027 = vadd.f32 %v2963, %v3001
        %v3028 = vadd.f32 %v2964, %v3003
        %v3029 = vadd.f32 %v2965, %v3005
        %v3030 = vadd.f32 %v2966, %v3007
        %v3031 = vadd.f32 %v2967, %v3009
        %v3032 = vadd.f32 %v2968, %v3011
        %v3033 = vadd.f32 %v2969, %v3013
        %v3034 = vadd.f32 %v2970, %v3015
        %v3035 = vadd.f32 %v2971, %v3017
        %v3036 = vadd.f32 %v2972, %v3019
        %v3037 = vadd.f32 %v2973, %v3021
        %v3038 = vsel %vm1945, %v2894, 0.0
        %v3039 = vsel %vm1945, %v2895, 0.0
        %v3040 = vsel %vm1945, %v2896, 0.0
        %v3041 = vsel %vm1945, %v2897, 0.0
        %v3042 = vsel %vm1945, %v2898, 0.0
        %v3043 = vsel %vm1945, %v2899, 0.0
        %v3044 = vsel %vm1945, %v2900, 0.0
        %v3045 = vsel %vm1945, %v2901, 0.0
        %v3046 = vsel %vm1945, %v2902, 0.0
        %v3047 = vsel %vm1945, %v2903, 0.0
        %v3048 = vsel %vm1945, %v2904, 0.0
        %v3049 = vsel %vm1945, %v2905, 0.0
        %v3050 = vsel %vm1945, %v2906, 0.0
        %v3051 = vsel %vm1945, %v2907, 0.0
        %v3052 = vsel %vm1945, %v2908, 0.0
        %v3053 = vsel %vm1945, %v2909, 0.0
        %3054 = vrot.lane.b32.xlu0 %v3038, 32
        %v3055 = vpop.permute.xlu0 %3054
        %3056 = vrot.lane.b32.xlu0 %v3039, 32
        %v3057 = vpop.permute.xlu0 %3056
        %3058 = vrot.lane.b32.xlu0 %v3040, 32
        %v3059 = vpop.permute.xlu0 %3058
        %3060 = vrot.lane.b32.xlu0 %v3041, 32
        %v3061 = vpop.permute.xlu0 %3060
        %3062 = vrot.lane.b32.xlu0 %v3042, 32
        %v3063 = vpop.permute.xlu0 %3062
        %3064 = vrot.lane.b32.xlu0 %v3043, 32
        %v3065 = vpop.permute.xlu0 %3064
        %3066 = vrot.lane.b32.xlu0 %v3044, 32
        %v3067 = vpop.permute.xlu0 %3066
        %3068 = vrot.lane.b32.xlu0 %v3045, 32
        %v3069 = vpop.permute.xlu0 %3068
        %3070 = vrot.lane.b32.xlu0 %v3046, 32
        %v3071 = vpop.permute.xlu0 %3070
        %3072 = vrot.lane.b32.xlu0 %v3047, 32
        %v3073 = vpop.permute.xlu0 %3072
        %3074 = vrot.lane.b32.xlu0 %v3048, 32
        %v3075 = vpop.permute.xlu0 %3074
        %3076 = vrot.lane.b32.xlu0 %v3049, 32
        %v3077 = vpop.permute.xlu0 %3076
        %3078 = vrot.lane.b32.xlu0 %v3050, 32
        %v3079 = vpop.permute.xlu0 %3078
        %3080 = vrot.lane.b32.xlu0 %v3051, 32
        %v3081 = vpop.permute.xlu0 %3080
        %3082 = vrot.lane.b32.xlu0 %v3052, 32
        %v3083 = vpop.permute.xlu0 %3082
        %3084 = vrot.lane.b32.xlu0 %v3053, 32
        %v3085 = vpop.permute.xlu0 %3084
        %v3086 = vadd.f32 %v3022, %v3055
        %v3087 = vadd.f32 %v3023, %v3057
        %v3088 = vadd.f32 %v3024, %v3059
        %v3089 = vadd.f32 %v3025, %v3061
        %v3090 = vadd.f32 %v3026, %v3063
        %v3091 = vadd.f32 %v3027, %v3065
        %v3092 = vadd.f32 %v3028, %v3067
        %v3093 = vadd.f32 %v3029, %v3069
        %v3094 = vadd.f32 %v3030, %v3071
        %v3095 = vadd.f32 %v3031, %v3073
        %v3096 = vadd.f32 %v3032, %v3075
        %v3097 = vadd.f32 %v3033, %v3077
        %v3098 = vadd.f32 %v3034, %v3079
        %v3099 = vadd.f32 %v3035, %v3081
        %v3100 = vadd.f32 %v3036, %v3083
        %v3101 = vadd.f32 %v3037, %v3085
        %s3102 = sld [smem:[#allocation2 + %s26]]
        %s3103 = scvt.s32.f32 %s3102
        %v3104 = vstv %s3103
        %v3105 = vrcp.pop %v3104
        %s3106 = vtos %v3105
        %v3107 = vadd.f32 %v3086, %v3087
        %v3108 = vadd.f32 %v3107, %v3088
        %v3109 = vadd.f32 %v3108, %v3089
        %v3110 = vadd.f32 %v3109, %v3090
        %v3111 = vadd.f32 %v3110, %v3091
        %v3112 = vadd.f32 %v3111, %v3092
        %v3113 = vadd.f32 %v3112, %v3093
        %v3114 = vadd.f32 %v3113, %v3094
        %v3115 = vadd.f32 %v3114, %v3095
        %v3116 = vadd.f32 %v3115, %v3096
        %v3117 = vadd.f32 %v3116, %v3097
        %v3118 = vadd.f32 %v3117, %v3098
        %v3119 = vadd.f32 %v3118, %v3099
        %v3120 = vadd.f32 %v3119, %v3100
        %v3121 = vadd.f32 %v3120, %v3101
        %v3122 = vrot.slane %v3121, 4
        %v3123 = vadd.f32 %v3121, %v3122
        %v3124 = vrot.slane %v3123, 2
        %v3125 = vadd.f32 %v3123, %v3124
        %v3126 = vrot.slane %v3125, 1
        %v3127 = vadd.f32 %v3125, %v3126
        %v3128 = vstv %s3106
        %v3129 = vmul.f32 %v3127, %v3128
        %v3130 = vlaneseq
        %v3131 = vshrl.u32 %v3130, 7
        %v3132 = vadd.s32 %v3131, 8
        %v3133 = vadd.s32 %v3131, 16
        %v3134 = vadd.s32 %v3131, 24
        %v3135 = vadd.s32 %v3131, 32
        %v3136 = vadd.s32 %v3131, 40
        %v3137 = vadd.s32 %v3131, 48
        %v3138 = vadd.s32 %v3131, 56
        %v3139 = vadd.s32 %v3131, 64
        %v3140 = vadd.s32 %v3131, 72
        %v3141 = vadd.s32 %v3131, 80
        %v3142 = vadd.s32 %v3131, 88
        %v3143 = vadd.s32 %v3131, 96
        %v3144 = vadd.s32 %v3131, 104
        %v3145 = vadd.s32 %v3131, 112
        %v3146 = vadd.s32 %v3131, 120
        %v3147 = vstv %s3102
        %vm3148 = vcmp.lt.s32.totalorder %v3131, %v3147
        %vm3149 = vcmp.lt.s32.totalorder %v3132, %v3147
        %vm3150 = vcmp.lt.s32.totalorder %v3133, %v3147
        %vm3151 = vcmp.lt.s32.totalorder %v3134, %v3147
        %vm3152 = vcmp.lt.s32.totalorder %v3135, %v3147
        %vm3153 = vcmp.lt.s32.totalorder %v3136, %v3147
        %vm3154 = vcmp.lt.s32.totalorder %v3137, %v3147
        %vm3155 = vcmp.lt.s32.totalorder %v3138, %v3147
        %vm3156 = vcmp.lt.s32.totalorder %v3139, %v3147
        %vm3157 = vcmp.lt.s32.totalorder %v3140, %v3147
        %vm3158 = vcmp.lt.s32.totalorder %v3141, %v3147
        %vm3159 = vcmp.lt.s32.totalorder %v3142, %v3147
        %vm3160 = vcmp.lt.s32.totalorder %v3143, %v3147
        %vm3161 = vcmp.lt.s32.totalorder %v3144, %v3147
        %vm3162 = vcmp.lt.s32.totalorder %v3145, %v3147
        %vm3163 = vcmp.lt.s32.totalorder %v3146, %v3147
        %v3164 = vsub.f32 %v3086, %v3129
        %v3165 = vsub.f32 %v3087, %v3129
        %v3166 = vsub.f32 %v3088, %v3129
        %v3167 = vsub.f32 %v3089, %v3129
        %v3168 = vsub.f32 %v3090, %v3129
        %v3169 = vsub.f32 %v3091, %v3129
        %v3170 = vsub.f32 %v3092, %v3129
        %v3171 = vsub.f32 %v3093, %v3129
        %v3172 = vsub.f32 %v3094, %v3129
        %v3173 = vsub.f32 %v3095, %v3129
        %v3174 = vsub.f32 %v3096, %v3129
        %v3175 = vsub.f32 %v3097, %v3129
        %v3176 = vsub.f32 %v3098, %v3129
        %v3177 = vsub.f32 %v3099, %v3129
        %v3178 = vsub.f32 %v3100, %v3129
        %v3179 = vsub.f32 %v3101, %v3129
        %v3180 = vsel %vm3148, %v3164, 0.0
        %v3181 = vsel %vm3149, %v3165, 0.0
        %v3182 = vsel %vm3150, %v3166, 0.0
        %v3183 = vsel %vm3151, %v3167, 0.0
        %v3184 = vsel %vm3152, %v3168, 0.0
        %v3185 = vsel %vm3153, %v3169, 0.0
        %v3186 = vsel %vm3154, %v3170, 0.0
        %v3187 = vsel %vm3155, %v3171, 0.0
        %v3188 = vsel %vm3156, %v3172, 0.0
        %v3189 = vsel %vm3157, %v3173, 0.0
        %v3190 = vsel %vm3158, %v3174, 0.0
        %v3191 = vsel %vm3159, %v3175, 0.0
        %v3192 = vsel %vm3160, %v3176, 0.0
        %v3193 = vsel %vm3161, %v3177, 0.0
        %v3194 = vsel %vm3162, %v3178, 0.0
        %v3195 = vsel %vm3163, %v3179, 0.0
        %v3196 = vmul.f32 %v3180, %v3180
        %v3197 = vmul.f32 %v3181, %v3181
        %v3198 = vmul.f32 %v3182, %v3182
        %v3199 = vmul.f32 %v3183, %v3183
        %v3200 = vmul.f32 %v3184, %v3184
        %v3201 = vmul.f32 %v3185, %v3185
        %v3202 = vmul.f32 %v3186, %v3186
        %v3203 = vmul.f32 %v3187, %v3187
        %v3204 = vmul.f32 %v3188, %v3188
        %v3205 = vmul.f32 %v3189, %v3189
        %v3206 = vmul.f32 %v3190, %v3190
        %v3207 = vmul.f32 %v3191, %v3191
        %v3208 = vmul.f32 %v3192, %v3192
        %v3209 = vmul.f32 %v3193, %v3193
        %v3210 = vmul.f32 %v3194, %v3194
        %v3211 = vmul.f32 %v3195, %v3195
        %v3212 = vadd.f32 %v3196, %v3197
        %v3213 = vadd.f32 %v3212, %v3198
        %v3214 = vadd.f32 %v3213, %v3199
        %v3215 = vadd.f32 %v3214, %v3200
        %v3216 = vadd.f32 %v3215, %v3201
        %v3217 = vadd.f32 %v3216, %v3202
        %v3218 = vadd.f32 %v3217, %v3203
        %v3219 = vadd.f32 %v3218, %v3204
        %v3220 = vadd.f32 %v3219, %v3205
        %v3221 = vadd.f32 %v3220, %v3206
        %v3222 = vadd.f32 %v3221, %v3207
        %v3223 = vadd.f32 %v3222, %v3208
        %v3224 = vadd.f32 %v3223, %v3209
        %v3225 = vadd.f32 %v3224, %v3210
        %v3226 = vadd.f32 %v3225, %v3211
        %v3227 = vrot.slane %v3226, 4
        %v3228 = vadd.f32 %v3226, %v3227
        %v3229 = vrot.slane %v3228, 2
        %v3230 = vadd.f32 %v3228, %v3229
        %v3231 = vrot.slane %v3230, 1
        %v3232 = vadd.f32 %v3230, %v3231
        %v3233 = vmul.f32 %v3232, %v3128
        %v3234 = vmul.f32 %v3196, %v3180
        %v3235 = vmul.f32 %v3197, %v3181
        %v3236 = vmul.f32 %v3198, %v3182
        %v3237 = vmul.f32 %v3199, %v3183
        %v3238 = vmul.f32 %v3200, %v3184
        %v3239 = vmul.f32 %v3201, %v3185
        %v3240 = vmul.f32 %v3202, %v3186
        %v3241 = vmul.f32 %v3203, %v3187
        %v3242 = vmul.f32 %v3204, %v3188
        %v3243 = vmul.f32 %v3205, %v3189
        %v3244 = vmul.f32 %v3206, %v3190
        %v3245 = vmul.f32 %v3207, %v3191
        %v3246 = vmul.f32 %v3208, %v3192
        %v3247 = vmul.f32 %v3209, %v3193
        %v3248 = vmul.f32 %v3210, %v3194
        %v3249 = vmul.f32 %v3211, %v3195
        %v3250 = vadd.f32 %v3234, %v3235
        %v3251 = vadd.f32 %v3250, %v3236
        %v3252 = vadd.f32 %v3251, %v3237
        %v3253 = vadd.f32 %v3252, %v3238
        %v3254 = vadd.f32 %v3253, %v3239
        %v3255 = vadd.f32 %v3254, %v3240
        %v3256 = vadd.f32 %v3255, %v3241
        %v3257 = vadd.f32 %v3256, %v3242
        %v3258 = vadd.f32 %v3257, %v3243
        %v3259 = vadd.f32 %v3258, %v3244
        %v3260 = vadd.f32 %v3259, %v3245
        %v3261 = vadd.f32 %v3260, %v3246
        %v3262 = vadd.f32 %v3261, %v3247
        %v3263 = vadd.f32 %v3262, %v3248
        %v3264 = vadd.f32 %v3263, %v3249
        %v3265 = vrot.slane %v3264, 4
        %v3266 = vadd.f32 %v3264, %v3265
        %v3267 = vrot.slane %v3266, 2
        %v3268 = vadd.f32 %v3266, %v3267
        %v3269 = vrot.slane %v3268, 1
        %v3270 = vadd.f32 %v3268, %v3269
        %v3271 = vmul.f32 %v3270, %v3128
        %v3272 = vmul.f32 %v3196, %v3196
        %v3273 = vmul.f32 %v3197, %v3197
        %v3274 = vmul.f32 %v3198, %v3198
        %v3275 = vmul.f32 %v3199, %v3199
        %v3276 = vmul.f32 %v3200, %v3200
        %v3277 = vmul.f32 %v3201, %v3201
        %v3278 = vmul.f32 %v3202, %v3202
        %v3279 = vmul.f32 %v3203, %v3203
        %v3280 = vmul.f32 %v3204, %v3204
        %v3281 = vmul.f32 %v3205, %v3205
        %v3282 = vmul.f32 %v3206, %v3206
        %v3283 = vmul.f32 %v3207, %v3207
        %v3284 = vmul.f32 %v3208, %v3208
        %v3285 = vmul.f32 %v3209, %v3209
        %v3286 = vmul.f32 %v3210, %v3210
        %v3287 = vmul.f32 %v3211, %v3211
        %v3288 = vadd.f32 %v3272, %v3273
        %v3289 = vadd.f32 %v3288, %v3274
        %v3290 = vadd.f32 %v3289, %v3275
        %v3291 = vadd.f32 %v3290, %v3276
        %v3292 = vadd.f32 %v3291, %v3277
        %v3293 = vadd.f32 %v3292, %v3278
        %v3294 = vadd.f32 %v3293, %v3279
        %v3295 = vadd.f32 %v3294, %v3280
        %v3296 = vadd.f32 %v3295, %v3281
        %v3297 = vadd.f32 %v3296, %v3282
        %v3298 = vadd.f32 %v3297, %v3283
        %v3299 = vadd.f32 %v3298, %v3284
        %v3300 = vadd.f32 %v3299, %v3285
        %v3301 = vadd.f32 %v3300, %v3286
        %v3302 = vadd.f32 %v3301, %v3287
        %v3303 = vrot.slane %v3302, 4
        %v3304 = vadd.f32 %v3302, %v3303
        %v3305 = vrot.slane %v3304, 2
        %v3306 = vadd.f32 %v3304, %v3305
        %v3307 = vrot.slane %v3306, 1
        %v3308 = vadd.f32 %v3306, %v3307
        %v3309 = vmul.f32 %v3308, %v3128
        %vm3310 = vcmp.gt.f32.partialorder %v3233, 0.0
        %v3311 = vsel %vm3310, %v3233, 1.0
        %v3312 = vrsqrt.pop %v3311
        %v3313 = vmul.f32 %v3311, %v3312
        %vm3314 = vcmp.eq.f32.partialorder %v3311, inf
        %v3315 = vsel %vm3314, %v3311, %v3313
        %vm3316 = vcmp.eq.f32.partialorder %v3311, 0.0
        %v3317 = vand.u32 %v3311, 2147483648
        %v3318 = vsel %vm3316, %v3317, %v3315
        %v3319 = vmul.f32 %v3311, %v3318
        %v3320 = vrcp.pop %v3319
        %v3321 = vmul.f32 %v3271, %v3320
        %v3322 = vsel %vm3310, %v3321, 0.0
        %v3323 = vmul.f32 %v3311, %v3311
        %v3324 = vrcp.pop %v3323
        %v3325 = vmul.f32 %v3309, %v3324
        %v3326 = vsel %vm3310, %v3325, -3.0
        %vm3327 = vcmask 1040384
        %v3328 = vsel %vm3327, %v3129, %v3233
        %vm3329 = vcmask 1041408
        %v3330 = vsel %vm3329, %v3328, %v3322
        %vm3331 = vcmask 1042432
        %v3332 = vsel %vm3331, %v3330, %v3326
        %3333 = vst [vmem:[%s278] sm:$0xf] %v3332
        %s3334 = sand.u32 %s128, 1
        %s3335 = scalar_lea.sflag [#allocation4], %s3334
        %s3336 = sand.u32 %s128, 1
        %s3337 = smul.addr %s3336, 4
        %s3338 = scalar_lea.vmem [#allocation11], %s3337
        // Predicated region
        $region53: #{tpu_custom_call.1} parent=35 // pred_check
          %p3339 = pneg %p138
        $region54: #{tpu_custom_call.1} parent=35 // pred_check_branch
          %3341 = sbr.rel (%p3339) target = $region56
        $region55: #{tpu_custom_call.1} parent=35 // pred_region
          %s3343 = ssub.s32 64, 64
          %3344 = vsyncadd %s3335, %s3343
          %s3345 = smul.addr %s26, 64
          %s3346 = scalar_lea.hbm %s4, %s3345
          %s3348 = sshll.u32 %s3338, 4
          %s3349 = int_to_ptr.vmem [resolvable:$true] %s3348
          %3351 = dma.vmem_to_hbm [thread:$0]  %s3349, 64, %s3346, %s3335
        $region56: #{tpu_custom_call.1} parent=35 // pred_fallthru
          _
      $region36: #{tpu_custom_call.1} parent=5 // pred_fallthru
        _
      %p3352 = scmp.le.s32.totalorder 2, %s21
      // Predicated region
      $region57: #{tpu_custom_call.1} parent=5 // pred_check
        %p3353 = pneg %p3352
      $region58: #{tpu_custom_call.1} parent=5 // pred_check_branch
        %3355 = sbr.rel (%p3353) target = $region60
      $region59: #{tpu_custom_call.1} parent=5 // pred_region
        %s3356 = ssub.s32 %s21, 2
        // Predicated region
        $region61: #{tpu_custom_call.1} parent=59 // pred_check
          %p3357 = pneg %p144
        $region62: #{tpu_custom_call.1} parent=59 // pred_check_branch
          %3359 = sbr.rel (%p3357) target = $region64
        $region63: #{tpu_custom_call.1} parent=59 // pred_region
          %s3360 = sand.u32 %s129, 1
          %s3361 = scalar_lea.sflag [#allocation4], %s3360
          %s3362 = sand.u32 %s129, 1
          %s3363 = smul.addr %s3362, 4
          %s3364 = scalar_lea.vmem [#allocation11], %s3363
          %3365 = dma.done %s3361, 64
        $region64: #{tpu_custom_call.1} parent=59 // pred_fallthru
          _
      $region60: #{tpu_custom_call.1} parent=5 // pred_fallthru
        _
    $region6: #{tpu_custom_call.1} parent=1 // loop_footer
      %s25 = sadd.s32 1, %s21
    $region7: #{tpu_custom_call.1} parent=1 // loop_footer_branch
      %20 = sbr.rel target = $region3
    $region8: #{tpu_custom_call.1} parent=1 // loop_exit
      _
    %3366 = vsyncpa [#allocation3], 1
    %s3367 = scalar_lea.sflag [#allocation3], 1
    %3368 = vsyncpa %s3367, 1
    %3369 = vsyncpa [#allocation10], 1
    %s3370 = scalar_lea.sflag [#allocation10], 1
    %3371 = vsyncpa %s3370, 1
    %3372 = vsyncpa [#allocation4], 1
    %s3373 = scalar_lea.sflag [#allocation4], 1
    %3374 = vsyncpa %s3373, 1
    %3375 = vsyncpa [#allocation5], 1
    %s3376 = scalar_lea.sflag [#allocation5], 1
    %3377 = vsyncpa %s3376, 1
    %3378 = vsyncpa [#allocation7], 1

</llo_original>
